<compile_context>
chip_gen: v5e
topology: v5e:2x2
jax: 0.10.0
libtpu: 0.0.40
codegen_flags: <defaults>
</compile_context>

<pallas_src>
import functools
import math

import numpy as np
import jax
import jax.numpy as jnp
from jax.experimental import pallas as pl
from jax.experimental.pallas import tpu as pltpu

GRID_SIZE = 5
SPLINE_ORDER = 3
GRID_RANGE = (-1.0, 1.0)
LAYERS = [5, 32, 16, 8, 1]              # "4L5F": 4 KAN layers, 5 input features
NB = GRID_SIZE + SPLINE_ORDER           # 8 B-spline bases per input feature

# Uniform, static knot vector (identical for every feature) -> compile-time
# constants inside the kernel.
_H = (GRID_RANGE[1] - GRID_RANGE[0]) / GRID_SIZE
KNOTS_NP = (np.arange(-SPLINE_ORDER, GRID_SIZE + SPLINE_ORDER + 1,
                      dtype=np.float32) * np.float32(_H)
            + np.float32(GRID_RANGE[0]))
KNOTS = tuple(float(v) for v in KNOTS_NP)
_LANE = 128


# --------------------------- fused Pallas kernel ----------------------------
def _bspline_basis(x):
    """Uniform-knot Cox-de-Boor, batch-on-lanes layout.

    x: (in_f, tb) f32.  Returns NB arrays, each (in_f, tb); entry k is basis
    B_k evaluated for every feature (batch on the lane axis).
    Uniform spacing H means t_m = t_0 + m*H, so per level j we compute
    u = (x - t_0)/(j*H) ONCE and every left/right weight is a constant
    add/subtract of u (no divides, ~half the affine work of the generic form).
    """
    n0 = GRID_SIZE + 2 * SPLINE_ORDER                      # 11 level-0 indicators
    b = [jnp.logical_and(x >= KNOTS[m], x < KNOTS[m + 1]).astype(jnp.float32)
         for m in range(n0)]
    for j in range(1, SPLINE_ORDER + 1):
        u = (x - KNOTS[0]) * (1.0 / (j * _H))
        nxt = []
        for m in range(n0 - j):
            left = u - (m / j)                             # (x - t_m)/(j*H)
            right = ((m + 1) / j + 1.0) - u                # (t_{m+j+1} - x)/(j*H)
            nxt.append(left * b[m] + right * b[m + 1])
        b = nxt
    return b                                               # NB arrays (in_f, tb)


def _kan_layer(h, wT):
    """One KAN layer as a single MXU contraction.

    h:  (in_f, tb) activations (batch on lanes).
    wT: (out_f, (1+NB)*in_f) pre-packed [base_w; spline_w_flat]^T.
    """
    # SiLU via EUP: exp + approximate reciprocal run in the EUP slot, which is
    # otherwise idle, instead of a VALU divide.
    silu = h * pl.reciprocal(1.0 + jnp.exp(-h), approx=True)
    # K-stacking along the SUBLANE axis (cheap) -> one matmul for base+spline.
    stacked = jnp.concatenate([silu] + _bspline_basis(h), axis=0)   # (9*in_f, tb)
    return jnp.dot(wT, stacked, preferred_element_type=jnp.float32)  # (out_f, tb)


def _fused_kan_kernel(*refs, n_layers):
    """refs = (x_ref, wT_0, wT_1, ..., wT_{L-1}, o_ref); everything (feat, tb)."""
    x_ref = refs[0]
    o_ref = refs[-1]
    w_refs = refs[1:-1]
    h = x_ref[...].astype(jnp.float32)
    for layer in range(n_layers):
        h = _kan_layer(h, w_refs[layer][...])
    o_ref[...] = h.astype(o_ref.dtype)                      # lane-dense (out_dim, tb)


# --------------------------- host-side packing -------------------------------
def prepack_kan_params(params):
    """Do ONCE per model (SHAP reuses it across thousands of forward calls).

    Packs each layer's (base_w (in_f,out_f), spline_w (in_f,NB,out_f)) into a
    single transposed matrix wT (out_f, (1+NB)*in_f) whose column order matches
    the kernel's K-stacking [SiLU(h); B_0(h); ...; B_{NB-1}(h)] (basis-major,
    feature-minor).
    """
    packed = []
    for base_w, spline_w in params:
        in_f, nb, out_f = spline_w.shape
        sw_flat = jnp.transpose(spline_w, (1, 0, 2)).reshape(nb * in_f, out_f)
        w_all = jnp.concatenate([base_w, sw_flat], axis=0)   # ((1+nb)*in_f, out_f)
        packed.append(jnp.asarray(w_all.T, jnp.float32))     # (out_f, (1+nb)*in_f)
    return packed


def _choose_batch_tile(B, batch_tile):
    """Lane-aligned padded batch + tile size; >=2 grid steps when possible."""
    if B <= _LANE:
        return B, B                                          # single tiny tile
    b_pad = ((B + _LANE - 1) // _LANE) * _LANE               # lane-align the batch
    tb = min(batch_tile, b_pad)
    tb = max(_LANE, (tb // _LANE) * _LANE)
    # v7x has 2 TensorCores: the ("parallel",) axis only shards if >= 2 steps.
    if b_pad // tb < 2 and b_pad >= 2 * _LANE:
        tb = max(_LANE, ((b_pad // 2) // _LANE) * _LANE)
    b_pad = ((b_pad + tb - 1) // tb) * tb
    return b_pad, tb


def shap_kan_wrapper_forward(x, packed_wts, *, batch_tile=1024):
    """ShapKANWrapper.forward: delegates to the wrapped KAN (fused kernel)."""
    B, in_dim = x.shape
    n_layers = len(packed_wts)
    out_dim = packed_wts[-1].shape[0]

    b_pad, tb = _choose_batch_tile(B, batch_tile)

    # Batch-on-lanes layout: (in_dim, B_pad); pad (zeros stay on-grid, trimmed
    # below) instead of asserting divisibility for arbitrary SHAP batch sizes.
    xT = jnp.transpose(x.astype(jnp.float32))
    if b_pad != B:
        xT = jnp.pad(xT, ((0, 0), (0, b_pad - B)))

    kern = functools.partial(_fused_kan_kernel, n_layers=n_layers)

    in_specs = [pl.BlockSpec((in_dim, tb), lambda b: (0, b))]
    for w in packed_wts:
        in_specs.append(pl.BlockSpec(w.shape, lambda b: (0, 0)))  # resident weights

    outT = pl.pallas_call(
        kern,
        out_shape=jax.ShapeDtypeStruct((out_dim, b_pad), jnp.float32),
        grid=(b_pad // tb,),
        in_specs=in_specs,
        out_specs=pl.BlockSpec((out_dim, tb), lambda b: (0, b)),
        compiler_params=pltpu.CompilerParams(
            dimension_semantics=("parallel",),
            vmem_limit_bytes=32 * 1024 * 1024),
    )(xT, *packed_wts)

    return jnp.transpose(outT)[:B]                           # (B, out_dim)


# ---------------- pure-JAX reference (for correctness check) ----------------
def _kan_layer_ref(x, base_w, spline_w_3d, knots_arr):
    K = SPLINE_ORDER
    base = (x * jax.nn.sigmoid(x)) @ base_w
    in_f = x.shape[1]
    g = jnp.tile(knots_arr[None, None, :], (1, in_f, 1))
    xg = x[:, :, None]
    b = jnp.logical_and(xg >= g[:, :, :-1], xg < g[:, :, 1:]).astype(jnp.float32)
    for j in range(1, K + 1):
        b = ((xg - g[:, :, :-(j + 1)]) / (g[:, :, j:-1] - g[:, :, :-(j + 1)]) * b[:, :, :-1]
             + (g[:, :, j + 1:] - xg) / (g[:, :, j + 1:] - g[:, :, 1:-j]) * b[:, :, 1:])
    spline = jnp.einsum('bin,ino->bo', b, spline_w_3d)
    return base + spline


def _forward_ref(x, params):
    knots_arr = jnp.asarray(KNOTS_NP)
    h = x
    for base_w, spline_w in params:
        h = _kan_layer_ref(h, base_w, spline_w, knots_arr)
    return h


# ---------------------------- param construction ----------------------------
def make_params(key):
    params = []
    for fi, fo in zip(LAYERS[:-1], LAYERS[1:]):
        key, k1, k2 = jax.random.split(key, 3)
        base_w = jax.random.normal(k1, (fi, fo), jnp.float32) / math.sqrt(fi)
        spline_w = jax.random.normal(k2, (fi, NB, fo), jnp.float32) * 0.1
        params.append((base_w, spline_w))
    return params


if __name__ == "__main__":
    key = jax.random.PRNGKey(0)
    key, kx = jax.random.split(key)

    B = 16
    x = jax.random.uniform(kx, (B, LAYERS[0]), jnp.float32,
                           minval=-0.95, maxval=0.95)
    params = make_params(key)
    packed = prepack_kan_params(params)   # hoisted: reused across SHAP calls

    # Tolerance is slightly loose because SiLU uses the approximate EUP
    # reciprocal (pl.reciprocal(..., approx=True)) inside the kernel.
    ATOL = RTOL = 1e-2

    ref = _forward_ref(x, params)

    # Tiny single-tile path (grid=(1,)).
    out = jax.block_until_ready(shap_kan_wrapper_forward(x, packed))
    assert out.shape == (B, LAYERS[-1])
    assert jnp.allclose(out, ref, atol=ATOL, rtol=RTOL), (out, ref)

    # Non-multiple batch: exercises lane padding + 2 'parallel' grid steps.
    B2 = 200
    key, kx2 = jax.random.split(key)
    x2 = jax.random.uniform(kx2, (B2, LAYERS[0]), jnp.float32,
                            minval=-0.95, maxval=0.95)
    ref2 = _forward_ref(x2, params)
    out2 = jax.block_until_ready(shap_kan_wrapper_forward(x2, packed))
    assert out2.shape == (B2, LAYERS[-1])
    assert jnp.allclose(out2, ref2, atol=ATOL, rtol=RTOL), (out2, ref2)

    # TODO(synk): the original wrapped `model` object is constructed elsewhere
    # in 4L5FKANwithExplanations.py; architecture here is the standard
    # efficient-KAN stack implied by the file name (optional standalone spline
    # scaler / grid updates are not represented).
    print("KERNEL_OK")
</pallas_src>

<mosaic_0001>
module attributes {stable_mosaic.version = 11 : i64} {
  func.func @_fused_kan_kernel(%arg0: i32, %arg1: memref<5x16xf32, #tpu.memory_space<vmem>>, %arg2: memref<32x45xf32, #tpu.memory_space<vmem>>, %arg3: memref<16x288xf32, #tpu.memory_space<vmem>>, %arg4: memref<8x144xf32, #tpu.memory_space<vmem>>, %arg5: memref<1x72xf32, #tpu.memory_space<vmem>>, %arg6: memref<1x16xf32, #tpu.memory_space<vmem>>) attributes {dimension_semantics = [#tpu.dimension_semantics<parallel>], iteration_bounds = array<i64: 1>, scalar_prefetch = 0 : i64, scratch_operands = 0 : i64, tpu.core_type = #tpu.core_type<tc>, window_params = [{transform_indices = @transform_0, window_bounds = array<i64: 5, 16>}, {pipeline_mode = #tpu.pipeline_mode<synchronous>, transform_indices = @transform_1, window_bounds = array<i64: 32, 45>}, {pipeline_mode = #tpu.pipeline_mode<synchronous>, transform_indices = @transform_2, window_bounds = array<i64: 16, 288>}, {pipeline_mode = #tpu.pipeline_mode<synchronous>, transform_indices = @transform_3, window_bounds = array<i64: 8, 144>}, {pipeline_mode = #tpu.pipeline_mode<synchronous>, transform_indices = @transform_4, window_bounds = array<i64: 1, 72>}, {transform_indices = @transform_5, window_bounds = array<i64: 1, 16>}]} {
    %c0 = arith.constant 0 : index
    %c0_0 = arith.constant 0 : index
    %0 = vector.load %arg1[%c0, %c0_0] : memref<5x16xf32, #tpu.memory_space<vmem>>, vector<5x16xf32>
    %c0_1 = arith.constant 0 : index
    %c0_2 = arith.constant 0 : index
    %1 = vector.load %arg2[%c0_1, %c0_2] : memref<32x45xf32, #tpu.memory_space<vmem>>, vector<32x45xf32>
    %cst = arith.constant 0.000000e+00 : f32
    %2 = vector.broadcast %cst : f32 to vector<5x16xf32>
    %3 = arith.subf %2, %0 : vector<5x16xf32>
    %4 = math.exp %3 : vector<5x16xf32>
    %cst_3 = arith.constant 1.000000e+00 : f32
    %5 = vector.broadcast %cst_3 : f32 to vector<5x16xf32>
    %6 = arith.addf %5, %4 : vector<5x16xf32>
    %7 = tpu.reciprocal %6 {approx = true} : vector<5x16xf32> -> vector<5x16xf32>
    %8 = arith.mulf %0, %7 : vector<5x16xf32>
    %cst_4 = arith.constant -2.200000e+00 : f32
    %9 = vector.broadcast %cst_4 : f32 to vector<5x16xf32>
    %10 = arith.cmpf oge, %0, %9 : vector<5x16xf32>
    %cst_5 = arith.constant -1.800000e+00 : f32
    %11 = vector.broadcast %cst_5 : f32 to vector<5x16xf32>
    %12 = arith.cmpf olt, %0, %11 : vector<5x16xf32>
    %13 = arith.andi %10, %12 : vector<5x16xi1>
    %14 = arith.extui %13 : vector<5x16xi1> to vector<5x16xi32>
    %15 = arith.sitofp %14 : vector<5x16xi32> to vector<5x16xf32>
    %cst_6 = arith.constant -1.800000e+00 : f32
    %16 = vector.broadcast %cst_6 : f32 to vector<5x16xf32>
    %17 = arith.cmpf oge, %0, %16 : vector<5x16xf32>
    %cst_7 = arith.constant -1.400000e+00 : f32
    %18 = vector.broadcast %cst_7 : f32 to vector<5x16xf32>
    %19 = arith.cmpf olt, %0, %18 : vector<5x16xf32>
    %20 = arith.andi %17, %19 : vector<5x16xi1>
    %21 = arith.extui %20 : vector<5x16xi1> to vector<5x16xi32>
    %22 = arith.sitofp %21 : vector<5x16xi32> to vector<5x16xf32>
    %cst_8 = arith.constant -1.400000e+00 : f32
    %23 = vector.broadcast %cst_8 : f32 to vector<5x16xf32>
    %24 = arith.cmpf oge, %0, %23 : vector<5x16xf32>
    %cst_9 = arith.constant -1.000000e+00 : f32
    %25 = vector.broadcast %cst_9 : f32 to vector<5x16xf32>
    %26 = arith.cmpf olt, %0, %25 : vector<5x16xf32>
    %27 = arith.andi %24, %26 : vector<5x16xi1>
    %28 = arith.extui %27 : vector<5x16xi1> to vector<5x16xi32>
    %29 = arith.sitofp %28 : vector<5x16xi32> to vector<5x16xf32>
    %cst_10 = arith.constant -1.000000e+00 : f32
    %30 = vector.broadcast %cst_10 : f32 to vector<5x16xf32>
    %31 = arith.cmpf oge, %0, %30 : vector<5x16xf32>
    %cst_11 = arith.constant -6.000000e-01 : f32
    %32 = vector.broadcast %cst_11 : f32 to vector<5x16xf32>
    %33 = arith.cmpf olt, %0, %32 : vector<5x16xf32>
    %34 = arith.andi %31, %33 : vector<5x16xi1>
    %35 = arith.extui %34 : vector<5x16xi1> to vector<5x16xi32>
    %36 = arith.sitofp %35 : vector<5x16xi32> to vector<5x16xf32>
    %cst_12 = arith.constant -6.000000e-01 : f32
    %37 = vector.broadcast %cst_12 : f32 to vector<5x16xf32>
    %38 = arith.cmpf oge, %0, %37 : vector<5x16xf32>
    %cst_13 = arith.constant -0.199999988 : f32
    %39 = vector.broadcast %cst_13 : f32 to vector<5x16xf32>
    %40 = arith.cmpf olt, %0, %39 : vector<5x16xf32>
    %41 = arith.andi %38, %40 : vector<5x16xi1>
    %42 = arith.extui %41 : vector<5x16xi1> to vector<5x16xi32>
    %43 = arith.sitofp %42 : vector<5x16xi32> to vector<5x16xf32>
    %cst_14 = arith.constant -0.199999988 : f32
    %44 = vector.broadcast %cst_14 : f32 to vector<5x16xf32>
    %45 = arith.cmpf oge, %0, %44 : vector<5x16xf32>
    %cst_15 = arith.constant 0.200000048 : f32
    %46 = vector.broadcast %cst_15 : f32 to vector<5x16xf32>
    %47 = arith.cmpf olt, %0, %46 : vector<5x16xf32>
    %48 = arith.andi %45, %47 : vector<5x16xi1>
    %49 = arith.extui %48 : vector<5x16xi1> to vector<5x16xi32>
    %50 = arith.sitofp %49 : vector<5x16xi32> to vector<5x16xf32>
    %cst_16 = arith.constant 0.200000048 : f32
    %51 = vector.broadcast %cst_16 : f32 to vector<5x16xf32>
    %52 = arith.cmpf oge, %0, %51 : vector<5x16xf32>
    %cst_17 = arith.constant 6.000000e-01 : f32
    %53 = vector.broadcast %cst_17 : f32 to vector<5x16xf32>
    %54 = arith.cmpf olt, %0, %53 : vector<5x16xf32>
    %55 = arith.andi %52, %54 : vector<5x16xi1>
    %56 = arith.extui %55 : vector<5x16xi1> to vector<5x16xi32>
    %57 = arith.sitofp %56 : vector<5x16xi32> to vector<5x16xf32>
    %cst_18 = arith.constant 6.000000e-01 : f32
    %58 = vector.broadcast %cst_18 : f32 to vector<5x16xf32>
    %59 = arith.cmpf oge, %0, %58 : vector<5x16xf32>
    %cst_19 = arith.constant 1.000000e+00 : f32
    %60 = vector.broadcast %cst_19 : f32 to vector<5x16xf32>
    %61 = arith.cmpf olt, %0, %60 : vector<5x16xf32>
    %62 = arith.andi %59, %61 : vector<5x16xi1>
    %63 = arith.extui %62 : vector<5x16xi1> to vector<5x16xi32>
    %64 = arith.sitofp %63 : vector<5x16xi32> to vector<5x16xf32>
    %cst_20 = arith.constant 1.000000e+00 : f32
    %65 = vector.broadcast %cst_20 : f32 to vector<5x16xf32>
    %66 = arith.cmpf oge, %0, %65 : vector<5x16xf32>
    %cst_21 = arith.constant 1.4000001 : f32
    %67 = vector.broadcast %cst_21 : f32 to vector<5x16xf32>
    %68 = arith.cmpf olt, %0, %67 : vector<5x16xf32>
    %69 = arith.andi %66, %68 : vector<5x16xi1>
    %70 = arith.extui %69 : vector<5x16xi1> to vector<5x16xi32>
    %71 = arith.sitofp %70 : vector<5x16xi32> to vector<5x16xf32>
    %cst_22 = arith.constant 1.4000001 : f32
    %72 = vector.broadcast %cst_22 : f32 to vector<5x16xf32>
    %73 = arith.cmpf oge, %0, %72 : vector<5x16xf32>
    %cst_23 = arith.constant 1.800000e+00 : f32
    %74 = vector.broadcast %cst_23 : f32 to vector<5x16xf32>
    %75 = arith.cmpf olt, %0, %74 : vector<5x16xf32>
    %76 = arith.andi %73, %75 : vector<5x16xi1>
    %77 = arith.extui %76 : vector<5x16xi1> to vector<5x16xi32>
    %78 = arith.sitofp %77 : vector<5x16xi32> to vector<5x16xf32>
    %cst_24 = arith.constant 1.800000e+00 : f32
    %79 = vector.broadcast %cst_24 : f32 to vector<5x16xf32>
    %80 = arith.cmpf oge, %0, %79 : vector<5x16xf32>
    %cst_25 = arith.constant 2.200000e+00 : f32
    %81 = vector.broadcast %cst_25 : f32 to vector<5x16xf32>
    %82 = arith.cmpf olt, %0, %81 : vector<5x16xf32>
    %83 = arith.andi %80, %82 : vector<5x16xi1>
    %84 = arith.extui %83 : vector<5x16xi1> to vector<5x16xi32>
    %85 = arith.sitofp %84 : vector<5x16xi32> to vector<5x16xf32>
    %cst_26 = arith.constant -2.200000e+00 : f32
    %86 = vector.broadcast %cst_26 : f32 to vector<5x16xf32>
    %87 = arith.subf %0, %86 : vector<5x16xf32>
    %cst_27 = arith.constant 2.500000e+00 : f32
    %88 = vector.broadcast %cst_27 : f32 to vector<5x16xf32>
    %89 = arith.mulf %87, %88 : vector<5x16xf32>
    %cst_28 = arith.constant 0.000000e+00 : f32
    %90 = vector.broadcast %cst_28 : f32 to vector<5x16xf32>
    %91 = arith.subf %89, %90 : vector<5x16xf32>
    %cst_29 = arith.constant 2.000000e+00 : f32
    %92 = vector.broadcast %cst_29 : f32 to vector<5x16xf32>
    %93 = arith.subf %92, %89 : vector<5x16xf32>
    %94 = arith.mulf %91, %15 : vector<5x16xf32>
    %95 = arith.mulf %93, %22 : vector<5x16xf32>
    %96 = arith.addf %94, %95 : vector<5x16xf32>
    %cst_30 = arith.constant 1.000000e+00 : f32
    %97 = vector.broadcast %cst_30 : f32 to vector<5x16xf32>
    %98 = arith.subf %89, %97 : vector<5x16xf32>
    %cst_31 = arith.constant 3.000000e+00 : f32
    %99 = vector.broadcast %cst_31 : f32 to vector<5x16xf32>
    %100 = arith.subf %99, %89 : vector<5x16xf32>
    %101 = arith.mulf %98, %22 : vector<5x16xf32>
    %102 = arith.mulf %100, %29 : vector<5x16xf32>
    %103 = arith.addf %101, %102 : vector<5x16xf32>
    %cst_32 = arith.constant 2.000000e+00 : f32
    %104 = vector.broadcast %cst_32 : f32 to vector<5x16xf32>
    %105 = arith.subf %89, %104 : vector<5x16xf32>
    %cst_33 = arith.constant 4.000000e+00 : f32
    %106 = vector.broadcast %cst_33 : f32 to vector<5x16xf32>
    %107 = arith.subf %106, %89 : vector<5x16xf32>
    %108 = arith.mulf %105, %29 : vector<5x16xf32>
    %109 = arith.mulf %107, %36 : vector<5x16xf32>
    %110 = arith.addf %108, %109 : vector<5x16xf32>
    %cst_34 = arith.constant 3.000000e+00 : f32
    %111 = vector.broadcast %cst_34 : f32 to vector<5x16xf32>
    %112 = arith.subf %89, %111 : vector<5x16xf32>
    %cst_35 = arith.constant 5.000000e+00 : f32
    %113 = vector.broadcast %cst_35 : f32 to vector<5x16xf32>
    %114 = arith.subf %113, %89 : vector<5x16xf32>
    %115 = arith.mulf %112, %36 : vector<5x16xf32>
    %116 = arith.mulf %114, %43 : vector<5x16xf32>
    %117 = arith.addf %115, %116 : vector<5x16xf32>
    %cst_36 = arith.constant 4.000000e+00 : f32
    %118 = vector.broadcast %cst_36 : f32 to vector<5x16xf32>
    %119 = arith.subf %89, %118 : vector<5x16xf32>
    %cst_37 = arith.constant 6.000000e+00 : f32
    %120 = vector.broadcast %cst_37 : f32 to vector<5x16xf32>
    %121 = arith.subf %120, %89 : vector<5x16xf32>
    %122 = arith.mulf %119, %43 : vector<5x16xf32>
    %123 = arith.mulf %121, %50 : vector<5x16xf32>
    %124 = arith.addf %122, %123 : vector<5x16xf32>
    %cst_38 = arith.constant 5.000000e+00 : f32
    %125 = vector.broadcast %cst_38 : f32 to vector<5x16xf32>
    %126 = arith.subf %89, %125 : vector<5x16xf32>
    %cst_39 = arith.constant 7.000000e+00 : f32
    %127 = vector.broadcast %cst_39 : f32 to vector<5x16xf32>
    %128 = arith.subf %127, %89 : vector<5x16xf32>
    %129 = arith.mulf %126, %50 : vector<5x16xf32>
    %130 = arith.mulf %128, %57 : vector<5x16xf32>
    %131 = arith.addf %129, %130 : vector<5x16xf32>
    %cst_40 = arith.constant 6.000000e+00 : f32
    %132 = vector.broadcast %cst_40 : f32 to vector<5x16xf32>
    %133 = arith.subf %89, %132 : vector<5x16xf32>
    %cst_41 = arith.constant 8.000000e+00 : f32
    %134 = vector.broadcast %cst_41 : f32 to vector<5x16xf32>
    %135 = arith.subf %134, %89 : vector<5x16xf32>
    %136 = arith.mulf %133, %57 : vector<5x16xf32>
    %137 = arith.mulf %135, %64 : vector<5x16xf32>
    %138 = arith.addf %136, %137 : vector<5x16xf32>
    %cst_42 = arith.constant 7.000000e+00 : f32
    %139 = vector.broadcast %cst_42 : f32 to vector<5x16xf32>
    %140 = arith.subf %89, %139 : vector<5x16xf32>
    %cst_43 = arith.constant 9.000000e+00 : f32
    %141 = vector.broadcast %cst_43 : f32 to vector<5x16xf32>
    %142 = arith.subf %141, %89 : vector<5x16xf32>
    %143 = arith.mulf %140, %64 : vector<5x16xf32>
    %144 = arith.mulf %142, %71 : vector<5x16xf32>
    %145 = arith.addf %143, %144 : vector<5x16xf32>
    %cst_44 = arith.constant 8.000000e+00 : f32
    %146 = vector.broadcast %cst_44 : f32 to vector<5x16xf32>
    %147 = arith.subf %89, %146 : vector<5x16xf32>
    %cst_45 = arith.constant 1.000000e+01 : f32
    %148 = vector.broadcast %cst_45 : f32 to vector<5x16xf32>
    %149 = arith.subf %148, %89 : vector<5x16xf32>
    %150 = arith.mulf %147, %71 : vector<5x16xf32>
    %151 = arith.mulf %149, %78 : vector<5x16xf32>
    %152 = arith.addf %150, %151 : vector<5x16xf32>
    %cst_46 = arith.constant 9.000000e+00 : f32
    %153 = vector.broadcast %cst_46 : f32 to vector<5x16xf32>
    %154 = arith.subf %89, %153 : vector<5x16xf32>
    %cst_47 = arith.constant 1.100000e+01 : f32
    %155 = vector.broadcast %cst_47 : f32 to vector<5x16xf32>
    %156 = arith.subf %155, %89 : vector<5x16xf32>
    %157 = arith.mulf %154, %78 : vector<5x16xf32>
    %158 = arith.mulf %156, %85 : vector<5x16xf32>
    %159 = arith.addf %157, %158 : vector<5x16xf32>
    %cst_48 = arith.constant -2.200000e+00 : f32
    %160 = vector.broadcast %cst_48 : f32 to vector<5x16xf32>
    %161 = arith.subf %0, %160 : vector<5x16xf32>
    %cst_49 = arith.constant 1.250000e+00 : f32
    %162 = vector.broadcast %cst_49 : f32 to vector<5x16xf32>
    %163 = arith.mulf %161, %162 : vector<5x16xf32>
    %cst_50 = arith.constant 0.000000e+00 : f32
    %164 = vector.broadcast %cst_50 : f32 to vector<5x16xf32>
    %165 = arith.subf %163, %164 : vector<5x16xf32>
    %cst_51 = arith.constant 1.500000e+00 : f32
    %166 = vector.broadcast %cst_51 : f32 to vector<5x16xf32>
    %167 = arith.subf %166, %163 : vector<5x16xf32>
    %168 = arith.mulf %165, %96 : vector<5x16xf32>
    %169 = arith.mulf %167, %103 : vector<5x16xf32>
    %170 = arith.addf %168, %169 : vector<5x16xf32>
    %cst_52 = arith.constant 5.000000e-01 : f32
    %171 = vector.broadcast %cst_52 : f32 to vector<5x16xf32>
    %172 = arith.subf %163, %171 : vector<5x16xf32>
    %cst_53 = arith.constant 2.000000e+00 : f32
    %173 = vector.broadcast %cst_53 : f32 to vector<5x16xf32>
    %174 = arith.subf %173, %163 : vector<5x16xf32>
    %175 = arith.mulf %172, %103 : vector<5x16xf32>
    %176 = arith.mulf %174, %110 : vector<5x16xf32>
    %177 = arith.addf %175, %176 : vector<5x16xf32>
    %cst_54 = arith.constant 1.000000e+00 : f32
    %178 = vector.broadcast %cst_54 : f32 to vector<5x16xf32>
    %179 = arith.subf %163, %178 : vector<5x16xf32>
    %cst_55 = arith.constant 2.500000e+00 : f32
    %180 = vector.broadcast %cst_55 : f32 to vector<5x16xf32>
    %181 = arith.subf %180, %163 : vector<5x16xf32>
    %182 = arith.mulf %179, %110 : vector<5x16xf32>
    %183 = arith.mulf %181, %117 : vector<5x16xf32>
    %184 = arith.addf %182, %183 : vector<5x16xf32>
    %cst_56 = arith.constant 1.500000e+00 : f32
    %185 = vector.broadcast %cst_56 : f32 to vector<5x16xf32>
    %186 = arith.subf %163, %185 : vector<5x16xf32>
    %cst_57 = arith.constant 3.000000e+00 : f32
    %187 = vector.broadcast %cst_57 : f32 to vector<5x16xf32>
    %188 = arith.subf %187, %163 : vector<5x16xf32>
    %189 = arith.mulf %186, %117 : vector<5x16xf32>
    %190 = arith.mulf %188, %124 : vector<5x16xf32>
    %191 = arith.addf %189, %190 : vector<5x16xf32>
    %cst_58 = arith.constant 2.000000e+00 : f32
    %192 = vector.broadcast %cst_58 : f32 to vector<5x16xf32>
    %193 = arith.subf %163, %192 : vector<5x16xf32>
    %cst_59 = arith.constant 3.500000e+00 : f32
    %194 = vector.broadcast %cst_59 : f32 to vector<5x16xf32>
    %195 = arith.subf %194, %163 : vector<5x16xf32>
    %196 = arith.mulf %193, %124 : vector<5x16xf32>
    %197 = arith.mulf %195, %131 : vector<5x16xf32>
    %198 = arith.addf %196, %197 : vector<5x16xf32>
    %cst_60 = arith.constant 2.500000e+00 : f32
    %199 = vector.broadcast %cst_60 : f32 to vector<5x16xf32>
    %200 = arith.subf %163, %199 : vector<5x16xf32>
    %cst_61 = arith.constant 4.000000e+00 : f32
    %201 = vector.broadcast %cst_61 : f32 to vector<5x16xf32>
    %202 = arith.subf %201, %163 : vector<5x16xf32>
    %203 = arith.mulf %200, %131 : vector<5x16xf32>
    %204 = arith.mulf %202, %138 : vector<5x16xf32>
    %205 = arith.addf %203, %204 : vector<5x16xf32>
    %cst_62 = arith.constant 3.000000e+00 : f32
    %206 = vector.broadcast %cst_62 : f32 to vector<5x16xf32>
    %207 = arith.subf %163, %206 : vector<5x16xf32>
    %cst_63 = arith.constant 4.500000e+00 : f32
    %208 = vector.broadcast %cst_63 : f32 to vector<5x16xf32>
    %209 = arith.subf %208, %163 : vector<5x16xf32>
    %210 = arith.mulf %207, %138 : vector<5x16xf32>
    %211 = arith.mulf %209, %145 : vector<5x16xf32>
    %212 = arith.addf %210, %211 : vector<5x16xf32>
    %cst_64 = arith.constant 3.500000e+00 : f32
    %213 = vector.broadcast %cst_64 : f32 to vector<5x16xf32>
    %214 = arith.subf %163, %213 : vector<5x16xf32>
    %cst_65 = arith.constant 5.000000e+00 : f32
    %215 = vector.broadcast %cst_65 : f32 to vector<5x16xf32>
    %216 = arith.subf %215, %163 : vector<5x16xf32>
    %217 = arith.mulf %214, %145 : vector<5x16xf32>
    %218 = arith.mulf %216, %152 : vector<5x16xf32>
    %219 = arith.addf %217, %218 : vector<5x16xf32>
    %cst_66 = arith.constant 4.000000e+00 : f32
    %220 = vector.broadcast %cst_66 : f32 to vector<5x16xf32>
    %221 = arith.subf %163, %220 : vector<5x16xf32>
    %cst_67 = arith.constant 5.500000e+00 : f32
    %222 = vector.broadcast %cst_67 : f32 to vector<5x16xf32>
    %223 = arith.subf %222, %163 : vector<5x16xf32>
    %224 = arith.mulf %221, %152 : vector<5x16xf32>
    %225 = arith.mulf %223, %159 : vector<5x16xf32>
    %226 = arith.addf %224, %225 : vector<5x16xf32>
    %cst_68 = arith.constant -2.200000e+00 : f32
    %227 = vector.broadcast %cst_68 : f32 to vector<5x16xf32>
    %228 = arith.subf %0, %227 : vector<5x16xf32>
    %cst_69 = arith.constant 0.833333313 : f32
    %229 = vector.broadcast %cst_69 : f32 to vector<5x16xf32>
    %230 = arith.mulf %228, %229 : vector<5x16xf32>
    %cst_70 = arith.constant 0.000000e+00 : f32
    %231 = vector.broadcast %cst_70 : f32 to vector<5x16xf32>
    %232 = arith.subf %230, %231 : vector<5x16xf32>
    %cst_71 = arith.constant 1.33333337 : f32
    %233 = vector.broadcast %cst_71 : f32 to vector<5x16xf32>
    %234 = arith.subf %233, %230 : vector<5x16xf32>
    %235 = arith.mulf %232, %170 : vector<5x16xf32>
    %236 = arith.mulf %234, %177 : vector<5x16xf32>
    %237 = arith.addf %235, %236 : vector<5x16xf32>
    %cst_72 = arith.constant 0.333333343 : f32
    %238 = vector.broadcast %cst_72 : f32 to vector<5x16xf32>
    %239 = arith.subf %230, %238 : vector<5x16xf32>
    %cst_73 = arith.constant 1.66666663 : f32
    %240 = vector.broadcast %cst_73 : f32 to vector<5x16xf32>
    %241 = arith.subf %240, %230 : vector<5x16xf32>
    %242 = arith.mulf %239, %177 : vector<5x16xf32>
    %243 = arith.mulf %241, %184 : vector<5x16xf32>
    %244 = arith.addf %242, %243 : vector<5x16xf32>
    %cst_74 = arith.constant 0.666666686 : f32
    %245 = vector.broadcast %cst_74 : f32 to vector<5x16xf32>
    %246 = arith.subf %230, %245 : vector<5x16xf32>
    %cst_75 = arith.constant 2.000000e+00 : f32
    %247 = vector.broadcast %cst_75 : f32 to vector<5x16xf32>
    %248 = arith.subf %247, %230 : vector<5x16xf32>
    %249 = arith.mulf %246, %184 : vector<5x16xf32>
    %250 = arith.mulf %248, %191 : vector<5x16xf32>
    %251 = arith.addf %249, %250 : vector<5x16xf32>
    %cst_76 = arith.constant 1.000000e+00 : f32
    %252 = vector.broadcast %cst_76 : f32 to vector<5x16xf32>
    %253 = arith.subf %230, %252 : vector<5x16xf32>
    %cst_77 = arith.constant 2.33333325 : f32
    %254 = vector.broadcast %cst_77 : f32 to vector<5x16xf32>
    %255 = arith.subf %254, %230 : vector<5x16xf32>
    %256 = arith.mulf %253, %191 : vector<5x16xf32>
    %257 = arith.mulf %255, %198 : vector<5x16xf32>
    %258 = arith.addf %256, %257 : vector<5x16xf32>
    %cst_78 = arith.constant 1.33333337 : f32
    %259 = vector.broadcast %cst_78 : f32 to vector<5x16xf32>
    %260 = arith.subf %230, %259 : vector<5x16xf32>
    %cst_79 = arith.constant 2.66666675 : f32
    %261 = vector.broadcast %cst_79 : f32 to vector<5x16xf32>
    %262 = arith.subf %261, %230 : vector<5x16xf32>
    %263 = arith.mulf %260, %198 : vector<5x16xf32>
    %264 = arith.mulf %262, %205 : vector<5x16xf32>
    %265 = arith.addf %263, %264 : vector<5x16xf32>
    %cst_80 = arith.constant 1.66666663 : f32
    %266 = vector.broadcast %cst_80 : f32 to vector<5x16xf32>
    %267 = arith.subf %230, %266 : vector<5x16xf32>
    %cst_81 = arith.constant 3.000000e+00 : f32
    %268 = vector.broadcast %cst_81 : f32 to vector<5x16xf32>
    %269 = arith.subf %268, %230 : vector<5x16xf32>
    %270 = arith.mulf %267, %205 : vector<5x16xf32>
    %271 = arith.mulf %269, %212 : vector<5x16xf32>
    %272 = arith.addf %270, %271 : vector<5x16xf32>
    %cst_82 = arith.constant 2.000000e+00 : f32
    %273 = vector.broadcast %cst_82 : f32 to vector<5x16xf32>
    %274 = arith.subf %230, %273 : vector<5x16xf32>
    %cst_83 = arith.constant 3.33333325 : f32
    %275 = vector.broadcast %cst_83 : f32 to vector<5x16xf32>
    %276 = arith.subf %275, %230 : vector<5x16xf32>
    %277 = arith.mulf %274, %212 : vector<5x16xf32>
    %278 = arith.mulf %276, %219 : vector<5x16xf32>
    %279 = arith.addf %277, %278 : vector<5x16xf32>
    %cst_84 = arith.constant 2.33333325 : f32
    %280 = vector.broadcast %cst_84 : f32 to vector<5x16xf32>
    %281 = arith.subf %230, %280 : vector<5x16xf32>
    %cst_85 = arith.constant 3.66666675 : f32
    %282 = vector.broadcast %cst_85 : f32 to vector<5x16xf32>
    %283 = arith.subf %282, %230 : vector<5x16xf32>
    %284 = arith.mulf %281, %219 : vector<5x16xf32>
    %285 = arith.mulf %283, %226 : vector<5x16xf32>
    %286 = arith.addf %284, %285 : vector<5x16xf32>
    %287 = tpu.concatenate %8, %237, %244, %251, %258, %265, %272, %279, %286 in 0 : vector<5x16xf32>, vector<5x16xf32>, vector<5x16xf32>, vector<5x16xf32>, vector<5x16xf32>, vector<5x16xf32>, vector<5x16xf32>, vector<5x16xf32>, vector<5x16xf32> -> vector<45x16xf32>
    %cst_86 = arith.constant dense<0.000000e+00> : vector<32x16xf32>
    %288 = tpu.matmul %1, %287, %cst_86 {dimension_numbers = #tpu.dot_dimension_numbers<[1], [0], [0], [1], [0, 0, 1, 1], [], []>} : vector<32x45xf32>, vector<45x16xf32>, vector<32x16xf32> -> vector<32x16xf32>
    %c0_87 = arith.constant 0 : index
    %c0_88 = arith.constant 0 : index
    %289 = vector.load %arg3[%c0_87, %c0_88] : memref<16x288xf32, #tpu.memory_space<vmem>>, vector<16x288xf32>
    %cst_89 = arith.constant 0.000000e+00 : f32
    %290 = vector.broadcast %cst_89 : f32 to vector<32x16xf32>
    %291 = arith.subf %290, %288 : vector<32x16xf32>
    %292 = math.exp %291 : vector<32x16xf32>
    %cst_90 = arith.constant 1.000000e+00 : f32
    %293 = vector.broadcast %cst_90 : f32 to vector<32x16xf32>
    %294 = arith.addf %293, %292 : vector<32x16xf32>
    %295 = tpu.reciprocal %294 {approx = true} : vector<32x16xf32> -> vector<32x16xf32>
    %296 = arith.mulf %288, %295 : vector<32x16xf32>
    %cst_91 = arith.constant -2.200000e+00 : f32
    %297 = vector.broadcast %cst_91 : f32 to vector<32x16xf32>
    %298 = arith.cmpf oge, %288, %297 : vector<32x16xf32>
    %cst_92 = arith.constant -1.800000e+00 : f32
    %299 = vector.broadcast %cst_92 : f32 to vector<32x16xf32>
    %300 = arith.cmpf olt, %288, %299 : vector<32x16xf32>
    %301 = arith.andi %298, %300 : vector<32x16xi1>
    %302 = arith.extui %301 : vector<32x16xi1> to vector<32x16xi32>
    %303 = arith.sitofp %302 : vector<32x16xi32> to vector<32x16xf32>
    %cst_93 = arith.constant -1.800000e+00 : f32
    %304 = vector.broadcast %cst_93 : f32 to vector<32x16xf32>
    %305 = arith.cmpf oge, %288, %304 : vector<32x16xf32>
    %cst_94 = arith.constant -1.400000e+00 : f32
    %306 = vector.broadcast %cst_94 : f32 to vector<32x16xf32>
    %307 = arith.cmpf olt, %288, %306 : vector<32x16xf32>
    %308 = arith.andi %305, %307 : vector<32x16xi1>
    %309 = arith.extui %308 : vector<32x16xi1> to vector<32x16xi32>
    %310 = arith.sitofp %309 : vector<32x16xi32> to vector<32x16xf32>
    %cst_95 = arith.constant -1.400000e+00 : f32
    %311 = vector.broadcast %cst_95 : f32 to vector<32x16xf32>
    %312 = arith.cmpf oge, %288, %311 : vector<32x16xf32>
    %cst_96 = arith.constant -1.000000e+00 : f32
    %313 = vector.broadcast %cst_96 : f32 to vector<32x16xf32>
    %314 = arith.cmpf olt, %288, %313 : vector<32x16xf32>
    %315 = arith.andi %312, %314 : vector<32x16xi1>
    %316 = arith.extui %315 : vector<32x16xi1> to vector<32x16xi32>
    %317 = arith.sitofp %316 : vector<32x16xi32> to vector<32x16xf32>
    %cst_97 = arith.constant -1.000000e+00 : f32
    %318 = vector.broadcast %cst_97 : f32 to vector<32x16xf32>
    %319 = arith.cmpf oge, %288, %318 : vector<32x16xf32>
    %cst_98 = arith.constant -6.000000e-01 : f32
    %320 = vector.broadcast %cst_98 : f32 to vector<32x16xf32>
    %321 = arith.cmpf olt, %288, %320 : vector<32x16xf32>
    %322 = arith.andi %319, %321 : vector<32x16xi1>
    %323 = arith.extui %322 : vector<32x16xi1> to vector<32x16xi32>
    %324 = arith.sitofp %323 : vector<32x16xi32> to vector<32x16xf32>
    %cst_99 = arith.constant -6.000000e-01 : f32
    %325 = vector.broadcast %cst_99 : f32 to vector<32x16xf32>
    %326 = arith.cmpf oge, %288, %325 : vector<32x16xf32>
    %cst_100 = arith.constant -0.199999988 : f32
    %327 = vector.broadcast %cst_100 : f32 to vector<32x16xf32>
    %328 = arith.cmpf olt, %288, %327 : vector<32x16xf32>
    %329 = arith.andi %326, %328 : vector<32x16xi1>
    %330 = arith.extui %329 : vector<32x16xi1> to vector<32x16xi32>
    %331 = arith.sitofp %330 : vector<32x16xi32> to vector<32x16xf32>
    %cst_101 = arith.constant -0.199999988 : f32
    %332 = vector.broadcast %cst_101 : f32 to vector<32x16xf32>
    %333 = arith.cmpf oge, %288, %332 : vector<32x16xf32>
    %cst_102 = arith.constant 0.200000048 : f32
    %334 = vector.broadcast %cst_102 : f32 to vector<32x16xf32>
    %335 = arith.cmpf olt, %288, %334 : vector<32x16xf32>
    %336 = arith.andi %333, %335 : vector<32x16xi1>
    %337 = arith.extui %336 : vector<32x16xi1> to vector<32x16xi32>
    %338 = arith.sitofp %337 : vector<32x16xi32> to vector<32x16xf32>
    %cst_103 = arith.constant 0.200000048 : f32
    %339 = vector.broadcast %cst_103 : f32 to vector<32x16xf32>
    %340 = arith.cmpf oge, %288, %339 : vector<32x16xf32>
    %cst_104 = arith.constant 6.000000e-01 : f32
    %341 = vector.broadcast %cst_104 : f32 to vector<32x16xf32>
    %342 = arith.cmpf olt, %288, %341 : vector<32x16xf32>
    %343 = arith.andi %340, %342 : vector<32x16xi1>
    %344 = arith.extui %343 : vector<32x16xi1> to vector<32x16xi32>
    %345 = arith.sitofp %344 : vector<32x16xi32> to vector<32x16xf32>
    %cst_105 = arith.constant 6.000000e-01 : f32
    %346 = vector.broadcast %cst_105 : f32 to vector<32x16xf32>
    %347 = arith.cmpf oge, %288, %346 : vector<32x16xf32>
    %cst_106 = arith.constant 1.000000e+00 : f32
    %348 = vector.broadcast %cst_106 : f32 to vector<32x16xf32>
    %349 = arith.cmpf olt, %288, %348 : vector<32x16xf32>
    %350 = arith.andi %347, %349 : vector<32x16xi1>
    %351 = arith.extui %350 : vector<32x16xi1> to vector<32x16xi32>
    %352 = arith.sitofp %351 : vector<32x16xi32> to vector<32x16xf32>
    %cst_107 = arith.constant 1.000000e+00 : f32
    %353 = vector.broadcast %cst_107 : f32 to vector<32x16xf32>
    %354 = arith.cmpf oge, %288, %353 : vector<32x16xf32>
    %cst_108 = arith.constant 1.4000001 : f32
    %355 = vector.broadcast %cst_108 : f32 to vector<32x16xf32>
    %356 = arith.cmpf olt, %288, %355 : vector<32x16xf32>
    %357 = arith.andi %354, %356 : vector<32x16xi1>
    %358 = arith.extui %357 : vector<32x16xi1> to vector<32x16xi32>
    %359 = arith.sitofp %358 : vector<32x16xi32> to vector<32x16xf32>
    %cst_109 = arith.constant 1.4000001 : f32
    %360 = vector.broadcast %cst_109 : f32 to vector<32x16xf32>
    %361 = arith.cmpf oge, %288, %360 : vector<32x16xf32>
    %cst_110 = arith.constant 1.800000e+00 : f32
    %362 = vector.broadcast %cst_110 : f32 to vector<32x16xf32>
    %363 = arith.cmpf olt, %288, %362 : vector<32x16xf32>
    %364 = arith.andi %361, %363 : vector<32x16xi1>
    %365 = arith.extui %364 : vector<32x16xi1> to vector<32x16xi32>
    %366 = arith.sitofp %365 : vector<32x16xi32> to vector<32x16xf32>
    %cst_111 = arith.constant 1.800000e+00 : f32
    %367 = vector.broadcast %cst_111 : f32 to vector<32x16xf32>
    %368 = arith.cmpf oge, %288, %367 : vector<32x16xf32>
    %cst_112 = arith.constant 2.200000e+00 : f32
    %369 = vector.broadcast %cst_112 : f32 to vector<32x16xf32>
    %370 = arith.cmpf olt, %288, %369 : vector<32x16xf32>
    %371 = arith.andi %368, %370 : vector<32x16xi1>
    %372 = arith.extui %371 : vector<32x16xi1> to vector<32x16xi32>
    %373 = arith.sitofp %372 : vector<32x16xi32> to vector<32x16xf32>
    %cst_113 = arith.constant -2.200000e+00 : f32
    %374 = vector.broadcast %cst_113 : f32 to vector<32x16xf32>
    %375 = arith.subf %288, %374 : vector<32x16xf32>
    %cst_114 = arith.constant 2.500000e+00 : f32
    %376 = vector.broadcast %cst_114 : f32 to vector<32x16xf32>
    %377 = arith.mulf %375, %376 : vector<32x16xf32>
    %cst_115 = arith.constant 0.000000e+00 : f32
    %378 = vector.broadcast %cst_115 : f32 to vector<32x16xf32>
    %379 = arith.subf %377, %378 : vector<32x16xf32>
    %cst_116 = arith.constant 2.000000e+00 : f32
    %380 = vector.broadcast %cst_116 : f32 to vector<32x16xf32>
    %381 = arith.subf %380, %377 : vector<32x16xf32>
    %382 = arith.mulf %379, %303 : vector<32x16xf32>
    %383 = arith.mulf %381, %310 : vector<32x16xf32>
    %384 = arith.addf %382, %383 : vector<32x16xf32>
    %cst_117 = arith.constant 1.000000e+00 : f32
    %385 = vector.broadcast %cst_117 : f32 to vector<32x16xf32>
    %386 = arith.subf %377, %385 : vector<32x16xf32>
    %cst_118 = arith.constant 3.000000e+00 : f32
    %387 = vector.broadcast %cst_118 : f32 to vector<32x16xf32>
    %388 = arith.subf %387, %377 : vector<32x16xf32>
    %389 = arith.mulf %386, %310 : vector<32x16xf32>
    %390 = arith.mulf %388, %317 : vector<32x16xf32>
    %391 = arith.addf %389, %390 : vector<32x16xf32>
    %cst_119 = arith.constant 2.000000e+00 : f32
    %392 = vector.broadcast %cst_119 : f32 to vector<32x16xf32>
    %393 = arith.subf %377, %392 : vector<32x16xf32>
    %cst_120 = arith.constant 4.000000e+00 : f32
    %394 = vector.broadcast %cst_120 : f32 to vector<32x16xf32>
    %395 = arith.subf %394, %377 : vector<32x16xf32>
    %396 = arith.mulf %393, %317 : vector<32x16xf32>
    %397 = arith.mulf %395, %324 : vector<32x16xf32>
    %398 = arith.addf %396, %397 : vector<32x16xf32>
    %cst_121 = arith.constant 3.000000e+00 : f32
    %399 = vector.broadcast %cst_121 : f32 to vector<32x16xf32>
    %400 = arith.subf %377, %399 : vector<32x16xf32>
    %cst_122 = arith.constant 5.000000e+00 : f32
    %401 = vector.broadcast %cst_122 : f32 to vector<32x16xf32>
    %402 = arith.subf %401, %377 : vector<32x16xf32>
    %403 = arith.mulf %400, %324 : vector<32x16xf32>
    %404 = arith.mulf %402, %331 : vector<32x16xf32>
    %405 = arith.addf %403, %404 : vector<32x16xf32>
    %cst_123 = arith.constant 4.000000e+00 : f32
    %406 = vector.broadcast %cst_123 : f32 to vector<32x16xf32>
    %407 = arith.subf %377, %406 : vector<32x16xf32>
    %cst_124 = arith.constant 6.000000e+00 : f32
    %408 = vector.broadcast %cst_124 : f32 to vector<32x16xf32>
    %409 = arith.subf %408, %377 : vector<32x16xf32>
    %410 = arith.mulf %407, %331 : vector<32x16xf32>
    %411 = arith.mulf %409, %338 : vector<32x16xf32>
    %412 = arith.addf %410, %411 : vector<32x16xf32>
    %cst_125 = arith.constant 5.000000e+00 : f32
    %413 = vector.broadcast %cst_125 : f32 to vector<32x16xf32>
    %414 = arith.subf %377, %413 : vector<32x16xf32>
    %cst_126 = arith.constant 7.000000e+00 : f32
    %415 = vector.broadcast %cst_126 : f32 to vector<32x16xf32>
    %416 = arith.subf %415, %377 : vector<32x16xf32>
    %417 = arith.mulf %414, %338 : vector<32x16xf32>
    %418 = arith.mulf %416, %345 : vector<32x16xf32>
    %419 = arith.addf %417, %418 : vector<32x16xf32>
    %cst_127 = arith.constant 6.000000e+00 : f32
    %420 = vector.broadcast %cst_127 : f32 to vector<32x16xf32>
    %421 = arith.subf %377, %420 : vector<32x16xf32>
    %cst_128 = arith.constant 8.000000e+00 : f32
    %422 = vector.broadcast %cst_128 : f32 to vector<32x16xf32>
    %423 = arith.subf %422, %377 : vector<32x16xf32>
    %424 = arith.mulf %421, %345 : vector<32x16xf32>
    %425 = arith.mulf %423, %352 : vector<32x16xf32>
    %426 = arith.addf %424, %425 : vector<32x16xf32>
    %cst_129 = arith.constant 7.000000e+00 : f32
    %427 = vector.broadcast %cst_129 : f32 to vector<32x16xf32>
    %428 = arith.subf %377, %427 : vector<32x16xf32>
    %cst_130 = arith.constant 9.000000e+00 : f32
    %429 = vector.broadcast %cst_130 : f32 to vector<32x16xf32>
    %430 = arith.subf %429, %377 : vector<32x16xf32>
    %431 = arith.mulf %428, %352 : vector<32x16xf32>
    %432 = arith.mulf %430, %359 : vector<32x16xf32>
    %433 = arith.addf %431, %432 : vector<32x16xf32>
    %cst_131 = arith.constant 8.000000e+00 : f32
    %434 = vector.broadcast %cst_131 : f32 to vector<32x16xf32>
    %435 = arith.subf %377, %434 : vector<32x16xf32>
    %cst_132 = arith.constant 1.000000e+01 : f32
    %436 = vector.broadcast %cst_132 : f32 to vector<32x16xf32>
    %437 = arith.subf %436, %377 : vector<32x16xf32>
    %438 = arith.mulf %435, %359 : vector<32x16xf32>
    %439 = arith.mulf %437, %366 : vector<32x16xf32>
    %440 = arith.addf %438, %439 : vector<32x16xf32>
    %cst_133 = arith.constant 9.000000e+00 : f32
    %441 = vector.broadcast %cst_133 : f32 to vector<32x16xf32>
    %442 = arith.subf %377, %441 : vector<32x16xf32>
    %cst_134 = arith.constant 1.100000e+01 : f32
    %443 = vector.broadcast %cst_134 : f32 to vector<32x16xf32>
    %444 = arith.subf %443, %377 : vector<32x16xf32>
    %445 = arith.mulf %442, %366 : vector<32x16xf32>
    %446 = arith.mulf %444, %373 : vector<32x16xf32>
    %447 = arith.addf %445, %446 : vector<32x16xf32>
    %cst_135 = arith.constant -2.200000e+00 : f32
    %448 = vector.broadcast %cst_135 : f32 to vector<32x16xf32>
    %449 = arith.subf %288, %448 : vector<32x16xf32>
    %cst_136 = arith.constant 1.250000e+00 : f32
    %450 = vector.broadcast %cst_136 : f32 to vector<32x16xf32>
    %451 = arith.mulf %449, %450 : vector<32x16xf32>
    %cst_137 = arith.constant 0.000000e+00 : f32
    %452 = vector.broadcast %cst_137 : f32 to vector<32x16xf32>
    %453 = arith.subf %451, %452 : vector<32x16xf32>
    %cst_138 = arith.constant 1.500000e+00 : f32
    %454 = vector.broadcast %cst_138 : f32 to vector<32x16xf32>
    %455 = arith.subf %454, %451 : vector<32x16xf32>
    %456 = arith.mulf %453, %384 : vector<32x16xf32>
    %457 = arith.mulf %455, %391 : vector<32x16xf32>
    %458 = arith.addf %456, %457 : vector<32x16xf32>
    %cst_139 = arith.constant 5.000000e-01 : f32
    %459 = vector.broadcast %cst_139 : f32 to vector<32x16xf32>
    %460 = arith.subf %451, %459 : vector<32x16xf32>
    %cst_140 = arith.constant 2.000000e+00 : f32
    %461 = vector.broadcast %cst_140 : f32 to vector<32x16xf32>
    %462 = arith.subf %461, %451 : vector<32x16xf32>
    %463 = arith.mulf %460, %391 : vector<32x16xf32>
    %464 = arith.mulf %462, %398 : vector<32x16xf32>
    %465 = arith.addf %463, %464 : vector<32x16xf32>
    %cst_141 = arith.constant 1.000000e+00 : f32
    %466 = vector.broadcast %cst_141 : f32 to vector<32x16xf32>
    %467 = arith.subf %451, %466 : vector<32x16xf32>
    %cst_142 = arith.constant 2.500000e+00 : f32
    %468 = vector.broadcast %cst_142 : f32 to vector<32x16xf32>
    %469 = arith.subf %468, %451 : vector<32x16xf32>
    %470 = arith.mulf %467, %398 : vector<32x16xf32>
    %471 = arith.mulf %469, %405 : vector<32x16xf32>
    %472 = arith.addf %470, %471 : vector<32x16xf32>
    %cst_143 = arith.constant 1.500000e+00 : f32
    %473 = vector.broadcast %cst_143 : f32 to vector<32x16xf32>
    %474 = arith.subf %451, %473 : vector<32x16xf32>
    %cst_144 = arith.constant 3.000000e+00 : f32
    %475 = vector.broadcast %cst_144 : f32 to vector<32x16xf32>
    %476 = arith.subf %475, %451 : vector<32x16xf32>
    %477 = arith.mulf %474, %405 : vector<32x16xf32>
    %478 = arith.mulf %476, %412 : vector<32x16xf32>
    %479 = arith.addf %477, %478 : vector<32x16xf32>
    %cst_145 = arith.constant 2.000000e+00 : f32
    %480 = vector.broadcast %cst_145 : f32 to vector<32x16xf32>
    %481 = arith.subf %451, %480 : vector<32x16xf32>
    %cst_146 = arith.constant 3.500000e+00 : f32
    %482 = vector.broadcast %cst_146 : f32 to vector<32x16xf32>
    %483 = arith.subf %482, %451 : vector<32x16xf32>
    %484 = arith.mulf %481, %412 : vector<32x16xf32>
    %485 = arith.mulf %483, %419 : vector<32x16xf32>
    %486 = arith.addf %484, %485 : vector<32x16xf32>
    %cst_147 = arith.constant 2.500000e+00 : f32
    %487 = vector.broadcast %cst_147 : f32 to vector<32x16xf32>
    %488 = arith.subf %451, %487 : vector<32x16xf32>
    %cst_148 = arith.constant 4.000000e+00 : f32
    %489 = vector.broadcast %cst_148 : f32 to vector<32x16xf32>
    %490 = arith.subf %489, %451 : vector<32x16xf32>
    %491 = arith.mulf %488, %419 : vector<32x16xf32>
    %492 = arith.mulf %490, %426 : vector<32x16xf32>
    %493 = arith.addf %491, %492 : vector<32x16xf32>
    %cst_149 = arith.constant 3.000000e+00 : f32
    %494 = vector.broadcast %cst_149 : f32 to vector<32x16xf32>
    %495 = arith.subf %451, %494 : vector<32x16xf32>
    %cst_150 = arith.constant 4.500000e+00 : f32
    %496 = vector.broadcast %cst_150 : f32 to vector<32x16xf32>
    %497 = arith.subf %496, %451 : vector<32x16xf32>
    %498 = arith.mulf %495, %426 : vector<32x16xf32>
    %499 = arith.mulf %497, %433 : vector<32x16xf32>
    %500 = arith.addf %498, %499 : vector<32x16xf32>
    %cst_151 = arith.constant 3.500000e+00 : f32
    %501 = vector.broadcast %cst_151 : f32 to vector<32x16xf32>
    %502 = arith.subf %451, %501 : vector<32x16xf32>
    %cst_152 = arith.constant 5.000000e+00 : f32
    %503 = vector.broadcast %cst_152 : f32 to vector<32x16xf32>
    %504 = arith.subf %503, %451 : vector<32x16xf32>
    %505 = arith.mulf %502, %433 : vector<32x16xf32>
    %506 = arith.mulf %504, %440 : vector<32x16xf32>
    %507 = arith.addf %505, %506 : vector<32x16xf32>
    %cst_153 = arith.constant 4.000000e+00 : f32
    %508 = vector.broadcast %cst_153 : f32 to vector<32x16xf32>
    %509 = arith.subf %451, %508 : vector<32x16xf32>
    %cst_154 = arith.constant 5.500000e+00 : f32
    %510 = vector.broadcast %cst_154 : f32 to vector<32x16xf32>
    %511 = arith.subf %510, %451 : vector<32x16xf32>
    %512 = arith.mulf %509, %440 : vector<32x16xf32>
    %513 = arith.mulf %511, %447 : vector<32x16xf32>
    %514 = arith.addf %512, %513 : vector<32x16xf32>
    %cst_155 = arith.constant -2.200000e+00 : f32
    %515 = vector.broadcast %cst_155 : f32 to vector<32x16xf32>
    %516 = arith.subf %288, %515 : vector<32x16xf32>
    %cst_156 = arith.constant 0.833333313 : f32
    %517 = vector.broadcast %cst_156 : f32 to vector<32x16xf32>
    %518 = arith.mulf %516, %517 : vector<32x16xf32>
    %cst_157 = arith.constant 0.000000e+00 : f32
    %519 = vector.broadcast %cst_157 : f32 to vector<32x16xf32>
    %520 = arith.subf %518, %519 : vector<32x16xf32>
    %cst_158 = arith.constant 1.33333337 : f32
    %521 = vector.broadcast %cst_158 : f32 to vector<32x16xf32>
    %522 = arith.subf %521, %518 : vector<32x16xf32>
    %523 = arith.mulf %520, %458 : vector<32x16xf32>
    %524 = arith.mulf %522, %465 : vector<32x16xf32>
    %525 = arith.addf %523, %524 : vector<32x16xf32>
    %cst_159 = arith.constant 0.333333343 : f32
    %526 = vector.broadcast %cst_159 : f32 to vector<32x16xf32>
    %527 = arith.subf %518, %526 : vector<32x16xf32>
    %cst_160 = arith.constant 1.66666663 : f32
    %528 = vector.broadcast %cst_160 : f32 to vector<32x16xf32>
    %529 = arith.subf %528, %518 : vector<32x16xf32>
    %530 = arith.mulf %527, %465 : vector<32x16xf32>
    %531 = arith.mulf %529, %472 : vector<32x16xf32>
    %532 = arith.addf %530, %531 : vector<32x16xf32>
    %cst_161 = arith.constant 0.666666686 : f32
    %533 = vector.broadcast %cst_161 : f32 to vector<32x16xf32>
    %534 = arith.subf %518, %533 : vector<32x16xf32>
    %cst_162 = arith.constant 2.000000e+00 : f32
    %535 = vector.broadcast %cst_162 : f32 to vector<32x16xf32>
    %536 = arith.subf %535, %518 : vector<32x16xf32>
    %537 = arith.mulf %534, %472 : vector<32x16xf32>
    %538 = arith.mulf %536, %479 : vector<32x16xf32>
    %539 = arith.addf %537, %538 : vector<32x16xf32>
    %cst_163 = arith.constant 1.000000e+00 : f32
    %540 = vector.broadcast %cst_163 : f32 to vector<32x16xf32>
    %541 = arith.subf %518, %540 : vector<32x16xf32>
    %cst_164 = arith.constant 2.33333325 : f32
    %542 = vector.broadcast %cst_164 : f32 to vector<32x16xf32>
    %543 = arith.subf %542, %518 : vector<32x16xf32>
    %544 = arith.mulf %541, %479 : vector<32x16xf32>
    %545 = arith.mulf %543, %486 : vector<32x16xf32>
    %546 = arith.addf %544, %545 : vector<32x16xf32>
    %cst_165 = arith.constant 1.33333337 : f32
    %547 = vector.broadcast %cst_165 : f32 to vector<32x16xf32>
    %548 = arith.subf %518, %547 : vector<32x16xf32>
    %cst_166 = arith.constant 2.66666675 : f32
    %549 = vector.broadcast %cst_166 : f32 to vector<32x16xf32>
    %550 = arith.subf %549, %518 : vector<32x16xf32>
    %551 = arith.mulf %548, %486 : vector<32x16xf32>
    %552 = arith.mulf %550, %493 : vector<32x16xf32>
    %553 = arith.addf %551, %552 : vector<32x16xf32>
    %cst_167 = arith.constant 1.66666663 : f32
    %554 = vector.broadcast %cst_167 : f32 to vector<32x16xf32>
    %555 = arith.subf %518, %554 : vector<32x16xf32>
    %cst_168 = arith.constant 3.000000e+00 : f32
    %556 = vector.broadcast %cst_168 : f32 to vector<32x16xf32>
    %557 = arith.subf %556, %518 : vector<32x16xf32>
    %558 = arith.mulf %555, %493 : vector<32x16xf32>
    %559 = arith.mulf %557, %500 : vector<32x16xf32>
    %560 = arith.addf %558, %559 : vector<32x16xf32>
    %cst_169 = arith.constant 2.000000e+00 : f32
    %561 = vector.broadcast %cst_169 : f32 to vector<32x16xf32>
    %562 = arith.subf %518, %561 : vector<32x16xf32>
    %cst_170 = arith.constant 3.33333325 : f32
    %563 = vector.broadcast %cst_170 : f32 to vector<32x16xf32>
    %564 = arith.subf %563, %518 : vector<32x16xf32>
    %565 = arith.mulf %562, %500 : vector<32x16xf32>
    %566 = arith.mulf %564, %507 : vector<32x16xf32>
    %567 = arith.addf %565, %566 : vector<32x16xf32>
    %cst_171 = arith.constant 2.33333325 : f32
    %568 = vector.broadcast %cst_171 : f32 to vector<32x16xf32>
    %569 = arith.subf %518, %568 : vector<32x16xf32>
    %cst_172 = arith.constant 3.66666675 : f32
    %570 = vector.broadcast %cst_172 : f32 to vector<32x16xf32>
    %571 = arith.subf %570, %518 : vector<32x16xf32>
    %572 = arith.mulf %569, %507 : vector<32x16xf32>
    %573 = arith.mulf %571, %514 : vector<32x16xf32>
    %574 = arith.addf %572, %573 : vector<32x16xf32>
    %575 = tpu.concatenate %296, %525, %532, %539, %546, %553, %560, %567, %574 in 0 : vector<32x16xf32>, vector<32x16xf32>, vector<32x16xf32>, vector<32x16xf32>, vector<32x16xf32>, vector<32x16xf32>, vector<32x16xf32>, vector<32x16xf32>, vector<32x16xf32> -> vector<288x16xf32>
    %cst_173 = arith.constant dense<0.000000e+00> : vector<16x16xf32>
    %576 = tpu.matmul %289, %575, %cst_173 {dimension_numbers = #tpu.dot_dimension_numbers<[1], [0], [0], [1], [0, 0, 1, 1], [], []>} : vector<16x288xf32>, vector<288x16xf32>, vector<16x16xf32> -> vector<16x16xf32>
    %c0_174 = arith.constant 0 : index
    %c0_175 = arith.constant 0 : index
    %577 = vector.load %arg4[%c0_174, %c0_175] : memref<8x144xf32, #tpu.memory_space<vmem>>, vector<8x144xf32>
    %cst_176 = arith.constant 0.000000e+00 : f32
    %578 = vector.broadcast %cst_176 : f32 to vector<16x16xf32>
    %579 = arith.subf %578, %576 : vector<16x16xf32>
    %580 = math.exp %579 : vector<16x16xf32>
    %cst_177 = arith.constant 1.000000e+00 : f32
    %581 = vector.broadcast %cst_177 : f32 to vector<16x16xf32>
    %582 = arith.addf %581, %580 : vector<16x16xf32>
    %583 = tpu.reciprocal %582 {approx = true} : vector<16x16xf32> -> vector<16x16xf32>
    %584 = arith.mulf %576, %583 : vector<16x16xf32>
    %cst_178 = arith.constant -2.200000e+00 : f32
    %585 = vector.broadcast %cst_178 : f32 to vector<16x16xf32>
    %586 = arith.cmpf oge, %576, %585 : vector<16x16xf32>
    %cst_179 = arith.constant -1.800000e+00 : f32
    %587 = vector.broadcast %cst_179 : f32 to vector<16x16xf32>
    %588 = arith.cmpf olt, %576, %587 : vector<16x16xf32>
    %589 = arith.andi %586, %588 : vector<16x16xi1>
    %590 = arith.extui %589 : vector<16x16xi1> to vector<16x16xi32>
    %591 = arith.sitofp %590 : vector<16x16xi32> to vector<16x16xf32>
    %cst_180 = arith.constant -1.800000e+00 : f32
    %592 = vector.broadcast %cst_180 : f32 to vector<16x16xf32>
    %593 = arith.cmpf oge, %576, %592 : vector<16x16xf32>
    %cst_181 = arith.constant -1.400000e+00 : f32
    %594 = vector.broadcast %cst_181 : f32 to vector<16x16xf32>
    %595 = arith.cmpf olt, %576, %594 : vector<16x16xf32>
    %596 = arith.andi %593, %595 : vector<16x16xi1>
    %597 = arith.extui %596 : vector<16x16xi1> to vector<16x16xi32>
    %598 = arith.sitofp %597 : vector<16x16xi32> to vector<16x16xf32>
    %cst_182 = arith.constant -1.400000e+00 : f32
    %599 = vector.broadcast %cst_182 : f32 to vector<16x16xf32>
    %600 = arith.cmpf oge, %576, %599 : vector<16x16xf32>
    %cst_183 = arith.constant -1.000000e+00 : f32
    %601 = vector.broadcast %cst_183 : f32 to vector<16x16xf32>
    %602 = arith.cmpf olt, %576, %601 : vector<16x16xf32>
    %603 = arith.andi %600, %602 : vector<16x16xi1>
    %604 = arith.extui %603 : vector<16x16xi1> to vector<16x16xi32>
    %605 = arith.sitofp %604 : vector<16x16xi32> to vector<16x16xf32>
    %cst_184 = arith.constant -1.000000e+00 : f32
    %606 = vector.broadcast %cst_184 : f32 to vector<16x16xf32>
    %607 = arith.cmpf oge, %576, %606 : vector<16x16xf32>
    %cst_185 = arith.constant -6.000000e-01 : f32
    %608 = vector.broadcast %cst_185 : f32 to vector<16x16xf32>
    %609 = arith.cmpf olt, %576, %608 : vector<16x16xf32>
    %610 = arith.andi %607, %609 : vector<16x16xi1>
    %611 = arith.extui %610 : vector<16x16xi1> to vector<16x16xi32>
    %612 = arith.sitofp %611 : vector<16x16xi32> to vector<16x16xf32>
    %cst_186 = arith.constant -6.000000e-01 : f32
    %613 = vector.broadcast %cst_186 : f32 to vector<16x16xf32>
    %614 = arith.cmpf oge, %576, %613 : vector<16x16xf32>
    %cst_187 = arith.constant -0.199999988 : f32
    %615 = vector.broadcast %cst_187 : f32 to vector<16x16xf32>
    %616 = arith.cmpf olt, %576, %615 : vector<16x16xf32>
    %617 = arith.andi %614, %616 : vector<16x16xi1>
    %618 = arith.extui %617 : vector<16x16xi1> to vector<16x16xi32>
    %619 = arith.sitofp %618 : vector<16x16xi32> to vector<16x16xf32>
    %cst_188 = arith.constant -0.199999988 : f32
    %620 = vector.broadcast %cst_188 : f32 to vector<16x16xf32>
    %621 = arith.cmpf oge, %576, %620 : vector<16x16xf32>
    %cst_189 = arith.constant 0.200000048 : f32
    %622 = vector.broadcast %cst_189 : f32 to vector<16x16xf32>
    %623 = arith.cmpf olt, %576, %622 : vector<16x16xf32>
    %624 = arith.andi %621, %623 : vector<16x16xi1>
    %625 = arith.extui %624 : vector<16x16xi1> to vector<16x16xi32>
    %626 = arith.sitofp %625 : vector<16x16xi32> to vector<16x16xf32>
    %cst_190 = arith.constant 0.200000048 : f32
    %627 = vector.broadcast %cst_190 : f32 to vector<16x16xf32>
    %628 = arith.cmpf oge, %576, %627 : vector<16x16xf32>
    %cst_191 = arith.constant 6.000000e-01 : f32
    %629 = vector.broadcast %cst_191 : f32 to vector<16x16xf32>
    %630 = arith.cmpf olt, %576, %629 : vector<16x16xf32>
    %631 = arith.andi %628, %630 : vector<16x16xi1>
    %632 = arith.extui %631 : vector<16x16xi1> to vector<16x16xi32>
    %633 = arith.sitofp %632 : vector<16x16xi32> to vector<16x16xf32>
    %cst_192 = arith.constant 6.000000e-01 : f32
    %634 = vector.broadcast %cst_192 : f32 to vector<16x16xf32>
    %635 = arith.cmpf oge, %576, %634 : vector<16x16xf32>
    %cst_193 = arith.constant 1.000000e+00 : f32
    %636 = vector.broadcast %cst_193 : f32 to vector<16x16xf32>
    %637 = arith.cmpf olt, %576, %636 : vector<16x16xf32>
    %638 = arith.andi %635, %637 : vector<16x16xi1>
    %639 = arith.extui %638 : vector<16x16xi1> to vector<16x16xi32>
    %640 = arith.sitofp %639 : vector<16x16xi32> to vector<16x16xf32>
    %cst_194 = arith.constant 1.000000e+00 : f32
    %641 = vector.broadcast %cst_194 : f32 to vector<16x16xf32>
    %642 = arith.cmpf oge, %576, %641 : vector<16x16xf32>
    %cst_195 = arith.constant 1.4000001 : f32
    %643 = vector.broadcast %cst_195 : f32 to vector<16x16xf32>
    %644 = arith.cmpf olt, %576, %643 : vector<16x16xf32>
    %645 = arith.andi %642, %644 : vector<16x16xi1>
    %646 = arith.extui %645 : vector<16x16xi1> to vector<16x16xi32>
    %647 = arith.sitofp %646 : vector<16x16xi32> to vector<16x16xf32>
    %cst_196 = arith.constant 1.4000001 : f32
    %648 = vector.broadcast %cst_196 : f32 to vector<16x16xf32>
    %649 = arith.cmpf oge, %576, %648 : vector<16x16xf32>
    %cst_197 = arith.constant 1.800000e+00 : f32
    %650 = vector.broadcast %cst_197 : f32 to vector<16x16xf32>
    %651 = arith.cmpf olt, %576, %650 : vector<16x16xf32>
    %652 = arith.andi %649, %651 : vector<16x16xi1>
    %653 = arith.extui %652 : vector<16x16xi1> to vector<16x16xi32>
    %654 = arith.sitofp %653 : vector<16x16xi32> to vector<16x16xf32>
    %cst_198 = arith.constant 1.800000e+00 : f32
    %655 = vector.broadcast %cst_198 : f32 to vector<16x16xf32>
    %656 = arith.cmpf oge, %576, %655 : vector<16x16xf32>
    %cst_199 = arith.constant 2.200000e+00 : f32
    %657 = vector.broadcast %cst_199 : f32 to vector<16x16xf32>
    %658 = arith.cmpf olt, %576, %657 : vector<16x16xf32>
    %659 = arith.andi %656, %658 : vector<16x16xi1>
    %660 = arith.extui %659 : vector<16x16xi1> to vector<16x16xi32>
    %661 = arith.sitofp %660 : vector<16x16xi32> to vector<16x16xf32>
    %cst_200 = arith.constant -2.200000e+00 : f32
    %662 = vector.broadcast %cst_200 : f32 to vector<16x16xf32>
    %663 = arith.subf %576, %662 : vector<16x16xf32>
    %cst_201 = arith.constant 2.500000e+00 : f32
    %664 = vector.broadcast %cst_201 : f32 to vector<16x16xf32>
    %665 = arith.mulf %663, %664 : vector<16x16xf32>
    %cst_202 = arith.constant 0.000000e+00 : f32
    %666 = vector.broadcast %cst_202 : f32 to vector<16x16xf32>
    %667 = arith.subf %665, %666 : vector<16x16xf32>
    %cst_203 = arith.constant 2.000000e+00 : f32
    %668 = vector.broadcast %cst_203 : f32 to vector<16x16xf32>
    %669 = arith.subf %668, %665 : vector<16x16xf32>
    %670 = arith.mulf %667, %591 : vector<16x16xf32>
    %671 = arith.mulf %669, %598 : vector<16x16xf32>
    %672 = arith.addf %670, %671 : vector<16x16xf32>
    %cst_204 = arith.constant 1.000000e+00 : f32
    %673 = vector.broadcast %cst_204 : f32 to vector<16x16xf32>
    %674 = arith.subf %665, %673 : vector<16x16xf32>
    %cst_205 = arith.constant 3.000000e+00 : f32
    %675 = vector.broadcast %cst_205 : f32 to vector<16x16xf32>
    %676 = arith.subf %675, %665 : vector<16x16xf32>
    %677 = arith.mulf %674, %598 : vector<16x16xf32>
    %678 = arith.mulf %676, %605 : vector<16x16xf32>
    %679 = arith.addf %677, %678 : vector<16x16xf32>
    %cst_206 = arith.constant 2.000000e+00 : f32
    %680 = vector.broadcast %cst_206 : f32 to vector<16x16xf32>
    %681 = arith.subf %665, %680 : vector<16x16xf32>
    %cst_207 = arith.constant 4.000000e+00 : f32
    %682 = vector.broadcast %cst_207 : f32 to vector<16x16xf32>
    %683 = arith.subf %682, %665 : vector<16x16xf32>
    %684 = arith.mulf %681, %605 : vector<16x16xf32>
    %685 = arith.mulf %683, %612 : vector<16x16xf32>
    %686 = arith.addf %684, %685 : vector<16x16xf32>
    %cst_208 = arith.constant 3.000000e+00 : f32
    %687 = vector.broadcast %cst_208 : f32 to vector<16x16xf32>
    %688 = arith.subf %665, %687 : vector<16x16xf32>
    %cst_209 = arith.constant 5.000000e+00 : f32
    %689 = vector.broadcast %cst_209 : f32 to vector<16x16xf32>
    %690 = arith.subf %689, %665 : vector<16x16xf32>
    %691 = arith.mulf %688, %612 : vector<16x16xf32>
    %692 = arith.mulf %690, %619 : vector<16x16xf32>
    %693 = arith.addf %691, %692 : vector<16x16xf32>
    %cst_210 = arith.constant 4.000000e+00 : f32
    %694 = vector.broadcast %cst_210 : f32 to vector<16x16xf32>
    %695 = arith.subf %665, %694 : vector<16x16xf32>
    %cst_211 = arith.constant 6.000000e+00 : f32
    %696 = vector.broadcast %cst_211 : f32 to vector<16x16xf32>
    %697 = arith.subf %696, %665 : vector<16x16xf32>
    %698 = arith.mulf %695, %619 : vector<16x16xf32>
    %699 = arith.mulf %697, %626 : vector<16x16xf32>
    %700 = arith.addf %698, %699 : vector<16x16xf32>
    %cst_212 = arith.constant 5.000000e+00 : f32
    %701 = vector.broadcast %cst_212 : f32 to vector<16x16xf32>
    %702 = arith.subf %665, %701 : vector<16x16xf32>
    %cst_213 = arith.constant 7.000000e+00 : f32
    %703 = vector.broadcast %cst_213 : f32 to vector<16x16xf32>
    %704 = arith.subf %703, %665 : vector<16x16xf32>
    %705 = arith.mulf %702, %626 : vector<16x16xf32>
    %706 = arith.mulf %704, %633 : vector<16x16xf32>
    %707 = arith.addf %705, %706 : vector<16x16xf32>
    %cst_214 = arith.constant 6.000000e+00 : f32
    %708 = vector.broadcast %cst_214 : f32 to vector<16x16xf32>
    %709 = arith.subf %665, %708 : vector<16x16xf32>
    %cst_215 = arith.constant 8.000000e+00 : f32
    %710 = vector.broadcast %cst_215 : f32 to vector<16x16xf32>
    %711 = arith.subf %710, %665 : vector<16x16xf32>
    %712 = arith.mulf %709, %633 : vector<16x16xf32>
    %713 = arith.mulf %711, %640 : vector<16x16xf32>
    %714 = arith.addf %712, %713 : vector<16x16xf32>
    %cst_216 = arith.constant 7.000000e+00 : f32
    %715 = vector.broadcast %cst_216 : f32 to vector<16x16xf32>
    %716 = arith.subf %665, %715 : vector<16x16xf32>
    %cst_217 = arith.constant 9.000000e+00 : f32
    %717 = vector.broadcast %cst_217 : f32 to vector<16x16xf32>
    %718 = arith.subf %717, %665 : vector<16x16xf32>
    %719 = arith.mulf %716, %640 : vector<16x16xf32>
    %720 = arith.mulf %718, %647 : vector<16x16xf32>
    %721 = arith.addf %719, %720 : vector<16x16xf32>
    %cst_218 = arith.constant 8.000000e+00 : f32
    %722 = vector.broadcast %cst_218 : f32 to vector<16x16xf32>
    %723 = arith.subf %665, %722 : vector<16x16xf32>
    %cst_219 = arith.constant 1.000000e+01 : f32
    %724 = vector.broadcast %cst_219 : f32 to vector<16x16xf32>
    %725 = arith.subf %724, %665 : vector<16x16xf32>
    %726 = arith.mulf %723, %647 : vector<16x16xf32>
    %727 = arith.mulf %725, %654 : vector<16x16xf32>
    %728 = arith.addf %726, %727 : vector<16x16xf32>
    %cst_220 = arith.constant 9.000000e+00 : f32
    %729 = vector.broadcast %cst_220 : f32 to vector<16x16xf32>
    %730 = arith.subf %665, %729 : vector<16x16xf32>
    %cst_221 = arith.constant 1.100000e+01 : f32
    %731 = vector.broadcast %cst_221 : f32 to vector<16x16xf32>
    %732 = arith.subf %731, %665 : vector<16x16xf32>
    %733 = arith.mulf %730, %654 : vector<16x16xf32>
    %734 = arith.mulf %732, %661 : vector<16x16xf32>
    %735 = arith.addf %733, %734 : vector<16x16xf32>
    %cst_222 = arith.constant -2.200000e+00 : f32
    %736 = vector.broadcast %cst_222 : f32 to vector<16x16xf32>
    %737 = arith.subf %576, %736 : vector<16x16xf32>
    %cst_223 = arith.constant 1.250000e+00 : f32
    %738 = vector.broadcast %cst_223 : f32 to vector<16x16xf32>
    %739 = arith.mulf %737, %738 : vector<16x16xf32>
    %cst_224 = arith.constant 0.000000e+00 : f32
    %740 = vector.broadcast %cst_224 : f32 to vector<16x16xf32>
    %741 = arith.subf %739, %740 : vector<16x16xf32>
    %cst_225 = arith.constant 1.500000e+00 : f32
    %742 = vector.broadcast %cst_225 : f32 to vector<16x16xf32>
    %743 = arith.subf %742, %739 : vector<16x16xf32>
    %744 = arith.mulf %741, %672 : vector<16x16xf32>
    %745 = arith.mulf %743, %679 : vector<16x16xf32>
    %746 = arith.addf %744, %745 : vector<16x16xf32>
    %cst_226 = arith.constant 5.000000e-01 : f32
    %747 = vector.broadcast %cst_226 : f32 to vector<16x16xf32>
    %748 = arith.subf %739, %747 : vector<16x16xf32>
    %cst_227 = arith.constant 2.000000e+00 : f32
    %749 = vector.broadcast %cst_227 : f32 to vector<16x16xf32>
    %750 = arith.subf %749, %739 : vector<16x16xf32>
    %751 = arith.mulf %748, %679 : vector<16x16xf32>
    %752 = arith.mulf %750, %686 : vector<16x16xf32>
    %753 = arith.addf %751, %752 : vector<16x16xf32>
    %cst_228 = arith.constant 1.000000e+00 : f32
    %754 = vector.broadcast %cst_228 : f32 to vector<16x16xf32>
    %755 = arith.subf %739, %754 : vector<16x16xf32>
    %cst_229 = arith.constant 2.500000e+00 : f32
    %756 = vector.broadcast %cst_229 : f32 to vector<16x16xf32>
    %757 = arith.subf %756, %739 : vector<16x16xf32>
    %758 = arith.mulf %755, %686 : vector<16x16xf32>
    %759 = arith.mulf %757, %693 : vector<16x16xf32>
    %760 = arith.addf %758, %759 : vector<16x16xf32>
    %cst_230 = arith.constant 1.500000e+00 : f32
    %761 = vector.broadcast %cst_230 : f32 to vector<16x16xf32>
    %762 = arith.subf %739, %761 : vector<16x16xf32>
    %cst_231 = arith.constant 3.000000e+00 : f32
    %763 = vector.broadcast %cst_231 : f32 to vector<16x16xf32>
    %764 = arith.subf %763, %739 : vector<16x16xf32>
    %765 = arith.mulf %762, %693 : vector<16x16xf32>
    %766 = arith.mulf %764, %700 : vector<16x16xf32>
    %767 = arith.addf %765, %766 : vector<16x16xf32>
    %cst_232 = arith.constant 2.000000e+00 : f32
    %768 = vector.broadcast %cst_232 : f32 to vector<16x16xf32>
    %769 = arith.subf %739, %768 : vector<16x16xf32>
    %cst_233 = arith.constant 3.500000e+00 : f32
    %770 = vector.broadcast %cst_233 : f32 to vector<16x16xf32>
    %771 = arith.subf %770, %739 : vector<16x16xf32>
    %772 = arith.mulf %769, %700 : vector<16x16xf32>
    %773 = arith.mulf %771, %707 : vector<16x16xf32>
    %774 = arith.addf %772, %773 : vector<16x16xf32>
    %cst_234 = arith.constant 2.500000e+00 : f32
    %775 = vector.broadcast %cst_234 : f32 to vector<16x16xf32>
    %776 = arith.subf %739, %775 : vector<16x16xf32>
    %cst_235 = arith.constant 4.000000e+00 : f32
    %777 = vector.broadcast %cst_235 : f32 to vector<16x16xf32>
    %778 = arith.subf %777, %739 : vector<16x16xf32>
    %779 = arith.mulf %776, %707 : vector<16x16xf32>
    %780 = arith.mulf %778, %714 : vector<16x16xf32>
    %781 = arith.addf %779, %780 : vector<16x16xf32>
    %cst_236 = arith.constant 3.000000e+00 : f32
    %782 = vector.broadcast %cst_236 : f32 to vector<16x16xf32>
    %783 = arith.subf %739, %782 : vector<16x16xf32>
    %cst_237 = arith.constant 4.500000e+00 : f32
    %784 = vector.broadcast %cst_237 : f32 to vector<16x16xf32>
    %785 = arith.subf %784, %739 : vector<16x16xf32>
    %786 = arith.mulf %783, %714 : vector<16x16xf32>
    %787 = arith.mulf %785, %721 : vector<16x16xf32>
    %788 = arith.addf %786, %787 : vector<16x16xf32>
    %cst_238 = arith.constant 3.500000e+00 : f32
    %789 = vector.broadcast %cst_238 : f32 to vector<16x16xf32>
    %790 = arith.subf %739, %789 : vector<16x16xf32>
    %cst_239 = arith.constant 5.000000e+00 : f32
    %791 = vector.broadcast %cst_239 : f32 to vector<16x16xf32>
    %792 = arith.subf %791, %739 : vector<16x16xf32>
    %793 = arith.mulf %790, %721 : vector<16x16xf32>
    %794 = arith.mulf %792, %728 : vector<16x16xf32>
    %795 = arith.addf %793, %794 : vector<16x16xf32>
    %cst_240 = arith.constant 4.000000e+00 : f32
    %796 = vector.broadcast %cst_240 : f32 to vector<16x16xf32>
    %797 = arith.subf %739, %796 : vector<16x16xf32>
    %cst_241 = arith.constant 5.500000e+00 : f32
    %798 = vector.broadcast %cst_241 : f32 to vector<16x16xf32>
    %799 = arith.subf %798, %739 : vector<16x16xf32>
    %800 = arith.mulf %797, %728 : vector<16x16xf32>
    %801 = arith.mulf %799, %735 : vector<16x16xf32>
    %802 = arith.addf %800, %801 : vector<16x16xf32>
    %cst_242 = arith.constant -2.200000e+00 : f32
    %803 = vector.broadcast %cst_242 : f32 to vector<16x16xf32>
    %804 = arith.subf %576, %803 : vector<16x16xf32>
    %cst_243 = arith.constant 0.833333313 : f32
    %805 = vector.broadcast %cst_243 : f32 to vector<16x16xf32>
    %806 = arith.mulf %804, %805 : vector<16x16xf32>
    %cst_244 = arith.constant 0.000000e+00 : f32
    %807 = vector.broadcast %cst_244 : f32 to vector<16x16xf32>
    %808 = arith.subf %806, %807 : vector<16x16xf32>
    %cst_245 = arith.constant 1.33333337 : f32
    %809 = vector.broadcast %cst_245 : f32 to vector<16x16xf32>
    %810 = arith.subf %809, %806 : vector<16x16xf32>
    %811 = arith.mulf %808, %746 : vector<16x16xf32>
    %812 = arith.mulf %810, %753 : vector<16x16xf32>
    %813 = arith.addf %811, %812 : vector<16x16xf32>
    %cst_246 = arith.constant 0.333333343 : f32
    %814 = vector.broadcast %cst_246 : f32 to vector<16x16xf32>
    %815 = arith.subf %806, %814 : vector<16x16xf32>
    %cst_247 = arith.constant 1.66666663 : f32
    %816 = vector.broadcast %cst_247 : f32 to vector<16x16xf32>
    %817 = arith.subf %816, %806 : vector<16x16xf32>
    %818 = arith.mulf %815, %753 : vector<16x16xf32>
    %819 = arith.mulf %817, %760 : vector<16x16xf32>
    %820 = arith.addf %818, %819 : vector<16x16xf32>
    %cst_248 = arith.constant 0.666666686 : f32
    %821 = vector.broadcast %cst_248 : f32 to vector<16x16xf32>
    %822 = arith.subf %806, %821 : vector<16x16xf32>
    %cst_249 = arith.constant 2.000000e+00 : f32
    %823 = vector.broadcast %cst_249 : f32 to vector<16x16xf32>
    %824 = arith.subf %823, %806 : vector<16x16xf32>
    %825 = arith.mulf %822, %760 : vector<16x16xf32>
    %826 = arith.mulf %824, %767 : vector<16x16xf32>
    %827 = arith.addf %825, %826 : vector<16x16xf32>
    %cst_250 = arith.constant 1.000000e+00 : f32
    %828 = vector.broadcast %cst_250 : f32 to vector<16x16xf32>
    %829 = arith.subf %806, %828 : vector<16x16xf32>
    %cst_251 = arith.constant 2.33333325 : f32
    %830 = vector.broadcast %cst_251 : f32 to vector<16x16xf32>
    %831 = arith.subf %830, %806 : vector<16x16xf32>
    %832 = arith.mulf %829, %767 : vector<16x16xf32>
    %833 = arith.mulf %831, %774 : vector<16x16xf32>
    %834 = arith.addf %832, %833 : vector<16x16xf32>
    %cst_252 = arith.constant 1.33333337 : f32
    %835 = vector.broadcast %cst_252 : f32 to vector<16x16xf32>
    %836 = arith.subf %806, %835 : vector<16x16xf32>
    %cst_253 = arith.constant 2.66666675 : f32
    %837 = vector.broadcast %cst_253 : f32 to vector<16x16xf32>
    %838 = arith.subf %837, %806 : vector<16x16xf32>
    %839 = arith.mulf %836, %774 : vector<16x16xf32>
    %840 = arith.mulf %838, %781 : vector<16x16xf32>
    %841 = arith.addf %839, %840 : vector<16x16xf32>
    %cst_254 = arith.constant 1.66666663 : f32
    %842 = vector.broadcast %cst_254 : f32 to vector<16x16xf32>
    %843 = arith.subf %806, %842 : vector<16x16xf32>
    %cst_255 = arith.constant 3.000000e+00 : f32
    %844 = vector.broadcast %cst_255 : f32 to vector<16x16xf32>
    %845 = arith.subf %844, %806 : vector<16x16xf32>
    %846 = arith.mulf %843, %781 : vector<16x16xf32>
    %847 = arith.mulf %845, %788 : vector<16x16xf32>
    %848 = arith.addf %846, %847 : vector<16x16xf32>
    %cst_256 = arith.constant 2.000000e+00 : f32
    %849 = vector.broadcast %cst_256 : f32 to vector<16x16xf32>
    %850 = arith.subf %806, %849 : vector<16x16xf32>
    %cst_257 = arith.constant 3.33333325 : f32
    %851 = vector.broadcast %cst_257 : f32 to vector<16x16xf32>
    %852 = arith.subf %851, %806 : vector<16x16xf32>
    %853 = arith.mulf %850, %788 : vector<16x16xf32>
    %854 = arith.mulf %852, %795 : vector<16x16xf32>
    %855 = arith.addf %853, %854 : vector<16x16xf32>
    %cst_258 = arith.constant 2.33333325 : f32
    %856 = vector.broadcast %cst_258 : f32 to vector<16x16xf32>
    %857 = arith.subf %806, %856 : vector<16x16xf32>
    %cst_259 = arith.constant 3.66666675 : f32
    %858 = vector.broadcast %cst_259 : f32 to vector<16x16xf32>
    %859 = arith.subf %858, %806 : vector<16x16xf32>
    %860 = arith.mulf %857, %795 : vector<16x16xf32>
    %861 = arith.mulf %859, %802 : vector<16x16xf32>
    %862 = arith.addf %860, %861 : vector<16x16xf32>
    %863 = tpu.concatenate %584, %813, %820, %827, %834, %841, %848, %855, %862 in 0 : vector<16x16xf32>, vector<16x16xf32>, vector<16x16xf32>, vector<16x16xf32>, vector<16x16xf32>, vector<16x16xf32>, vector<16x16xf32>, vector<16x16xf32>, vector<16x16xf32> -> vector<144x16xf32>
    %cst_260 = arith.constant dense<0.000000e+00> : vector<8x16xf32>
    %864 = tpu.matmul %577, %863, %cst_260 {dimension_numbers = #tpu.dot_dimension_numbers<[1], [0], [0], [1], [0, 0, 1, 1], [], []>} : vector<8x144xf32>, vector<144x16xf32>, vector<8x16xf32> -> vector<8x16xf32>
    %c0_261 = arith.constant 0 : index
    %c0_262 = arith.constant 0 : index
    %865 = vector.load %arg5[%c0_261, %c0_262] : memref<1x72xf32, #tpu.memory_space<vmem>>, vector<1x72xf32>
    %cst_263 = arith.constant 0.000000e+00 : f32
    %866 = vector.broadcast %cst_263 : f32 to vector<8x16xf32>
    %867 = arith.subf %866, %864 : vector<8x16xf32>
    %868 = math.exp %867 : vector<8x16xf32>
    %cst_264 = arith.constant 1.000000e+00 : f32
    %869 = vector.broadcast %cst_264 : f32 to vector<8x16xf32>
    %870 = arith.addf %869, %868 : vector<8x16xf32>
    %871 = tpu.reciprocal %870 {approx = true} : vector<8x16xf32> -> vector<8x16xf32>
    %872 = arith.mulf %864, %871 : vector<8x16xf32>
    %cst_265 = arith.constant -2.200000e+00 : f32
    %873 = vector.broadcast %cst_265 : f32 to vector<8x16xf32>
    %874 = arith.cmpf oge, %864, %873 : vector<8x16xf32>
    %cst_266 = arith.constant -1.800000e+00 : f32
    %875 = vector.broadcast %cst_266 : f32 to vector<8x16xf32>
    %876 = arith.cmpf olt, %864, %875 : vector<8x16xf32>
    %877 = arith.andi %874, %876 : vector<8x16xi1>
    %878 = arith.extui %877 : vector<8x16xi1> to vector<8x16xi32>
    %879 = arith.sitofp %878 : vector<8x16xi32> to vector<8x16xf32>
    %cst_267 = arith.constant -1.800000e+00 : f32
    %880 = vector.broadcast %cst_267 : f32 to vector<8x16xf32>
    %881 = arith.cmpf oge, %864, %880 : vector<8x16xf32>
    %cst_268 = arith.constant -1.400000e+00 : f32
    %882 = vector.broadcast %cst_268 : f32 to vector<8x16xf32>
    %883 = arith.cmpf olt, %864, %882 : vector<8x16xf32>
    %884 = arith.andi %881, %883 : vector<8x16xi1>
    %885 = arith.extui %884 : vector<8x16xi1> to vector<8x16xi32>
    %886 = arith.sitofp %885 : vector<8x16xi32> to vector<8x16xf32>
    %cst_269 = arith.constant -1.400000e+00 : f32
    %887 = vector.broadcast %cst_269 : f32 to vector<8x16xf32>
    %888 = arith.cmpf oge, %864, %887 : vector<8x16xf32>
    %cst_270 = arith.constant -1.000000e+00 : f32
    %889 = vector.broadcast %cst_270 : f32 to vector<8x16xf32>
    %890 = arith.cmpf olt, %864, %889 : vector<8x16xf32>
    %891 = arith.andi %888, %890 : vector<8x16xi1>
    %892 = arith.extui %891 : vector<8x16xi1> to vector<8x16xi32>
    %893 = arith.sitofp %892 : vector<8x16xi32> to vector<8x16xf32>
    %cst_271 = arith.constant -1.000000e+00 : f32
    %894 = vector.broadcast %cst_271 : f32 to vector<8x16xf32>
    %895 = arith.cmpf oge, %864, %894 : vector<8x16xf32>
    %cst_272 = arith.constant -6.000000e-01 : f32
    %896 = vector.broadcast %cst_272 : f32 to vector<8x16xf32>
    %897 = arith.cmpf olt, %864, %896 : vector<8x16xf32>
    %898 = arith.andi %895, %897 : vector<8x16xi1>
    %899 = arith.extui %898 : vector<8x16xi1> to vector<8x16xi32>
    %900 = arith.sitofp %899 : vector<8x16xi32> to vector<8x16xf32>
    %cst_273 = arith.constant -6.000000e-01 : f32
    %901 = vector.broadcast %cst_273 : f32 to vector<8x16xf32>
    %902 = arith.cmpf oge, %864, %901 : vector<8x16xf32>
    %cst_274 = arith.constant -0.199999988 : f32
    %903 = vector.broadcast %cst_274 : f32 to vector<8x16xf32>
    %904 = arith.cmpf olt, %864, %903 : vector<8x16xf32>
    %905 = arith.andi %902, %904 : vector<8x16xi1>
    %906 = arith.extui %905 : vector<8x16xi1> to vector<8x16xi32>
    %907 = arith.sitofp %906 : vector<8x16xi32> to vector<8x16xf32>
    %cst_275 = arith.constant -0.199999988 : f32
    %908 = vector.broadcast %cst_275 : f32 to vector<8x16xf32>
    %909 = arith.cmpf oge, %864, %908 : vector<8x16xf32>
    %cst_276 = arith.constant 0.200000048 : f32
    %910 = vector.broadcast %cst_276 : f32 to vector<8x16xf32>
    %911 = arith.cmpf olt, %864, %910 : vector<8x16xf32>
    %912 = arith.andi %909, %911 : vector<8x16xi1>
    %913 = arith.extui %912 : vector<8x16xi1> to vector<8x16xi32>
    %914 = arith.sitofp %913 : vector<8x16xi32> to vector<8x16xf32>
    %cst_277 = arith.constant 0.200000048 : f32
    %915 = vector.broadcast %cst_277 : f32 to vector<8x16xf32>
    %916 = arith.cmpf oge, %864, %915 : vector<8x16xf32>
    %cst_278 = arith.constant 6.000000e-01 : f32
    %917 = vector.broadcast %cst_278 : f32 to vector<8x16xf32>
    %918 = arith.cmpf olt, %864, %917 : vector<8x16xf32>
    %919 = arith.andi %916, %918 : vector<8x16xi1>
    %920 = arith.extui %919 : vector<8x16xi1> to vector<8x16xi32>
    %921 = arith.sitofp %920 : vector<8x16xi32> to vector<8x16xf32>
    %cst_279 = arith.constant 6.000000e-01 : f32
    %922 = vector.broadcast %cst_279 : f32 to vector<8x16xf32>
    %923 = arith.cmpf oge, %864, %922 : vector<8x16xf32>
    %cst_280 = arith.constant 1.000000e+00 : f32
    %924 = vector.broadcast %cst_280 : f32 to vector<8x16xf32>
    %925 = arith.cmpf olt, %864, %924 : vector<8x16xf32>
    %926 = arith.andi %923, %925 : vector<8x16xi1>
    %927 = arith.extui %926 : vector<8x16xi1> to vector<8x16xi32>
    %928 = arith.sitofp %927 : vector<8x16xi32> to vector<8x16xf32>
    %cst_281 = arith.constant 1.000000e+00 : f32
    %929 = vector.broadcast %cst_281 : f32 to vector<8x16xf32>
    %930 = arith.cmpf oge, %864, %929 : vector<8x16xf32>
    %cst_282 = arith.constant 1.4000001 : f32
    %931 = vector.broadcast %cst_282 : f32 to vector<8x16xf32>
    %932 = arith.cmpf olt, %864, %931 : vector<8x16xf32>
    %933 = arith.andi %930, %932 : vector<8x16xi1>
    %934 = arith.extui %933 : vector<8x16xi1> to vector<8x16xi32>
    %935 = arith.sitofp %934 : vector<8x16xi32> to vector<8x16xf32>
    %cst_283 = arith.constant 1.4000001 : f32
    %936 = vector.broadcast %cst_283 : f32 to vector<8x16xf32>
    %937 = arith.cmpf oge, %864, %936 : vector<8x16xf32>
    %cst_284 = arith.constant 1.800000e+00 : f32
    %938 = vector.broadcast %cst_284 : f32 to vector<8x16xf32>
    %939 = arith.cmpf olt, %864, %938 : vector<8x16xf32>
    %940 = arith.andi %937, %939 : vector<8x16xi1>
    %941 = arith.extui %940 : vector<8x16xi1> to vector<8x16xi32>
    %942 = arith.sitofp %941 : vector<8x16xi32> to vector<8x16xf32>
    %cst_285 = arith.constant 1.800000e+00 : f32
    %943 = vector.broadcast %cst_285 : f32 to vector<8x16xf32>
    %944 = arith.cmpf oge, %864, %943 : vector<8x16xf32>
    %cst_286 = arith.constant 2.200000e+00 : f32
    %945 = vector.broadcast %cst_286 : f32 to vector<8x16xf32>
    %946 = arith.cmpf olt, %864, %945 : vector<8x16xf32>
    %947 = arith.andi %944, %946 : vector<8x16xi1>
    %948 = arith.extui %947 : vector<8x16xi1> to vector<8x16xi32>
    %949 = arith.sitofp %948 : vector<8x16xi32> to vector<8x16xf32>
    %cst_287 = arith.constant -2.200000e+00 : f32
    %950 = vector.broadcast %cst_287 : f32 to vector<8x16xf32>
    %951 = arith.subf %864, %950 : vector<8x16xf32>
    %cst_288 = arith.constant 2.500000e+00 : f32
    %952 = vector.broadcast %cst_288 : f32 to vector<8x16xf32>
    %953 = arith.mulf %951, %952 : vector<8x16xf32>
    %cst_289 = arith.constant 0.000000e+00 : f32
    %954 = vector.broadcast %cst_289 : f32 to vector<8x16xf32>
    %955 = arith.subf %953, %954 : vector<8x16xf32>
    %cst_290 = arith.constant 2.000000e+00 : f32
    %956 = vector.broadcast %cst_290 : f32 to vector<8x16xf32>
    %957 = arith.subf %956, %953 : vector<8x16xf32>
    %958 = arith.mulf %955, %879 : vector<8x16xf32>
    %959 = arith.mulf %957, %886 : vector<8x16xf32>
    %960 = arith.addf %958, %959 : vector<8x16xf32>
    %cst_291 = arith.constant 1.000000e+00 : f32
    %961 = vector.broadcast %cst_291 : f32 to vector<8x16xf32>
    %962 = arith.subf %953, %961 : vector<8x16xf32>
    %cst_292 = arith.constant 3.000000e+00 : f32
    %963 = vector.broadcast %cst_292 : f32 to vector<8x16xf32>
    %964 = arith.subf %963, %953 : vector<8x16xf32>
    %965 = arith.mulf %962, %886 : vector<8x16xf32>
    %966 = arith.mulf %964, %893 : vector<8x16xf32>
    %967 = arith.addf %965, %966 : vector<8x16xf32>
    %cst_293 = arith.constant 2.000000e+00 : f32
    %968 = vector.broadcast %cst_293 : f32 to vector<8x16xf32>
    %969 = arith.subf %953, %968 : vector<8x16xf32>
    %cst_294 = arith.constant 4.000000e+00 : f32
    %970 = vector.broadcast %cst_294 : f32 to vector<8x16xf32>
    %971 = arith.subf %970, %953 : vector<8x16xf32>
    %972 = arith.mulf %969, %893 : vector<8x16xf32>
    %973 = arith.mulf %971, %900 : vector<8x16xf32>
    %974 = arith.addf %972, %973 : vector<8x16xf32>
    %cst_295 = arith.constant 3.000000e+00 : f32
    %975 = vector.broadcast %cst_295 : f32 to vector<8x16xf32>
    %976 = arith.subf %953, %975 : vector<8x16xf32>
    %cst_296 = arith.constant 5.000000e+00 : f32
    %977 = vector.broadcast %cst_296 : f32 to vector<8x16xf32>
    %978 = arith.subf %977, %953 : vector<8x16xf32>
    %979 = arith.mulf %976, %900 : vector<8x16xf32>
    %980 = arith.mulf %978, %907 : vector<8x16xf32>
    %981 = arith.addf %979, %980 : vector<8x16xf32>
    %cst_297 = arith.constant 4.000000e+00 : f32
    %982 = vector.broadcast %cst_297 : f32 to vector<8x16xf32>
    %983 = arith.subf %953, %982 : vector<8x16xf32>
    %cst_298 = arith.constant 6.000000e+00 : f32
    %984 = vector.broadcast %cst_298 : f32 to vector<8x16xf32>
    %985 = arith.subf %984, %953 : vector<8x16xf32>
    %986 = arith.mulf %983, %907 : vector<8x16xf32>
    %987 = arith.mulf %985, %914 : vector<8x16xf32>
    %988 = arith.addf %986, %987 : vector<8x16xf32>
    %cst_299 = arith.constant 5.000000e+00 : f32
    %989 = vector.broadcast %cst_299 : f32 to vector<8x16xf32>
    %990 = arith.subf %953, %989 : vector<8x16xf32>
    %cst_300 = arith.constant 7.000000e+00 : f32
    %991 = vector.broadcast %cst_300 : f32 to vector<8x16xf32>
    %992 = arith.subf %991, %953 : vector<8x16xf32>
    %993 = arith.mulf %990, %914 : vector<8x16xf32>
    %994 = arith.mulf %992, %921 : vector<8x16xf32>
    %995 = arith.addf %993, %994 : vector<8x16xf32>
    %cst_301 = arith.constant 6.000000e+00 : f32
    %996 = vector.broadcast %cst_301 : f32 to vector<8x16xf32>
    %997 = arith.subf %953, %996 : vector<8x16xf32>
    %cst_302 = arith.constant 8.000000e+00 : f32
    %998 = vector.broadcast %cst_302 : f32 to vector<8x16xf32>
    %999 = arith.subf %998, %953 : vector<8x16xf32>
    %1000 = arith.mulf %997, %921 : vector<8x16xf32>
    %1001 = arith.mulf %999, %928 : vector<8x16xf32>
    %1002 = arith.addf %1000, %1001 : vector<8x16xf32>
    %cst_303 = arith.constant 7.000000e+00 : f32
    %1003 = vector.broadcast %cst_303 : f32 to vector<8x16xf32>
    %1004 = arith.subf %953, %1003 : vector<8x16xf32>
    %cst_304 = arith.constant 9.000000e+00 : f32
    %1005 = vector.broadcast %cst_304 : f32 to vector<8x16xf32>
    %1006 = arith.subf %1005, %953 : vector<8x16xf32>
    %1007 = arith.mulf %1004, %928 : vector<8x16xf32>
    %1008 = arith.mulf %1006, %935 : vector<8x16xf32>
    %1009 = arith.addf %1007, %1008 : vector<8x16xf32>
    %cst_305 = arith.constant 8.000000e+00 : f32
    %1010 = vector.broadcast %cst_305 : f32 to vector<8x16xf32>
    %1011 = arith.subf %953, %1010 : vector<8x16xf32>
    %cst_306 = arith.constant 1.000000e+01 : f32
    %1012 = vector.broadcast %cst_306 : f32 to vector<8x16xf32>
    %1013 = arith.subf %1012, %953 : vector<8x16xf32>
    %1014 = arith.mulf %1011, %935 : vector<8x16xf32>
    %1015 = arith.mulf %1013, %942 : vector<8x16xf32>
    %1016 = arith.addf %1014, %1015 : vector<8x16xf32>
    %cst_307 = arith.constant 9.000000e+00 : f32
    %1017 = vector.broadcast %cst_307 : f32 to vector<8x16xf32>
    %1018 = arith.subf %953, %1017 : vector<8x16xf32>
    %cst_308 = arith.constant 1.100000e+01 : f32
    %1019 = vector.broadcast %cst_308 : f32 to vector<8x16xf32>
    %1020 = arith.subf %1019, %953 : vector<8x16xf32>
    %1021 = arith.mulf %1018, %942 : vector<8x16xf32>
    %1022 = arith.mulf %1020, %949 : vector<8x16xf32>
    %1023 = arith.addf %1021, %1022 : vector<8x16xf32>
    %cst_309 = arith.constant -2.200000e+00 : f32
    %1024 = vector.broadcast %cst_309 : f32 to vector<8x16xf32>
    %1025 = arith.subf %864, %1024 : vector<8x16xf32>
    %cst_310 = arith.constant 1.250000e+00 : f32
    %1026 = vector.broadcast %cst_310 : f32 to vector<8x16xf32>
    %1027 = arith.mulf %1025, %1026 : vector<8x16xf32>
    %cst_311 = arith.constant 0.000000e+00 : f32
    %1028 = vector.broadcast %cst_311 : f32 to vector<8x16xf32>
    %1029 = arith.subf %1027, %1028 : vector<8x16xf32>
    %cst_312 = arith.constant 1.500000e+00 : f32
    %1030 = vector.broadcast %cst_312 : f32 to vector<8x16xf32>
    %1031 = arith.subf %1030, %1027 : vector<8x16xf32>
    %1032 = arith.mulf %1029, %960 : vector<8x16xf32>
    %1033 = arith.mulf %1031, %967 : vector<8x16xf32>
    %1034 = arith.addf %1032, %1033 : vector<8x16xf32>
    %cst_313 = arith.constant 5.000000e-01 : f32
    %1035 = vector.broadcast %cst_313 : f32 to vector<8x16xf32>
    %1036 = arith.subf %1027, %1035 : vector<8x16xf32>
    %cst_314 = arith.constant 2.000000e+00 : f32
    %1037 = vector.broadcast %cst_314 : f32 to vector<8x16xf32>
    %1038 = arith.subf %1037, %1027 : vector<8x16xf32>
    %1039 = arith.mulf %1036, %967 : vector<8x16xf32>
    %1040 = arith.mulf %1038, %974 : vector<8x16xf32>
    %1041 = arith.addf %1039, %1040 : vector<8x16xf32>
    %cst_315 = arith.constant 1.000000e+00 : f32
    %1042 = vector.broadcast %cst_315 : f32 to vector<8x16xf32>
    %1043 = arith.subf %1027, %1042 : vector<8x16xf32>
    %cst_316 = arith.constant 2.500000e+00 : f32
    %1044 = vector.broadcast %cst_316 : f32 to vector<8x16xf32>
    %1045 = arith.subf %1044, %1027 : vector<8x16xf32>
    %1046 = arith.mulf %1043, %974 : vector<8x16xf32>
    %1047 = arith.mulf %1045, %981 : vector<8x16xf32>
    %1048 = arith.addf %1046, %1047 : vector<8x16xf32>
    %cst_317 = arith.constant 1.500000e+00 : f32
    %1049 = vector.broadcast %cst_317 : f32 to vector<8x16xf32>
    %1050 = arith.subf %1027, %1049 : vector<8x16xf32>
    %cst_318 = arith.constant 3.000000e+00 : f32
    %1051 = vector.broadcast %cst_318 : f32 to vector<8x16xf32>
    %1052 = arith.subf %1051, %1027 : vector<8x16xf32>
    %1053 = arith.mulf %1050, %981 : vector<8x16xf32>
    %1054 = arith.mulf %1052, %988 : vector<8x16xf32>
    %1055 = arith.addf %1053, %1054 : vector<8x16xf32>
    %cst_319 = arith.constant 2.000000e+00 : f32
    %1056 = vector.broadcast %cst_319 : f32 to vector<8x16xf32>
    %1057 = arith.subf %1027, %1056 : vector<8x16xf32>
    %cst_320 = arith.constant 3.500000e+00 : f32
    %1058 = vector.broadcast %cst_320 : f32 to vector<8x16xf32>
    %1059 = arith.subf %1058, %1027 : vector<8x16xf32>
    %1060 = arith.mulf %1057, %988 : vector<8x16xf32>
    %1061 = arith.mulf %1059, %995 : vector<8x16xf32>
    %1062 = arith.addf %1060, %1061 : vector<8x16xf32>
    %cst_321 = arith.constant 2.500000e+00 : f32
    %1063 = vector.broadcast %cst_321 : f32 to vector<8x16xf32>
    %1064 = arith.subf %1027, %1063 : vector<8x16xf32>
    %cst_322 = arith.constant 4.000000e+00 : f32
    %1065 = vector.broadcast %cst_322 : f32 to vector<8x16xf32>
    %1066 = arith.subf %1065, %1027 : vector<8x16xf32>
    %1067 = arith.mulf %1064, %995 : vector<8x16xf32>
    %1068 = arith.mulf %1066, %1002 : vector<8x16xf32>
    %1069 = arith.addf %1067, %1068 : vector<8x16xf32>
    %cst_323 = arith.constant 3.000000e+00 : f32
    %1070 = vector.broadcast %cst_323 : f32 to vector<8x16xf32>
    %1071 = arith.subf %1027, %1070 : vector<8x16xf32>
    %cst_324 = arith.constant 4.500000e+00 : f32
    %1072 = vector.broadcast %cst_324 : f32 to vector<8x16xf32>
    %1073 = arith.subf %1072, %1027 : vector<8x16xf32>
    %1074 = arith.mulf %1071, %1002 : vector<8x16xf32>
    %1075 = arith.mulf %1073, %1009 : vector<8x16xf32>
    %1076 = arith.addf %1074, %1075 : vector<8x16xf32>
    %cst_325 = arith.constant 3.500000e+00 : f32
    %1077 = vector.broadcast %cst_325 : f32 to vector<8x16xf32>
    %1078 = arith.subf %1027, %1077 : vector<8x16xf32>
    %cst_326 = arith.constant 5.000000e+00 : f32
    %1079 = vector.broadcast %cst_326 : f32 to vector<8x16xf32>
    %1080 = arith.subf %1079, %1027 : vector<8x16xf32>
    %1081 = arith.mulf %1078, %1009 : vector<8x16xf32>
    %1082 = arith.mulf %1080, %1016 : vector<8x16xf32>
    %1083 = arith.addf %1081, %1082 : vector<8x16xf32>
    %cst_327 = arith.constant 4.000000e+00 : f32
    %1084 = vector.broadcast %cst_327 : f32 to vector<8x16xf32>
    %1085 = arith.subf %1027, %1084 : vector<8x16xf32>
    %cst_328 = arith.constant 5.500000e+00 : f32
    %1086 = vector.broadcast %cst_328 : f32 to vector<8x16xf32>
    %1087 = arith.subf %1086, %1027 : vector<8x16xf32>
    %1088 = arith.mulf %1085, %1016 : vector<8x16xf32>
    %1089 = arith.mulf %1087, %1023 : vector<8x16xf32>
    %1090 = arith.addf %1088, %1089 : vector<8x16xf32>
    %cst_329 = arith.constant -2.200000e+00 : f32
    %1091 = vector.broadcast %cst_329 : f32 to vector<8x16xf32>
    %1092 = arith.subf %864, %1091 : vector<8x16xf32>
    %cst_330 = arith.constant 0.833333313 : f32
    %1093 = vector.broadcast %cst_330 : f32 to vector<8x16xf32>
    %1094 = arith.mulf %1092, %1093 : vector<8x16xf32>
    %cst_331 = arith.constant 0.000000e+00 : f32
    %1095 = vector.broadcast %cst_331 : f32 to vector<8x16xf32>
    %1096 = arith.subf %1094, %1095 : vector<8x16xf32>
    %cst_332 = arith.constant 1.33333337 : f32
    %1097 = vector.broadcast %cst_332 : f32 to vector<8x16xf32>
    %1098 = arith.subf %1097, %1094 : vector<8x16xf32>
    %1099 = arith.mulf %1096, %1034 : vector<8x16xf32>
    %1100 = arith.mulf %1098, %1041 : vector<8x16xf32>
    %1101 = arith.addf %1099, %1100 : vector<8x16xf32>
    %cst_333 = arith.constant 0.333333343 : f32
    %1102 = vector.broadcast %cst_333 : f32 to vector<8x16xf32>
    %1103 = arith.subf %1094, %1102 : vector<8x16xf32>
    %cst_334 = arith.constant 1.66666663 : f32
    %1104 = vector.broadcast %cst_334 : f32 to vector<8x16xf32>
    %1105 = arith.subf %1104, %1094 : vector<8x16xf32>
    %1106 = arith.mulf %1103, %1041 : vector<8x16xf32>
    %1107 = arith.mulf %1105, %1048 : vector<8x16xf32>
    %1108 = arith.addf %1106, %1107 : vector<8x16xf32>
    %cst_335 = arith.constant 0.666666686 : f32
    %1109 = vector.broadcast %cst_335 : f32 to vector<8x16xf32>
    %1110 = arith.subf %1094, %1109 : vector<8x16xf32>
    %cst_336 = arith.constant 2.000000e+00 : f32
    %1111 = vector.broadcast %cst_336 : f32 to vector<8x16xf32>
    %1112 = arith.subf %1111, %1094 : vector<8x16xf32>
    %1113 = arith.mulf %1110, %1048 : vector<8x16xf32>
    %1114 = arith.mulf %1112, %1055 : vector<8x16xf32>
    %1115 = arith.addf %1113, %1114 : vector<8x16xf32>
    %cst_337 = arith.constant 1.000000e+00 : f32
    %1116 = vector.broadcast %cst_337 : f32 to vector<8x16xf32>
    %1117 = arith.subf %1094, %1116 : vector<8x16xf32>
    %cst_338 = arith.constant 2.33333325 : f32
    %1118 = vector.broadcast %cst_338 : f32 to vector<8x16xf32>
    %1119 = arith.subf %1118, %1094 : vector<8x16xf32>
    %1120 = arith.mulf %1117, %1055 : vector<8x16xf32>
    %1121 = arith.mulf %1119, %1062 : vector<8x16xf32>
    %1122 = arith.addf %1120, %1121 : vector<8x16xf32>
    %cst_339 = arith.constant 1.33333337 : f32
    %1123 = vector.broadcast %cst_339 : f32 to vector<8x16xf32>
    %1124 = arith.subf %1094, %1123 : vector<8x16xf32>
    %cst_340 = arith.constant 2.66666675 : f32
    %1125 = vector.broadcast %cst_340 : f32 to vector<8x16xf32>
    %1126 = arith.subf %1125, %1094 : vector<8x16xf32>
    %1127 = arith.mulf %1124, %1062 : vector<8x16xf32>
    %1128 = arith.mulf %1126, %1069 : vector<8x16xf32>
    %1129 = arith.addf %1127, %1128 : vector<8x16xf32>
    %cst_341 = arith.constant 1.66666663 : f32
    %1130 = vector.broadcast %cst_341 : f32 to vector<8x16xf32>
    %1131 = arith.subf %1094, %1130 : vector<8x16xf32>
    %cst_342 = arith.constant 3.000000e+00 : f32
    %1132 = vector.broadcast %cst_342 : f32 to vector<8x16xf32>
    %1133 = arith.subf %1132, %1094 : vector<8x16xf32>
    %1134 = arith.mulf %1131, %1069 : vector<8x16xf32>
    %1135 = arith.mulf %1133, %1076 : vector<8x16xf32>
    %1136 = arith.addf %1134, %1135 : vector<8x16xf32>
    %cst_343 = arith.constant 2.000000e+00 : f32
    %1137 = vector.broadcast %cst_343 : f32 to vector<8x16xf32>
    %1138 = arith.subf %1094, %1137 : vector<8x16xf32>
    %cst_344 = arith.constant 3.33333325 : f32
    %1139 = vector.broadcast %cst_344 : f32 to vector<8x16xf32>
    %1140 = arith.subf %1139, %1094 : vector<8x16xf32>
    %1141 = arith.mulf %1138, %1076 : vector<8x16xf32>
    %1142 = arith.mulf %1140, %1083 : vector<8x16xf32>
    %1143 = arith.addf %1141, %1142 : vector<8x16xf32>
    %cst_345 = arith.constant 2.33333325 : f32
    %1144 = vector.broadcast %cst_345 : f32 to vector<8x16xf32>
    %1145 = arith.subf %1094, %1144 : vector<8x16xf32>
    %cst_346 = arith.constant 3.66666675 : f32
    %1146 = vector.broadcast %cst_346 : f32 to vector<8x16xf32>
    %1147 = arith.subf %1146, %1094 : vector<8x16xf32>
    %1148 = arith.mulf %1145, %1083 : vector<8x16xf32>
    %1149 = arith.mulf %1147, %1090 : vector<8x16xf32>
    %1150 = arith.addf %1148, %1149 : vector<8x16xf32>
    %1151 = tpu.concatenate %872, %1101, %1108, %1115, %1122, %1129, %1136, %1143, %1150 in 0 : vector<8x16xf32>, vector<8x16xf32>, vector<8x16xf32>, vector<8x16xf32>, vector<8x16xf32>, vector<8x16xf32>, vector<8x16xf32>, vector<8x16xf32>, vector<8x16xf32> -> vector<72x16xf32>
    %cst_347 = arith.constant dense<0.000000e+00> : vector<1x16xf32>
    %1152 = tpu.matmul %865, %1151, %cst_347 {dimension_numbers = #tpu.dot_dimension_numbers<[1], [0], [0], [1], [0, 0, 1, 1], [], []>} : vector<1x72xf32>, vector<72x16xf32>, vector<1x16xf32> -> vector<1x16xf32>
    %c0_348 = arith.constant 0 : index
    %c0_349 = arith.constant 0 : index
    %1153 = vector.load %arg6[%c0_348, %c0_349] : memref<1x16xf32, #tpu.memory_space<vmem>>, vector<1x16xf32>
    tpu.vector_store %arg6[%c0_348, %c0_349], %1152 {strides = array<i32>} : memref<1x16xf32, #tpu.memory_space<vmem>>, vector<1x16xf32>,
    return
  }
  func.func @transform_0(%arg0: i32) -> (i32, i32) {
    %c0_i32 = arith.constant 0 : i32
    %c0_i32_0 = arith.constant 0 : i32
    return %c0_i32, %arg0 : i32, i32
  }
  func.func @transform_1(%arg0: i32) -> (i32, i32) {
    %c0_i32 = arith.constant 0 : i32
    %c0_i32_0 = arith.constant 0 : i32
    %c0_i32_1 = arith.constant 0 : i32
    return %c0_i32, %c0_i32_0 : i32, i32
  }
  func.func @transform_2(%arg0: i32) -> (i32, i32) {
    %c0_i32 = arith.constant 0 : i32
    %c0_i32_0 = arith.constant 0 : i32
    %c0_i32_1 = arith.constant 0 : i32
    return %c0_i32, %c0_i32_0 : i32, i32
  }
  func.func @transform_3(%arg0: i32) -> (i32, i32) {
    %c0_i32 = arith.constant 0 : i32
    %c0_i32_0 = arith.constant 0 : i32
    %c0_i32_1 = arith.constant 0 : i32
    return %c0_i32, %c0_i32_0 : i32, i32
  }
  func.func @transform_4(%arg0: i32) -> (i32, i32) {
    %c0_i32 = arith.constant 0 : i32
    %c0_i32_0 = arith.constant 0 : i32
    %c0_i32_1 = arith.constant 0 : i32
    return %c0_i32, %c0_i32_0 : i32, i32
  }
  func.func @transform_5(%arg0: i32) -> (i32, i32) {
    %c0_i32 = arith.constant 0 : i32
    %c0_i32_0 = arith.constant 0 : i32
    return %c0_i32, %arg0 : i32, i32
  }
}

</mosaic_0001>

<llo_original>
// kernel: tpu_custom_call.1
$region0: #{tpu_custom_call.1}
  #allocation0 [shape = 'u32[]', space=smem, size = 0x4, offset = 0x4, fixed_abs, tag = 'smem constant byte address 0x4 - core index']
  #allocation1 [shape = 'u32[72,128]{1,0:T(1,128)}', space=vmem, size = 0x9000, scoped, tag = 'internal scratch']
  %s0 = inlined_call_operand.hbm [shape: f32[5,16], index: 0, kind: input, shape index: {}]
  %s1 = inlined_call_operand.hbm [shape: f32[32,45], index: 1, kind: input, shape index: {}]
  %s2 = inlined_call_operand.hbm [shape: f32[16,288], index: 2, kind: input, shape index: {}]
  %s3 = inlined_call_operand.hbm [shape: f32[8,144], index: 3, kind: input, shape index: {}]
  %s4 = inlined_call_operand.vmem [shape: f32[1,72], index: 4, kind: input, shape index: {}]
  %s5 = inlined_call_operand.hbm [shape: f32[1,16], index: 5, kind: output, shape index: {}]
  %s6 = sld [smem:[#allocation0]]
  $region46: #{tpu_custom_call.1} parent=0
    _
  %s8 = ssub.s32 1, %s6
  %s9 = scalar_select 0, %s8, %s6
  $region1: #{tpu_custom_call.1} parent=0
    #allocation2 [shape = 'u8[4096]{0}', space=vmem, size = 0x1000, scoped, tag = 'input window, operand 0, single buffered']
    #allocation3 [shape = 's32[1]{0}', space=sflag, size = 0x4, scoped, tag = 'scoped memory for tpu_custom_call.1']
    #allocation4 [shape = 's32[1]{0}', space=sflag, size = 0x4, scoped, tag = 'scoped memory for tpu_custom_call.1']
    #allocation5 [shape = 'u8[16384]{0}', space=vmem, size = 0x4000, scoped, tag = 'input window, operand 1, single buffered']
    #allocation6 [shape = 's32[1]{0}', space=sflag, size = 0x4, scoped, tag = 'scoped memory for tpu_custom_call.1']
    #allocation7 [shape = 'u8[24576]{0}', space=vmem, size = 0x6000, scoped, tag = 'input window, operand 2, single buffered']
    #allocation8 [shape = 'u8[8192]{0}', space=vmem, size = 0x2000, scoped, tag = 'input window, operand 3, single buffered']
    #allocation9 [shape = 's32[1]{0}', space=sflag, size = 0x4, scoped, tag = 'scoped memory for tpu_custom_call.1']
    #allocation10 [shape = 'u8[512]{0}', space=vmem, size = 0x400, scoped, tag = 'output window, operand 0, single buffered']
    %10 = vsyncpa [#allocation3], 0
    %11 = vsyncpa [#allocation6], 0
    %12 = vsyncpa [#allocation9], 0
    %13 = vsyncpa [#allocation4], 0
    // Predicated region
    $region2: #{tpu_custom_call.1} parent=1 // pred_check
      _
    $region3: #{tpu_custom_call.1} parent=1 // pred_check_branch
      %15 = sbr.rel (0) target = $region5
    $region4: #{tpu_custom_call.1} parent=1 // pred_region
      %17 = vsyncadd [#allocation3], 0
      %s19 = sshll.u32 %s0, 4
      %s20 = int_to_ptr.hbm [resolvable:$true] %s19
      %s21 = sshll.u32 [#allocation2], 4
      %s22 = int_to_ptr.vmem [resolvable:$true] %s21
      %24 = dma.hbm_to_vmem [thread:$0]  %s20, 128, %s22, [#allocation3]
    $region5: #{tpu_custom_call.1} parent=1 // pred_fallthru
      _
    // Predicated region
    $region6: #{tpu_custom_call.1} parent=1 // pred_check
      _
    $region7: #{tpu_custom_call.1} parent=1 // pred_check_branch
      %26 = sbr.rel (0) target = $region9
    $region8: #{tpu_custom_call.1} parent=1 // pred_region
      %28 = vsyncadd [#allocation6], 0
      %s29 = sshll.u32 %s1, 4
      %s30 = int_to_ptr.hbm [resolvable:$true] %s29
      %s31 = sshll.u32 [#allocation5], 4
      %s32 = int_to_ptr.vmem [resolvable:$true] %s31
      %37 = dma.hbm_to_vmem [thread:$0]  %s30, 512, %s32, [#allocation6], 128, 128, 8
    $region9: #{tpu_custom_call.1} parent=1 // pred_fallthru
      _
    // Predicated region
    $region10: #{tpu_custom_call.1} parent=1 // pred_check
      _
    $region11: #{tpu_custom_call.1} parent=1 // pred_check_branch
      %39 = sbr.rel (0) target = $region13
    $region12: #{tpu_custom_call.1} parent=1 // pred_region
      %41 = vsyncadd [#allocation6], 0
      %s42 = sshll.u32 %s2, 4
      %s43 = int_to_ptr.hbm [resolvable:$true] %s42
      %s44 = sshll.u32 [#allocation7], 4
      %s45 = int_to_ptr.vmem [resolvable:$true] %s44
      %50 = dma.hbm_to_vmem [thread:$0]  %s43, 768, %s45, [#allocation6], 384, 384, 24
    $region13: #{tpu_custom_call.1} parent=1 // pred_fallthru
      _
    // Predicated region
    $region14: #{tpu_custom_call.1} parent=1 // pred_check
      _
    $region15: #{tpu_custom_call.1} parent=1 // pred_check_branch
      %52 = sbr.rel (0) target = $region17
    $region16: #{tpu_custom_call.1} parent=1 // pred_region
      %54 = vsyncadd [#allocation9], 0
      %s56 = sshll.u32 %s3, 4
      %s57 = int_to_ptr.hbm [resolvable:$true] %s56
      %s58 = sshll.u32 [#allocation8], 4
      %s59 = int_to_ptr.vmem [resolvable:$true] %s58
      %61 = dma.hbm_to_vmem [thread:$0]  %s57, 256, %s59, [#allocation9]
    $region17: #{tpu_custom_call.1} parent=1 // pred_fallthru
      _
    // Predicated region
    $region18: #{tpu_custom_call.1} parent=1 // pred_check
      _
    $region19: #{tpu_custom_call.1} parent=1 // pred_check_branch
      %63 = sbr.rel (0) target = $region21
    $region20: #{tpu_custom_call.1} parent=1 // pred_region
      _
    $region21: #{tpu_custom_call.1} parent=1 // pred_fallthru
      _
    // Predicated region
    $region22: #{tpu_custom_call.1} parent=1 // pred_check
      _
    $region23: #{tpu_custom_call.1} parent=1 // pred_check_branch
      %65 = sbr.rel (0) target = $region25
    $region24: #{tpu_custom_call.1} parent=1 // pred_region
      %67 = dma.done [#allocation3], 128
    $region25: #{tpu_custom_call.1} parent=1 // pred_fallthru
      _
    // Predicated region
    $region26: #{tpu_custom_call.1} parent=1 // pred_check
      _
    $region27: #{tpu_custom_call.1} parent=1 // pred_check_branch
      %69 = sbr.rel (0) target = $region29
    $region28: #{tpu_custom_call.1} parent=1 // pred_region
      %71 = dma.done [#allocation6], 512
    $region29: #{tpu_custom_call.1} parent=1 // pred_fallthru
      _
    // Predicated region
    $region30: #{tpu_custom_call.1} parent=1 // pred_check
      _
    $region31: #{tpu_custom_call.1} parent=1 // pred_check_branch
      %73 = sbr.rel (0) target = $region33
    $region32: #{tpu_custom_call.1} parent=1 // pred_region
      %75 = dma.done [#allocation6], 768
    $region33: #{tpu_custom_call.1} parent=1 // pred_fallthru
      _
    // Predicated region
    $region34: #{tpu_custom_call.1} parent=1 // pred_check
      _
    $region35: #{tpu_custom_call.1} parent=1 // pred_check_branch
      %77 = sbr.rel (0) target = $region37
    $region36: #{tpu_custom_call.1} parent=1 // pred_region
      %79 = dma.done [#allocation9], 256
    $region37: #{tpu_custom_call.1} parent=1 // pred_fallthru
      _
    %v80 = vld [vmem:[#allocation2] sm:$0x1f]
    %v81 = vld [vmem:[#allocation5] sm:$0xff]
    %v82 = vld [vmem:[#allocation5 + $0x8] sm:$0xff]
    %v83 = vld [vmem:[#allocation5 + $0x10] sm:$0xff]
    %v84 = vld [vmem:[#allocation5 + $0x18] sm:$0xff]
    %v85 = vsub.f32 0.0, %v80
    %v86 = vmul.f32 %v85, 1.442695
    %v87 = vpow.pop %v86
    %v88 = vadd.f32 %v87, 1.0
    %v89 = vrcp.pop %v88
    %v90 = vmul.f32 %v80, %v89
    %vm91 = vcmp.ge.f32.partialorder %v80, -2.2
    %vm92 = vcmp.lt.f32.partialorder %v80, -1.8
    %vm93 = vmand %vm91, %vm92
    %v94 = vsel %vm93, 1, 0
    %v95 = vcvt.s32.f32 %v94
    %vm96 = vcmp.ge.f32.partialorder %v80, -1.8
    %vm97 = vcmp.lt.f32.partialorder %v80, -1.4
    %vm98 = vmand %vm96, %vm97
    %v99 = vsel %vm98, 1, 0
    %v100 = vcvt.s32.f32 %v99
    %vm101 = vcmp.ge.f32.partialorder %v80, -1.4
    %vm102 = vcmp.lt.f32.partialorder %v80, -1.0
    %vm103 = vmand %vm101, %vm102
    %v104 = vsel %vm103, 1, 0
    %v105 = vcvt.s32.f32 %v104
    %vm106 = vcmp.ge.f32.partialorder %v80, -1.0
    %vm107 = vcmp.lt.f32.partialorder %v80, -0.6
    %vm108 = vmand %vm106, %vm107
    %v109 = vsel %vm108, 1, 0
    %v110 = vcvt.s32.f32 %v109
    %vm111 = vcmp.ge.f32.partialorder %v80, -0.6
    %vm112 = vcmp.lt.f32.partialorder %v80, -0.19999999
    %vm113 = vmand %vm111, %vm112
    %v114 = vsel %vm113, 1, 0
    %v115 = vcvt.s32.f32 %v114
    %vm116 = vcmp.ge.f32.partialorder %v80, -0.19999999
    %vm117 = vcmp.lt.f32.partialorder %v80, 0.20000005
    %vm118 = vmand %vm116, %vm117
    %v119 = vsel %vm118, 1, 0
    %v120 = vcvt.s32.f32 %v119
    %vm121 = vcmp.ge.f32.partialorder %v80, 0.20000005
    %vm122 = vcmp.lt.f32.partialorder %v80, 0.6
    %vm123 = vmand %vm121, %vm122
    %v124 = vsel %vm123, 1, 0
    %v125 = vcvt.s32.f32 %v124
    %vm126 = vcmp.ge.f32.partialorder %v80, 0.6
    %vm127 = vcmp.lt.f32.partialorder %v80, 1.0
    %vm128 = vmand %vm126, %vm127
    %v129 = vsel %vm128, 1, 0
    %v130 = vcvt.s32.f32 %v129
    %vm131 = vcmp.ge.f32.partialorder %v80, 1.0
    %vm132 = vcmp.lt.f32.partialorder %v80, 1.4000001
    %vm133 = vmand %vm131, %vm132
    %v134 = vsel %vm133, 1, 0
    %v135 = vcvt.s32.f32 %v134
    %vm136 = vcmp.ge.f32.partialorder %v80, 1.4000001
    %vm137 = vcmp.lt.f32.partialorder %v80, 1.8
    %vm138 = vmand %vm136, %vm137
    %v139 = vsel %vm138, 1, 0
    %v140 = vcvt.s32.f32 %v139
    %vm141 = vcmp.ge.f32.partialorder %v80, 1.8
    %vm142 = vcmp.lt.f32.partialorder %v80, 2.2
    %vm143 = vmand %vm141, %vm142
    %v144 = vsel %vm143, 1, 0
    %v145 = vcvt.s32.f32 %v144
    %v146 = vsub.f32 %v80, -2.2
    %v147 = vmul.f32 %v146, 2.5
    %v148 = vsub.f32 2.0, %v147
    %v149 = vmul.f32 %v147, %v95
    %v150 = vmul.f32 %v148, %v100
    %v151 = vadd.f32 %v149, %v150
    %v152 = vsub.f32 %v147, 1.0
    %v153 = vsub.f32 3.0, %v147
    %v154 = vmul.f32 %v152, %v100
    %v155 = vmul.f32 %v153, %v105
    %v156 = vadd.f32 %v154, %v155
    %v157 = vsub.f32 %v147, 2.0
    %v158 = vsub.f32 4.0, %v147
    %v159 = vmul.f32 %v157, %v105
    %v160 = vmul.f32 %v158, %v110
    %v161 = vadd.f32 %v159, %v160
    %v162 = vsub.f32 %v147, 3.0
    %v163 = vsub.f32 5.0, %v147
    %v164 = vmul.f32 %v162, %v110
    %v165 = vmul.f32 %v163, %v115
    %v166 = vadd.f32 %v164, %v165
    %v167 = vsub.f32 %v147, 4.0
    %v168 = vsub.f32 6.0, %v147
    %v169 = vmul.f32 %v167, %v115
    %v170 = vmul.f32 %v168, %v120
    %v171 = vadd.f32 %v169, %v170
    %v172 = vsub.f32 %v147, 5.0
    %v173 = vsub.f32 7.0, %v147
    %v174 = vmul.f32 %v172, %v120
    %v175 = vmul.f32 %v173, %v125
    %v176 = vadd.f32 %v174, %v175
    %v177 = vsub.f32 %v147, 6.0
    %v178 = vsub.f32 8.0, %v147
    %v179 = vmul.f32 %v177, %v125
    %v180 = vmul.f32 %v178, %v130
    %v181 = vadd.f32 %v179, %v180
    %v182 = vsub.f32 %v147, 7.0
    %v183 = vsub.f32 9.0, %v147
    %v184 = vmul.f32 %v182, %v130
    %v185 = vmul.f32 %v183, %v135
    %v186 = vadd.f32 %v184, %v185
    %v187 = vsub.f32 %v147, 8.0
    %v188 = vsub.f32 10.0, %v147
    %v189 = vmul.f32 %v187, %v135
    %v190 = vmul.f32 %v188, %v140
    %v191 = vadd.f32 %v189, %v190
    %v192 = vsub.f32 %v147, 9.0
    %v193 = vsub.f32 11.0, %v147
    %v194 = vmul.f32 %v192, %v140
    %v195 = vmul.f32 %v193, %v145
    %v196 = vadd.f32 %v194, %v195
    %v197 = vmul.f32 %v146, 1.25
    %v198 = vsub.f32 1.5, %v197
    %v199 = vmul.f32 %v197, %v151
    %v200 = vmul.f32 %v198, %v156
    %v201 = vadd.f32 %v199, %v200
    %v202 = vsub.f32 %v197, 0.5
    %v203 = vsub.f32 2.0, %v197
    %v204 = vmul.f32 %v202, %v156
    %v205 = vmul.f32 %v203, %v161
    %v206 = vadd.f32 %v204, %v205
    %v207 = vsub.f32 %v197, 1.0
    %v208 = vsub.f32 2.5, %v197
    %v209 = vmul.f32 %v207, %v161
    %v210 = vmul.f32 %v208, %v166
    %v211 = vadd.f32 %v209, %v210
    %v212 = vsub.f32 %v197, 1.5
    %v213 = vsub.f32 3.0, %v197
    %v214 = vmul.f32 %v212, %v166
    %v215 = vmul.f32 %v213, %v171
    %v216 = vadd.f32 %v214, %v215
    %v217 = vsub.f32 %v197, 2.0
    %v218 = vsub.f32 3.5, %v197
    %v219 = vmul.f32 %v217, %v171
    %v220 = vmul.f32 %v218, %v176
    %v221 = vadd.f32 %v219, %v220
    %v222 = vsub.f32 %v197, 2.5
    %v223 = vsub.f32 4.0, %v197
    %v224 = vmul.f32 %v222, %v176
    %v225 = vmul.f32 %v223, %v181
    %v226 = vadd.f32 %v224, %v225
    %v227 = vsub.f32 %v197, 3.0
    %v228 = vsub.f32 4.5, %v197
    %v229 = vmul.f32 %v227, %v181
    %v230 = vmul.f32 %v228, %v186
    %v231 = vadd.f32 %v229, %v230
    %v232 = vsub.f32 %v197, 3.5
    %v233 = vsub.f32 5.0, %v197
    %v234 = vmul.f32 %v232, %v186
    %v235 = vmul.f32 %v233, %v191
    %v236 = vadd.f32 %v234, %v235
    %v237 = vsub.f32 %v197, 4.0
    %v238 = vsub.f32 5.5, %v197
    %v239 = vmul.f32 %v237, %v191
    %v240 = vmul.f32 %v238, %v196
    %v241 = vadd.f32 %v239, %v240
    %v242 = vmul.f32 %v146, 0.8333333
    %v243 = vsub.f32 1.3333334, %v242
    %v244 = vmul.f32 %v242, %v201
    %v245 = vmul.f32 %v243, %v206
    %v246 = vadd.f32 %v244, %v245
    %v247 = vsub.f32 %v242, 0.33333334
    %v248 = vsub.f32 1.6666666, %v242
    %v249 = vmul.f32 %v247, %v206
    %v250 = vmul.f32 %v248, %v211
    %v251 = vadd.f32 %v249, %v250
    %v252 = vsub.f32 %v242, 0.6666667
    %v253 = vsub.f32 2.0, %v242
    %v254 = vmul.f32 %v252, %v211
    %v255 = vmul.f32 %v253, %v216
    %v256 = vadd.f32 %v254, %v255
    %v257 = vsub.f32 %v242, 1.0
    %v258 = vsub.f32 2.3333333, %v242
    %v259 = vmul.f32 %v257, %v216
    %v260 = vmul.f32 %v258, %v221
    %v261 = vadd.f32 %v259, %v260
    %v262 = vsub.f32 %v242, 1.3333334
    %v263 = vsub.f32 2.6666667, %v242
    %v264 = vmul.f32 %v262, %v221
    %v265 = vmul.f32 %v263, %v226
    %v266 = vadd.f32 %v264, %v265
    %v267 = vsub.f32 %v242, 1.6666666
    %v268 = vsub.f32 3.0, %v242
    %v269 = vmul.f32 %v267, %v226
    %v270 = vmul.f32 %v268, %v231
    %v271 = vadd.f32 %v269, %v270
    %v272 = vsub.f32 %v242, 2.0
    %v273 = vsub.f32 3.3333333, %v242
    %v274 = vmul.f32 %v272, %v231
    %v275 = vmul.f32 %v273, %v236
    %v276 = vadd.f32 %v274, %v275
    %v277 = vsub.f32 %v242, 2.3333333
    %v278 = vsub.f32 3.6666667, %v242
    %v279 = vmul.f32 %v277, %v236
    %v280 = vmul.f32 %v278, %v241
    %v281 = vadd.f32 %v279, %v280
    %v283 = vrot.slane %v246, 3
    %v286 = vrot.slane %v251, 6
    %v289 = vrot.slane %v256, 1
    %v292 = vrot.slane %v261, 4
    %v295 = vrot.slane %v266, 7
    %v298 = vrot.slane %v271, 2
    %v301 = vrot.slane %v276, 5
    %vm303 = vcmask 1044480
    %v304 = vsel %vm303, %v90, %v283
    %vm305 = vcmask 1041408
    %v306 = vsel %vm305, %v283, %v286
    %vm307 = vcmask 1046528
    %v308 = vsel %vm307, %v306, %v289
    %vm309 = vcmask 1043456
    %v310 = vsel %vm309, %v289, %v292
    %vm311 = vcmask 1040384
    %v312 = vsel %vm311, %v292, %v295
    %vm313 = vcmask 1045504
    %v314 = vsel %vm313, %v312, %v298
    %vm315 = vcmask 1042432
    %v316 = vsel %vm315, %v298, %v301
    %vm317 = vcmask 367616
    %v319 = vsel %vm317, %v81, 0
    %v322 = vsel %vm317, %v82, 0
    %v325 = vsel %vm317, %v83, 0
    %v328 = vsel %vm317, %v84, 0
    %v331 = vsel %vm303, %v281, 0
    %333 = vmatpush.msra.mxu0 0.0
    %334 = vmatpush.msra.mxu0 0.0
    %335 = vmatpush.msra.mxu0 0.0
    %336 = vmatpush.msra.mxu0 0.0
    %337 = vmatpush.msra.mxu0 0.0
    %338 = vmatpush.msra.mxu0 0.0
    %339 = vmatpush.msra.mxu0 0.0
    %340 = vmatpush.msra.mxu0 0.0
    %341 = vmatpush.msra.mxu0 0.0
    %342 = vmatpush.msra.mxu0 0.0
    %343 = vmatpush.msra.mxu0 %v331
    %344 = vmatpush.msra.mxu0 %v316
    %345 = vmatpush.msra.mxu0 %v314
    %346 = vmatpush.msra.mxu0 %v310
    %347 = vmatpush.msra.mxu0 %v308
    %348 = vmatpush.msra.mxu0 %v304
    %349 = vmatmul.f32.gmra.mxu0 %v319
    %v350 = vpop.f32.mrf.mxu0
    %v351 = vadd.f32 0.0, %v350
    %352 = vmatmul.f32.gmra.mxu0 %v322
    %v353 = vpop.f32.mrf.mxu0
    %v354 = vadd.f32 0.0, %v353
    %355 = vmatmul.f32.gmra.mxu0 %v325
    %v356 = vpop.f32.mrf.mxu0
    %v357 = vadd.f32 0.0, %v356
    %358 = vmatmul.f32.gmra.mxu0 %v328
    %v359 = vpop.f32.mrf.mxu0
    %v360 = vadd.f32 0.0, %v359
    %361 = vdwg.mxu0
    %v362 = vld [vmem:[#allocation7] sm:$0xff]
    %v363 = vld [vmem:[#allocation7 + $0x8] sm:$0xff]
    %v364 = vld [vmem:[#allocation7 + $0x10] sm:$0xff]
    %v365 = vld [vmem:[#allocation7 + $0x18] sm:$0xff]
    %v366 = vld [vmem:[#allocation7 + $0x20] sm:$0xff]
    %v367 = vld [vmem:[#allocation7 + $0x28] sm:$0xff]
    %v368 = vsub.f32 0.0, %v351
    %v369 = vsub.f32 0.0, %v354
    %v370 = vsub.f32 0.0, %v357
    %v371 = vsub.f32 0.0, %v360
    %v372 = vmul.f32 %v368, 1.442695
    %v373 = vpow.pop %v372
    %v374 = vmul.f32 %v369, 1.442695
    %v375 = vpow.pop %v374
    %v376 = vmul.f32 %v370, 1.442695
    %v377 = vpow.pop %v376
    %v378 = vmul.f32 %v371, 1.442695
    %v379 = vpow.pop %v378
    %v380 = vadd.f32 %v373, 1.0
    %v381 = vadd.f32 %v375, 1.0
    %v382 = vadd.f32 %v377, 1.0
    %v383 = vadd.f32 %v379, 1.0
    %v384 = vrcp.pop %v380
    %v385 = vrcp.pop %v381
    %v386 = vrcp.pop %v382
    %v387 = vrcp.pop %v383
    %v388 = vmul.f32 %v351, %v384
    %v389 = vmul.f32 %v354, %v385
    %v390 = vmul.f32 %v357, %v386
    %v391 = vmul.f32 %v360, %v387
    %vm392 = vcmp.ge.f32.partialorder %v351, -2.2
    %vm393 = vcmp.ge.f32.partialorder %v354, -2.2
    %vm394 = vcmp.ge.f32.partialorder %v357, -2.2
    %vm395 = vcmp.ge.f32.partialorder %v360, -2.2
    %vm396 = vcmp.lt.f32.partialorder %v351, -1.8
    %vm397 = vcmp.lt.f32.partialorder %v354, -1.8
    %vm398 = vcmp.lt.f32.partialorder %v357, -1.8
    %vm399 = vcmp.lt.f32.partialorder %v360, -1.8
    %vm400 = vmand %vm392, %vm396
    %vm401 = vmand %vm393, %vm397
    %vm402 = vmand %vm394, %vm398
    %vm403 = vmand %vm395, %vm399
    %v404 = vsel %vm400, 1, 0
    %v405 = vsel %vm401, 1, 0
    %v406 = vsel %vm402, 1, 0
    %v407 = vsel %vm403, 1, 0
    %v408 = vcvt.s32.f32 %v404
    %v409 = vcvt.s32.f32 %v405
    %v410 = vcvt.s32.f32 %v406
    %v411 = vcvt.s32.f32 %v407
    %vm412 = vcmp.ge.f32.partialorder %v351, -1.8
    %vm413 = vcmp.ge.f32.partialorder %v354, -1.8
    %vm414 = vcmp.ge.f32.partialorder %v357, -1.8
    %vm415 = vcmp.ge.f32.partialorder %v360, -1.8
    %vm416 = vcmp.lt.f32.partialorder %v351, -1.4
    %vm417 = vcmp.lt.f32.partialorder %v354, -1.4
    %vm418 = vcmp.lt.f32.partialorder %v357, -1.4
    %vm419 = vcmp.lt.f32.partialorder %v360, -1.4
    %vm420 = vmand %vm412, %vm416
    %vm421 = vmand %vm413, %vm417
    %vm422 = vmand %vm414, %vm418
    %vm423 = vmand %vm415, %vm419
    %v424 = vsel %vm420, 1, 0
    %v425 = vsel %vm421, 1, 0
    %v426 = vsel %vm422, 1, 0
    %v427 = vsel %vm423, 1, 0
    %v428 = vcvt.s32.f32 %v424
    %v429 = vcvt.s32.f32 %v425
    %v430 = vcvt.s32.f32 %v426
    %v431 = vcvt.s32.f32 %v427
    %vm432 = vcmp.ge.f32.partialorder %v351, -1.4
    %vm433 = vcmp.ge.f32.partialorder %v354, -1.4
    %vm434 = vcmp.ge.f32.partialorder %v357, -1.4
    %vm435 = vcmp.ge.f32.partialorder %v360, -1.4
    %vm436 = vcmp.lt.f32.partialorder %v351, -1.0
    %vm437 = vcmp.lt.f32.partialorder %v354, -1.0
    %vm438 = vcmp.lt.f32.partialorder %v357, -1.0
    %vm439 = vcmp.lt.f32.partialorder %v360, -1.0
    %vm440 = vmand %vm432, %vm436
    %vm441 = vmand %vm433, %vm437
    %vm442 = vmand %vm434, %vm438
    %vm443 = vmand %vm435, %vm439
    %v444 = vsel %vm440, 1, 0
    %v445 = vsel %vm441, 1, 0
    %v446 = vsel %vm442, 1, 0
    %v447 = vsel %vm443, 1, 0
    %v448 = vcvt.s32.f32 %v444
    %v449 = vcvt.s32.f32 %v445
    %v450 = vcvt.s32.f32 %v446
    %v451 = vcvt.s32.f32 %v447
    %vm452 = vcmp.ge.f32.partialorder %v351, -1.0
    %vm453 = vcmp.ge.f32.partialorder %v354, -1.0
    %vm454 = vcmp.ge.f32.partialorder %v357, -1.0
    %vm455 = vcmp.ge.f32.partialorder %v360, -1.0
    %vm456 = vcmp.lt.f32.partialorder %v351, -0.6
    %vm457 = vcmp.lt.f32.partialorder %v354, -0.6
    %vm458 = vcmp.lt.f32.partialorder %v357, -0.6
    %vm459 = vcmp.lt.f32.partialorder %v360, -0.6
    %vm460 = vmand %vm452, %vm456
    %vm461 = vmand %vm453, %vm457
    %vm462 = vmand %vm454, %vm458
    %vm463 = vmand %vm455, %vm459
    %v464 = vsel %vm460, 1, 0
    %v465 = vsel %vm461, 1, 0
    %v466 = vsel %vm462, 1, 0
    %v467 = vsel %vm463, 1, 0
    %v468 = vcvt.s32.f32 %v464
    %v469 = vcvt.s32.f32 %v465
    %v470 = vcvt.s32.f32 %v466
    %v471 = vcvt.s32.f32 %v467
    %vm472 = vcmp.ge.f32.partialorder %v351, -0.6
    %vm473 = vcmp.ge.f32.partialorder %v354, -0.6
    %vm474 = vcmp.ge.f32.partialorder %v357, -0.6
    %vm475 = vcmp.ge.f32.partialorder %v360, -0.6
    %vm476 = vcmp.lt.f32.partialorder %v351, -0.19999999
    %vm477 = vcmp.lt.f32.partialorder %v354, -0.19999999
    %vm478 = vcmp.lt.f32.partialorder %v357, -0.19999999
    %vm479 = vcmp.lt.f32.partialorder %v360, -0.19999999
    %vm480 = vmand %vm472, %vm476
    %vm481 = vmand %vm473, %vm477
    %vm482 = vmand %vm474, %vm478
    %vm483 = vmand %vm475, %vm479
    %v484 = vsel %vm480, 1, 0
    %v485 = vsel %vm481, 1, 0
    %v486 = vsel %vm482, 1, 0
    %v487 = vsel %vm483, 1, 0
    %v488 = vcvt.s32.f32 %v484
    %v489 = vcvt.s32.f32 %v485
    %v490 = vcvt.s32.f32 %v486
    %v491 = vcvt.s32.f32 %v487
    %vm492 = vcmp.ge.f32.partialorder %v351, -0.19999999
    %vm493 = vcmp.ge.f32.partialorder %v354, -0.19999999
    %vm494 = vcmp.ge.f32.partialorder %v357, -0.19999999
    %vm495 = vcmp.ge.f32.partialorder %v360, -0.19999999
    %vm496 = vcmp.lt.f32.partialorder %v351, 0.20000005
    %vm497 = vcmp.lt.f32.partialorder %v354, 0.20000005
    %vm498 = vcmp.lt.f32.partialorder %v357, 0.20000005
    %vm499 = vcmp.lt.f32.partialorder %v360, 0.20000005
    %vm500 = vmand %vm492, %vm496
    %vm501 = vmand %vm493, %vm497
    %vm502 = vmand %vm494, %vm498
    %vm503 = vmand %vm495, %vm499
    %v504 = vsel %vm500, 1, 0
    %v505 = vsel %vm501, 1, 0
    %v506 = vsel %vm502, 1, 0
    %v507 = vsel %vm503, 1, 0
    %v508 = vcvt.s32.f32 %v504
    %v509 = vcvt.s32.f32 %v505
    %v510 = vcvt.s32.f32 %v506
    %v511 = vcvt.s32.f32 %v507
    %vm512 = vcmp.ge.f32.partialorder %v351, 0.20000005
    %vm513 = vcmp.ge.f32.partialorder %v354, 0.20000005
    %vm514 = vcmp.ge.f32.partialorder %v357, 0.20000005
    %vm515 = vcmp.ge.f32.partialorder %v360, 0.20000005
    %vm516 = vcmp.lt.f32.partialorder %v351, 0.6
    %vm517 = vcmp.lt.f32.partialorder %v354, 0.6
    %vm518 = vcmp.lt.f32.partialorder %v357, 0.6
    %vm519 = vcmp.lt.f32.partialorder %v360, 0.6
    %vm520 = vmand %vm512, %vm516
    %vm521 = vmand %vm513, %vm517
    %vm522 = vmand %vm514, %vm518
    %vm523 = vmand %vm515, %vm519
    %v524 = vsel %vm520, 1, 0
    %v525 = vsel %vm521, 1, 0
    %v526 = vsel %vm522, 1, 0
    %v527 = vsel %vm523, 1, 0
    %v528 = vcvt.s32.f32 %v524
    %v529 = vcvt.s32.f32 %v525
    %v530 = vcvt.s32.f32 %v526
    %v531 = vcvt.s32.f32 %v527
    %vm532 = vcmp.ge.f32.partialorder %v351, 0.6
    %vm533 = vcmp.ge.f32.partialorder %v354, 0.6
    %vm534 = vcmp.ge.f32.partialorder %v357, 0.6
    %vm535 = vcmp.ge.f32.partialorder %v360, 0.6
    %vm536 = vcmp.lt.f32.partialorder %v351, 1.0
    %vm537 = vcmp.lt.f32.partialorder %v354, 1.0
    %vm538 = vcmp.lt.f32.partialorder %v357, 1.0
    %vm539 = vcmp.lt.f32.partialorder %v360, 1.0
    %vm540 = vmand %vm532, %vm536
    %vm541 = vmand %vm533, %vm537
    %vm542 = vmand %vm534, %vm538
    %vm543 = vmand %vm535, %vm539
    %v544 = vsel %vm540, 1, 0
    %v545 = vsel %vm541, 1, 0
    %v546 = vsel %vm542, 1, 0
    %v547 = vsel %vm543, 1, 0
    %v548 = vcvt.s32.f32 %v544
    %v549 = vcvt.s32.f32 %v545
    %v550 = vcvt.s32.f32 %v546
    %v551 = vcvt.s32.f32 %v547
    %vm552 = vcmp.ge.f32.partialorder %v351, 1.0
    %vm553 = vcmp.ge.f32.partialorder %v354, 1.0
    %vm554 = vcmp.ge.f32.partialorder %v357, 1.0
    %vm555 = vcmp.ge.f32.partialorder %v360, 1.0
    %vm556 = vcmp.lt.f32.partialorder %v351, 1.4000001
    %vm557 = vcmp.lt.f32.partialorder %v354, 1.4000001
    %vm558 = vcmp.lt.f32.partialorder %v357, 1.4000001
    %vm559 = vcmp.lt.f32.partialorder %v360, 1.4000001
    %vm560 = vmand %vm552, %vm556
    %vm561 = vmand %vm553, %vm557
    %vm562 = vmand %vm554, %vm558
    %vm563 = vmand %vm555, %vm559
    %v564 = vsel %vm560, 1, 0
    %v565 = vsel %vm561, 1, 0
    %v566 = vsel %vm562, 1, 0
    %v567 = vsel %vm563, 1, 0
    %v568 = vcvt.s32.f32 %v564
    %v569 = vcvt.s32.f32 %v565
    %v570 = vcvt.s32.f32 %v566
    %v571 = vcvt.s32.f32 %v567
    %vm572 = vcmp.ge.f32.partialorder %v351, 1.4000001
    %vm573 = vcmp.ge.f32.partialorder %v354, 1.4000001
    %vm574 = vcmp.ge.f32.partialorder %v357, 1.4000001
    %vm575 = vcmp.ge.f32.partialorder %v360, 1.4000001
    %vm576 = vcmp.lt.f32.partialorder %v351, 1.8
    %vm577 = vcmp.lt.f32.partialorder %v354, 1.8
    %vm578 = vcmp.lt.f32.partialorder %v357, 1.8
    %vm579 = vcmp.lt.f32.partialorder %v360, 1.8
    %vm580 = vmand %vm572, %vm576
    %vm581 = vmand %vm573, %vm577
    %vm582 = vmand %vm574, %vm578
    %vm583 = vmand %vm575, %vm579
    %v584 = vsel %vm580, 1, 0
    %v585 = vsel %vm581, 1, 0
    %v586 = vsel %vm582, 1, 0
    %v587 = vsel %vm583, 1, 0
    %v588 = vcvt.s32.f32 %v584
    %v589 = vcvt.s32.f32 %v585
    %v590 = vcvt.s32.f32 %v586
    %v591 = vcvt.s32.f32 %v587
    %vm592 = vcmp.ge.f32.partialorder %v351, 1.8
    %vm593 = vcmp.ge.f32.partialorder %v354, 1.8
    %vm594 = vcmp.ge.f32.partialorder %v357, 1.8
    %vm595 = vcmp.ge.f32.partialorder %v360, 1.8
    %vm596 = vcmp.lt.f32.partialorder %v351, 2.2
    %vm597 = vcmp.lt.f32.partialorder %v354, 2.2
    %vm598 = vcmp.lt.f32.partialorder %v357, 2.2
    %vm599 = vcmp.lt.f32.partialorder %v360, 2.2
    %vm600 = vmand %vm592, %vm596
    %vm601 = vmand %vm593, %vm597
    %vm602 = vmand %vm594, %vm598
    %vm603 = vmand %vm595, %vm599
    %v604 = vsel %vm600, 1, 0
    %v605 = vsel %vm601, 1, 0
    %v606 = vsel %vm602, 1, 0
    %v607 = vsel %vm603, 1, 0
    %v608 = vcvt.s32.f32 %v604
    %v609 = vcvt.s32.f32 %v605
    %v610 = vcvt.s32.f32 %v606
    %v611 = vcvt.s32.f32 %v607
    %v612 = vsub.f32 %v351, -2.2
    %v613 = vsub.f32 %v354, -2.2
    %v614 = vsub.f32 %v357, -2.2
    %v615 = vsub.f32 %v360, -2.2
    %v616 = vmul.f32 %v612, 2.5
    %v617 = vmul.f32 %v613, 2.5
    %v618 = vmul.f32 %v614, 2.5
    %v619 = vmul.f32 %v615, 2.5
    %v620 = vsub.f32 2.0, %v616
    %v621 = vsub.f32 2.0, %v617
    %v622 = vsub.f32 2.0, %v618
    %v623 = vsub.f32 2.0, %v619
    %v624 = vmul.f32 %v616, %v408
    %v625 = vmul.f32 %v617, %v409
    %v626 = vmul.f32 %v618, %v410
    %v627 = vmul.f32 %v619, %v411
    %v628 = vmul.f32 %v620, %v428
    %v629 = vmul.f32 %v621, %v429
    %v630 = vmul.f32 %v622, %v430
    %v631 = vmul.f32 %v623, %v431
    %v632 = vadd.f32 %v624, %v628
    %v633 = vadd.f32 %v625, %v629
    %v634 = vadd.f32 %v626, %v630
    %v635 = vadd.f32 %v627, %v631
    %v636 = vsub.f32 %v616, 1.0
    %v637 = vsub.f32 %v617, 1.0
    %v638 = vsub.f32 %v618, 1.0
    %v639 = vsub.f32 %v619, 1.0
    %v640 = vsub.f32 3.0, %v616
    %v641 = vsub.f32 3.0, %v617
    %v642 = vsub.f32 3.0, %v618
    %v643 = vsub.f32 3.0, %v619
    %v644 = vmul.f32 %v636, %v428
    %v645 = vmul.f32 %v637, %v429
    %v646 = vmul.f32 %v638, %v430
    %v647 = vmul.f32 %v639, %v431
    %v648 = vmul.f32 %v640, %v448
    %v649 = vmul.f32 %v641, %v449
    %v650 = vmul.f32 %v642, %v450
    %v651 = vmul.f32 %v643, %v451
    %v652 = vadd.f32 %v644, %v648
    %v653 = vadd.f32 %v645, %v649
    %v654 = vadd.f32 %v646, %v650
    %v655 = vadd.f32 %v647, %v651
    %v656 = vsub.f32 %v616, 2.0
    %v657 = vsub.f32 %v617, 2.0
    %v658 = vsub.f32 %v618, 2.0
    %v659 = vsub.f32 %v619, 2.0
    %v660 = vsub.f32 4.0, %v616
    %v661 = vsub.f32 4.0, %v617
    %v662 = vsub.f32 4.0, %v618
    %v663 = vsub.f32 4.0, %v619
    %v664 = vmul.f32 %v656, %v448
    %v665 = vmul.f32 %v657, %v449
    %v666 = vmul.f32 %v658, %v450
    %v667 = vmul.f32 %v659, %v451
    %v668 = vmul.f32 %v660, %v468
    %v669 = vmul.f32 %v661, %v469
    %v670 = vmul.f32 %v662, %v470
    %v671 = vmul.f32 %v663, %v471
    %v672 = vadd.f32 %v664, %v668
    %v673 = vadd.f32 %v665, %v669
    %v674 = vadd.f32 %v666, %v670
    %v675 = vadd.f32 %v667, %v671
    %v676 = vsub.f32 %v616, 3.0
    %v677 = vsub.f32 %v617, 3.0
    %v678 = vsub.f32 %v618, 3.0
    %v679 = vsub.f32 %v619, 3.0
    %v680 = vsub.f32 5.0, %v616
    %v681 = vsub.f32 5.0, %v617
    %v682 = vsub.f32 5.0, %v618
    %v683 = vsub.f32 5.0, %v619
    %v684 = vmul.f32 %v676, %v468
    %v685 = vmul.f32 %v677, %v469
    %v686 = vmul.f32 %v678, %v470
    %v687 = vmul.f32 %v679, %v471
    %v688 = vmul.f32 %v680, %v488
    %v689 = vmul.f32 %v681, %v489
    %v690 = vmul.f32 %v682, %v490
    %v691 = vmul.f32 %v683, %v491
    %v692 = vadd.f32 %v684, %v688
    %v693 = vadd.f32 %v685, %v689
    %v694 = vadd.f32 %v686, %v690
    %v695 = vadd.f32 %v687, %v691
    %v696 = vsub.f32 %v616, 4.0
    %v697 = vsub.f32 %v617, 4.0
    %v698 = vsub.f32 %v618, 4.0
    %v699 = vsub.f32 %v619, 4.0
    %v700 = vsub.f32 6.0, %v616
    %v701 = vsub.f32 6.0, %v617
    %v702 = vsub.f32 6.0, %v618
    %v703 = vsub.f32 6.0, %v619
    %v704 = vmul.f32 %v696, %v488
    %v705 = vmul.f32 %v697, %v489
    %v706 = vmul.f32 %v698, %v490
    %v707 = vmul.f32 %v699, %v491
    %v708 = vmul.f32 %v700, %v508
    %v709 = vmul.f32 %v701, %v509
    %v710 = vmul.f32 %v702, %v510
    %v711 = vmul.f32 %v703, %v511
    %v712 = vadd.f32 %v704, %v708
    %v713 = vadd.f32 %v705, %v709
    %v714 = vadd.f32 %v706, %v710
    %v715 = vadd.f32 %v707, %v711
    %v716 = vsub.f32 %v616, 5.0
    %v717 = vsub.f32 %v617, 5.0
    %v718 = vsub.f32 %v618, 5.0
    %v719 = vsub.f32 %v619, 5.0
    %v720 = vsub.f32 7.0, %v616
    %v721 = vsub.f32 7.0, %v617
    %v722 = vsub.f32 7.0, %v618
    %v723 = vsub.f32 7.0, %v619
    %v724 = vmul.f32 %v716, %v508
    %v725 = vmul.f32 %v717, %v509
    %v726 = vmul.f32 %v718, %v510
    %v727 = vmul.f32 %v719, %v511
    %v728 = vmul.f32 %v720, %v528
    %v729 = vmul.f32 %v721, %v529
    %v730 = vmul.f32 %v722, %v530
    %v731 = vmul.f32 %v723, %v531
    %v732 = vadd.f32 %v724, %v728
    %v733 = vadd.f32 %v725, %v729
    %v734 = vadd.f32 %v726, %v730
    %v735 = vadd.f32 %v727, %v731
    %v736 = vsub.f32 %v616, 6.0
    %v737 = vsub.f32 %v617, 6.0
    %v738 = vsub.f32 %v618, 6.0
    %v739 = vsub.f32 %v619, 6.0
    %v740 = vsub.f32 8.0, %v616
    %v741 = vsub.f32 8.0, %v617
    %v742 = vsub.f32 8.0, %v618
    %v743 = vsub.f32 8.0, %v619
    %v744 = vmul.f32 %v736, %v528
    %v745 = vmul.f32 %v737, %v529
    %v746 = vmul.f32 %v738, %v530
    %v747 = vmul.f32 %v739, %v531
    %v748 = vmul.f32 %v740, %v548
    %v749 = vmul.f32 %v741, %v549
    %v750 = vmul.f32 %v742, %v550
    %v751 = vmul.f32 %v743, %v551
    %v752 = vadd.f32 %v744, %v748
    %v753 = vadd.f32 %v745, %v749
    %v754 = vadd.f32 %v746, %v750
    %v755 = vadd.f32 %v747, %v751
    %v756 = vsub.f32 %v616, 7.0
    %v757 = vsub.f32 %v617, 7.0
    %v758 = vsub.f32 %v618, 7.0
    %v759 = vsub.f32 %v619, 7.0
    %v760 = vsub.f32 9.0, %v616
    %v761 = vsub.f32 9.0, %v617
    %v762 = vsub.f32 9.0, %v618
    %v763 = vsub.f32 9.0, %v619
    %v764 = vmul.f32 %v756, %v548
    %v765 = vmul.f32 %v757, %v549
    %v766 = vmul.f32 %v758, %v550
    %v767 = vmul.f32 %v759, %v551
    %v768 = vmul.f32 %v760, %v568
    %v769 = vmul.f32 %v761, %v569
    %v770 = vmul.f32 %v762, %v570
    %v771 = vmul.f32 %v763, %v571
    %v772 = vadd.f32 %v764, %v768
    %v773 = vadd.f32 %v765, %v769
    %v774 = vadd.f32 %v766, %v770
    %v775 = vadd.f32 %v767, %v771
    %v776 = vsub.f32 %v616, 8.0
    %v777 = vsub.f32 %v617, 8.0
    %v778 = vsub.f32 %v618, 8.0
    %v779 = vsub.f32 %v619, 8.0
    %v780 = vsub.f32 10.0, %v616
    %v781 = vsub.f32 10.0, %v617
    %v782 = vsub.f32 10.0, %v618
    %v783 = vsub.f32 10.0, %v619
    %v784 = vmul.f32 %v776, %v568
    %v785 = vmul.f32 %v777, %v569
    %v786 = vmul.f32 %v778, %v570
    %v787 = vmul.f32 %v779, %v571
    %v788 = vmul.f32 %v780, %v588
    %v789 = vmul.f32 %v781, %v589
    %v790 = vmul.f32 %v782, %v590
    %v791 = vmul.f32 %v783, %v591
    %v792 = vadd.f32 %v784, %v788
    %v793 = vadd.f32 %v785, %v789
    %v794 = vadd.f32 %v786, %v790
    %v795 = vadd.f32 %v787, %v791
    %v796 = vsub.f32 %v616, 9.0
    %v797 = vsub.f32 %v617, 9.0
    %v798 = vsub.f32 %v618, 9.0
    %v799 = vsub.f32 %v619, 9.0
    %v800 = vsub.f32 11.0, %v616
    %v801 = vsub.f32 11.0, %v617
    %v802 = vsub.f32 11.0, %v618
    %v803 = vsub.f32 11.0, %v619
    %v804 = vmul.f32 %v796, %v588
    %v805 = vmul.f32 %v797, %v589
    %v806 = vmul.f32 %v798, %v590
    %v807 = vmul.f32 %v799, %v591
    %v808 = vmul.f32 %v800, %v608
    %v809 = vmul.f32 %v801, %v609
    %v810 = vmul.f32 %v802, %v610
    %v811 = vmul.f32 %v803, %v611
    %v812 = vadd.f32 %v804, %v808
    %v813 = vadd.f32 %v805, %v809
    %v814 = vadd.f32 %v806, %v810
    %v815 = vadd.f32 %v807, %v811
    %v816 = vmul.f32 %v612, 1.25
    %v817 = vmul.f32 %v613, 1.25
    %v818 = vmul.f32 %v614, 1.25
    %v819 = vmul.f32 %v615, 1.25
    %v820 = vsub.f32 1.5, %v816
    %v821 = vsub.f32 1.5, %v817
    %v822 = vsub.f32 1.5, %v818
    %v823 = vsub.f32 1.5, %v819
    %v824 = vmul.f32 %v816, %v632
    %v825 = vmul.f32 %v817, %v633
    %v826 = vmul.f32 %v818, %v634
    %v827 = vmul.f32 %v819, %v635
    %v828 = vmul.f32 %v820, %v652
    %v829 = vmul.f32 %v821, %v653
    %v830 = vmul.f32 %v822, %v654
    %v831 = vmul.f32 %v823, %v655
    %v832 = vadd.f32 %v824, %v828
    %v833 = vadd.f32 %v825, %v829
    %v834 = vadd.f32 %v826, %v830
    %v835 = vadd.f32 %v827, %v831
    %v836 = vsub.f32 %v816, 0.5
    %v837 = vsub.f32 %v817, 0.5
    %v838 = vsub.f32 %v818, 0.5
    %v839 = vsub.f32 %v819, 0.5
    %v840 = vsub.f32 2.0, %v816
    %v841 = vsub.f32 2.0, %v817
    %v842 = vsub.f32 2.0, %v818
    %v843 = vsub.f32 2.0, %v819
    %v844 = vmul.f32 %v836, %v652
    %v845 = vmul.f32 %v837, %v653
    %v846 = vmul.f32 %v838, %v654
    %v847 = vmul.f32 %v839, %v655
    %v848 = vmul.f32 %v840, %v672
    %v849 = vmul.f32 %v841, %v673
    %v850 = vmul.f32 %v842, %v674
    %v851 = vmul.f32 %v843, %v675
    %v852 = vadd.f32 %v844, %v848
    %v853 = vadd.f32 %v845, %v849
    %v854 = vadd.f32 %v846, %v850
    %v855 = vadd.f32 %v847, %v851
    %v856 = vsub.f32 %v816, 1.0
    %v857 = vsub.f32 %v817, 1.0
    %v858 = vsub.f32 %v818, 1.0
    %v859 = vsub.f32 %v819, 1.0
    %v860 = vsub.f32 2.5, %v816
    %v861 = vsub.f32 2.5, %v817
    %v862 = vsub.f32 2.5, %v818
    %v863 = vsub.f32 2.5, %v819
    %v864 = vmul.f32 %v856, %v672
    %v865 = vmul.f32 %v857, %v673
    %v866 = vmul.f32 %v858, %v674
    %v867 = vmul.f32 %v859, %v675
    %v868 = vmul.f32 %v860, %v692
    %v869 = vmul.f32 %v861, %v693
    %v870 = vmul.f32 %v862, %v694
    %v871 = vmul.f32 %v863, %v695
    %v872 = vadd.f32 %v864, %v868
    %v873 = vadd.f32 %v865, %v869
    %v874 = vadd.f32 %v866, %v870
    %v875 = vadd.f32 %v867, %v871
    %v876 = vsub.f32 %v816, 1.5
    %v877 = vsub.f32 %v817, 1.5
    %v878 = vsub.f32 %v818, 1.5
    %v879 = vsub.f32 %v819, 1.5
    %v880 = vsub.f32 3.0, %v816
    %v881 = vsub.f32 3.0, %v817
    %v882 = vsub.f32 3.0, %v818
    %v883 = vsub.f32 3.0, %v819
    %v884 = vmul.f32 %v876, %v692
    %v885 = vmul.f32 %v877, %v693
    %v886 = vmul.f32 %v878, %v694
    %v887 = vmul.f32 %v879, %v695
    %v888 = vmul.f32 %v880, %v712
    %v889 = vmul.f32 %v881, %v713
    %v890 = vmul.f32 %v882, %v714
    %v891 = vmul.f32 %v883, %v715
    %v892 = vadd.f32 %v884, %v888
    %v893 = vadd.f32 %v885, %v889
    %v894 = vadd.f32 %v886, %v890
    %v895 = vadd.f32 %v887, %v891
    %v896 = vsub.f32 %v816, 2.0
    %v897 = vsub.f32 %v817, 2.0
    %v898 = vsub.f32 %v818, 2.0
    %v899 = vsub.f32 %v819, 2.0
    %v900 = vsub.f32 3.5, %v816
    %v901 = vsub.f32 3.5, %v817
    %v902 = vsub.f32 3.5, %v818
    %v903 = vsub.f32 3.5, %v819
    %v904 = vmul.f32 %v896, %v712
    %v905 = vmul.f32 %v897, %v713
    %v906 = vmul.f32 %v898, %v714
    %v907 = vmul.f32 %v899, %v715
    %v908 = vmul.f32 %v900, %v732
    %v909 = vmul.f32 %v901, %v733
    %v910 = vmul.f32 %v902, %v734
    %v911 = vmul.f32 %v903, %v735
    %v912 = vadd.f32 %v904, %v908
    %v913 = vadd.f32 %v905, %v909
    %v914 = vadd.f32 %v906, %v910
    %v915 = vadd.f32 %v907, %v911
    %v916 = vsub.f32 %v816, 2.5
    %v917 = vsub.f32 %v817, 2.5
    %v918 = vsub.f32 %v818, 2.5
    %v919 = vsub.f32 %v819, 2.5
    %v920 = vsub.f32 4.0, %v816
    %v921 = vsub.f32 4.0, %v817
    %v922 = vsub.f32 4.0, %v818
    %v923 = vsub.f32 4.0, %v819
    %v924 = vmul.f32 %v916, %v732
    %v925 = vmul.f32 %v917, %v733
    %v926 = vmul.f32 %v918, %v734
    %v927 = vmul.f32 %v919, %v735
    %v928 = vmul.f32 %v920, %v752
    %v929 = vmul.f32 %v921, %v753
    %v930 = vmul.f32 %v922, %v754
    %v931 = vmul.f32 %v923, %v755
    %v932 = vadd.f32 %v924, %v928
    %v933 = vadd.f32 %v925, %v929
    %v934 = vadd.f32 %v926, %v930
    %v935 = vadd.f32 %v927, %v931
    %v936 = vsub.f32 %v816, 3.0
    %v937 = vsub.f32 %v817, 3.0
    %v938 = vsub.f32 %v818, 3.0
    %v939 = vsub.f32 %v819, 3.0
    %v940 = vsub.f32 4.5, %v816
    %v941 = vsub.f32 4.5, %v817
    %v942 = vsub.f32 4.5, %v818
    %v943 = vsub.f32 4.5, %v819
    %v944 = vmul.f32 %v936, %v752
    %v945 = vmul.f32 %v937, %v753
    %v946 = vmul.f32 %v938, %v754
    %v947 = vmul.f32 %v939, %v755
    %v948 = vmul.f32 %v940, %v772
    %v949 = vmul.f32 %v941, %v773
    %v950 = vmul.f32 %v942, %v774
    %v951 = vmul.f32 %v943, %v775
    %v952 = vadd.f32 %v944, %v948
    %v953 = vadd.f32 %v945, %v949
    %v954 = vadd.f32 %v946, %v950
    %v955 = vadd.f32 %v947, %v951
    %v956 = vsub.f32 %v816, 3.5
    %v957 = vsub.f32 %v817, 3.5
    %v958 = vsub.f32 %v818, 3.5
    %v959 = vsub.f32 %v819, 3.5
    %v960 = vsub.f32 5.0, %v816
    %v961 = vsub.f32 5.0, %v817
    %v962 = vsub.f32 5.0, %v818
    %v963 = vsub.f32 5.0, %v819
    %v964 = vmul.f32 %v956, %v772
    %v965 = vmul.f32 %v957, %v773
    %v966 = vmul.f32 %v958, %v774
    %v967 = vmul.f32 %v959, %v775
    %v968 = vmul.f32 %v960, %v792
    %v969 = vmul.f32 %v961, %v793
    %v970 = vmul.f32 %v962, %v794
    %v971 = vmul.f32 %v963, %v795
    %v972 = vadd.f32 %v964, %v968
    %v973 = vadd.f32 %v965, %v969
    %v974 = vadd.f32 %v966, %v970
    %v975 = vadd.f32 %v967, %v971
    %v976 = vsub.f32 %v816, 4.0
    %v977 = vsub.f32 %v817, 4.0
    %v978 = vsub.f32 %v818, 4.0
    %v979 = vsub.f32 %v819, 4.0
    %v980 = vsub.f32 5.5, %v816
    %v981 = vsub.f32 5.5, %v817
    %v982 = vsub.f32 5.5, %v818
    %v983 = vsub.f32 5.5, %v819
    %v984 = vmul.f32 %v976, %v792
    %v985 = vmul.f32 %v977, %v793
    %v986 = vmul.f32 %v978, %v794
    %v987 = vmul.f32 %v979, %v795
    %v988 = vmul.f32 %v980, %v812
    %v989 = vmul.f32 %v981, %v813
    %v990 = vmul.f32 %v982, %v814
    %v991 = vmul.f32 %v983, %v815
    %v992 = vadd.f32 %v984, %v988
    %v993 = vadd.f32 %v985, %v989
    %v994 = vadd.f32 %v986, %v990
    %v995 = vadd.f32 %v987, %v991
    %v996 = vmul.f32 %v612, 0.8333333
    %v997 = vmul.f32 %v613, 0.8333333
    %v998 = vmul.f32 %v614, 0.8333333
    %v999 = vmul.f32 %v615, 0.8333333
    %v1000 = vsub.f32 1.3333334, %v996
    %v1001 = vsub.f32 1.3333334, %v997
    %v1002 = vsub.f32 1.3333334, %v998
    %v1003 = vsub.f32 1.3333334, %v999
    %v1004 = vmul.f32 %v996, %v832
    %v1005 = vmul.f32 %v997, %v833
    %v1006 = vmul.f32 %v998, %v834
    %v1007 = vmul.f32 %v999, %v835
    %v1008 = vmul.f32 %v1000, %v852
    %v1009 = vmul.f32 %v1001, %v853
    %v1010 = vmul.f32 %v1002, %v854
    %v1011 = vmul.f32 %v1003, %v855
    %v1012 = vadd.f32 %v1004, %v1008
    %v1013 = vadd.f32 %v1005, %v1009
    %v1014 = vadd.f32 %v1006, %v1010
    %v1015 = vadd.f32 %v1007, %v1011
    %v1016 = vsub.f32 %v996, 0.33333334
    %v1017 = vsub.f32 %v997, 0.33333334
    %v1018 = vsub.f32 %v998, 0.33333334
    %v1019 = vsub.f32 %v999, 0.33333334
    %v1020 = vsub.f32 1.6666666, %v996
    %v1021 = vsub.f32 1.6666666, %v997
    %v1022 = vsub.f32 1.6666666, %v998
    %v1023 = vsub.f32 1.6666666, %v999
    %v1024 = vmul.f32 %v1016, %v852
    %v1025 = vmul.f32 %v1017, %v853
    %v1026 = vmul.f32 %v1018, %v854
    %v1027 = vmul.f32 %v1019, %v855
    %v1028 = vmul.f32 %v1020, %v872
    %v1029 = vmul.f32 %v1021, %v873
    %v1030 = vmul.f32 %v1022, %v874
    %v1031 = vmul.f32 %v1023, %v875
    %v1032 = vadd.f32 %v1024, %v1028
    %v1033 = vadd.f32 %v1025, %v1029
    %v1034 = vadd.f32 %v1026, %v1030
    %v1035 = vadd.f32 %v1027, %v1031
    %v1036 = vsub.f32 %v996, 0.6666667
    %v1037 = vsub.f32 %v997, 0.6666667
    %v1038 = vsub.f32 %v998, 0.6666667
    %v1039 = vsub.f32 %v999, 0.6666667
    %v1040 = vsub.f32 2.0, %v996
    %v1041 = vsub.f32 2.0, %v997
    %v1042 = vsub.f32 2.0, %v998
    %v1043 = vsub.f32 2.0, %v999
    %v1044 = vmul.f32 %v1036, %v872
    %v1045 = vmul.f32 %v1037, %v873
    %v1046 = vmul.f32 %v1038, %v874
    %v1047 = vmul.f32 %v1039, %v875
    %v1048 = vmul.f32 %v1040, %v892
    %v1049 = vmul.f32 %v1041, %v893
    %v1050 = vmul.f32 %v1042, %v894
    %v1051 = vmul.f32 %v1043, %v895
    %v1052 = vadd.f32 %v1044, %v1048
    %v1053 = vadd.f32 %v1045, %v1049
    %v1054 = vadd.f32 %v1046, %v1050
    %v1055 = vadd.f32 %v1047, %v1051
    %v1056 = vsub.f32 %v996, 1.0
    %v1057 = vsub.f32 %v997, 1.0
    %v1058 = vsub.f32 %v998, 1.0
    %v1059 = vsub.f32 %v999, 1.0
    %v1060 = vsub.f32 2.3333333, %v996
    %v1061 = vsub.f32 2.3333333, %v997
    %v1062 = vsub.f32 2.3333333, %v998
    %v1063 = vsub.f32 2.3333333, %v999
    %v1064 = vmul.f32 %v1056, %v892
    %v1065 = vmul.f32 %v1057, %v893
    %v1066 = vmul.f32 %v1058, %v894
    %v1067 = vmul.f32 %v1059, %v895
    %v1068 = vmul.f32 %v1060, %v912
    %v1069 = vmul.f32 %v1061, %v913
    %v1070 = vmul.f32 %v1062, %v914
    %v1071 = vmul.f32 %v1063, %v915
    %v1072 = vadd.f32 %v1064, %v1068
    %v1073 = vadd.f32 %v1065, %v1069
    %v1074 = vadd.f32 %v1066, %v1070
    %v1075 = vadd.f32 %v1067, %v1071
    %v1076 = vsub.f32 %v996, 1.3333334
    %v1077 = vsub.f32 %v997, 1.3333334
    %v1078 = vsub.f32 %v998, 1.3333334
    %v1079 = vsub.f32 %v999, 1.3333334
    %v1080 = vsub.f32 2.6666667, %v996
    %v1081 = vsub.f32 2.6666667, %v997
    %v1082 = vsub.f32 2.6666667, %v998
    %v1083 = vsub.f32 2.6666667, %v999
    %v1084 = vmul.f32 %v1076, %v912
    %v1085 = vmul.f32 %v1077, %v913
    %v1086 = vmul.f32 %v1078, %v914
    %v1087 = vmul.f32 %v1079, %v915
    %v1088 = vmul.f32 %v1080, %v932
    %v1089 = vmul.f32 %v1081, %v933
    %v1090 = vmul.f32 %v1082, %v934
    %v1091 = vmul.f32 %v1083, %v935
    %v1092 = vadd.f32 %v1084, %v1088
    %v1093 = vadd.f32 %v1085, %v1089
    %v1094 = vadd.f32 %v1086, %v1090
    %v1095 = vadd.f32 %v1087, %v1091
    %v1096 = vsub.f32 %v996, 1.6666666
    %v1097 = vsub.f32 %v997, 1.6666666
    %v1098 = vsub.f32 %v998, 1.6666666
    %v1099 = vsub.f32 %v999, 1.6666666
    %v1100 = vsub.f32 3.0, %v996
    %v1101 = vsub.f32 3.0, %v997
    %v1102 = vsub.f32 3.0, %v998
    %v1103 = vsub.f32 3.0, %v999
    %v1104 = vmul.f32 %v1096, %v932
    %v1105 = vmul.f32 %v1097, %v933
    %v1106 = vmul.f32 %v1098, %v934
    %v1107 = vmul.f32 %v1099, %v935
    %v1108 = vmul.f32 %v1100, %v952
    %v1109 = vmul.f32 %v1101, %v953
    %v1110 = vmul.f32 %v1102, %v954
    %v1111 = vmul.f32 %v1103, %v955
    %v1112 = vadd.f32 %v1104, %v1108
    %v1113 = vadd.f32 %v1105, %v1109
    %v1114 = vadd.f32 %v1106, %v1110
    %v1115 = vadd.f32 %v1107, %v1111
    %v1116 = vsub.f32 %v996, 2.0
    %v1117 = vsub.f32 %v997, 2.0
    %v1118 = vsub.f32 %v998, 2.0
    %v1119 = vsub.f32 %v999, 2.0
    %v1120 = vsub.f32 3.3333333, %v996
    %v1121 = vsub.f32 3.3333333, %v997
    %v1122 = vsub.f32 3.3333333, %v998
    %v1123 = vsub.f32 3.3333333, %v999
    %v1124 = vmul.f32 %v1116, %v952
    %v1125 = vmul.f32 %v1117, %v953
    %v1126 = vmul.f32 %v1118, %v954
    %v1127 = vmul.f32 %v1119, %v955
    %v1128 = vmul.f32 %v1120, %v972
    %v1129 = vmul.f32 %v1121, %v973
    %v1130 = vmul.f32 %v1122, %v974
    %v1131 = vmul.f32 %v1123, %v975
    %v1132 = vadd.f32 %v1124, %v1128
    %v1133 = vadd.f32 %v1125, %v1129
    %v1134 = vadd.f32 %v1126, %v1130
    %v1135 = vadd.f32 %v1127, %v1131
    %v1136 = vsub.f32 %v996, 2.3333333
    %v1137 = vsub.f32 %v997, 2.3333333
    %v1138 = vsub.f32 %v998, 2.3333333
    %v1139 = vsub.f32 %v999, 2.3333333
    %v1140 = vsub.f32 3.6666667, %v996
    %v1141 = vsub.f32 3.6666667, %v997
    %v1142 = vsub.f32 3.6666667, %v998
    %v1143 = vsub.f32 3.6666667, %v999
    %v1144 = vmul.f32 %v1136, %v972
    %v1145 = vmul.f32 %v1137, %v973
    %v1146 = vmul.f32 %v1138, %v974
    %v1147 = vmul.f32 %v1139, %v975
    %v1148 = vmul.f32 %v1140, %v992
    %v1149 = vmul.f32 %v1141, %v993
    %v1150 = vmul.f32 %v1142, %v994
    %v1151 = vmul.f32 %v1143, %v995
    %v1152 = vadd.f32 %v1144, %v1148
    %v1153 = vadd.f32 %v1145, %v1149
    %v1154 = vadd.f32 %v1146, %v1150
    %v1155 = vadd.f32 %v1147, %v1151
    %vm1156 = vcmask 261120
    %v1158 = vsel %vm1156, %v364, 0
    %v1161 = vsel %vm1156, %v367, 0
    %1163 = vmatpush.msra.mxu0 %v1055
    %1164 = vmatpush.msra.mxu0 %v1054
    %1165 = vmatpush.msra.mxu0 %v1053
    %1166 = vmatpush.msra.mxu0 %v1052
    %1167 = vmatpush.msra.mxu0 %v1035
    %1168 = vmatpush.msra.mxu0 %v1034
    %1169 = vmatpush.msra.mxu0 %v1033
    %1170 = vmatpush.msra.mxu0 %v1032
    %1171 = vmatpush.msra.mxu0 %v1015
    %1172 = vmatpush.msra.mxu0 %v1014
    %1173 = vmatpush.msra.mxu0 %v1013
    %1174 = vmatpush.msra.mxu0 %v1012
    %1175 = vmatpush.msra.mxu0 %v391
    %1176 = vmatpush.msra.mxu0 %v390
    %1177 = vmatpush.msra.mxu0 %v389
    %1178 = vmatpush.msra.mxu0 %v388
    %1179 = vmatmul.f32.gmra.mxu0 %v362
    %v1180 = vpop.f32.mrf.mxu0
    %v1181 = vadd.f32 0.0, %v1180
    %1182 = vmatmul.f32.gmra.mxu0 %v365
    %v1183 = vpop.f32.mrf.mxu0
    %v1184 = vadd.f32 0.0, %v1183
    %1185 = vdwg.mxu0
    %1186 = vmatpush.msra.mxu0 %v1135
    %1187 = vmatpush.msra.mxu0 %v1134
    %1188 = vmatpush.msra.mxu0 %v1133
    %1189 = vmatpush.msra.mxu0 %v1132
    %1190 = vmatpush.msra.mxu0 %v1115
    %1191 = vmatpush.msra.mxu0 %v1114
    %1192 = vmatpush.msra.mxu0 %v1113
    %1193 = vmatpush.msra.mxu0 %v1112
    %1194 = vmatpush.msra.mxu0 %v1095
    %1195 = vmatpush.msra.mxu0 %v1094
    %1196 = vmatpush.msra.mxu0 %v1093
    %1197 = vmatpush.msra.mxu0 %v1092
    %1198 = vmatpush.msra.mxu0 %v1075
    %1199 = vmatpush.msra.mxu0 %v1074
    %1200 = vmatpush.msra.mxu0 %v1073
    %1201 = vmatpush.msra.mxu0 %v1072
    %1202 = vmatmul.f32.gmra.mxu0 %v363
    %v1203 = vpop.f32.mrf.mxu0
    %v1204 = vadd.f32 %v1181, %v1203
    %1205 = vmatmul.f32.gmra.mxu0 %v366
    %v1206 = vpop.f32.mrf.mxu0
    %v1207 = vadd.f32 %v1184, %v1206
    %1208 = vdwg.mxu0
    %1209 = vmatpush.msra.mxu0 0.0
    %1210 = vmatpush.msra.mxu0 0.0
    %1211 = vmatpush.msra.mxu0 0.0
    %1212 = vmatpush.msra.mxu0 0.0
    %1213 = vmatpush.msra.mxu0 0.0
    %1214 = vmatpush.msra.mxu0 0.0
    %1215 = vmatpush.msra.mxu0 0.0
    %1216 = vmatpush.msra.mxu0 0.0
    %1217 = vmatpush.msra.mxu0 0.0
    %1218 = vmatpush.msra.mxu0 0.0
    %1219 = vmatpush.msra.mxu0 0.0
    %1220 = vmatpush.msra.mxu0 0.0
    %1221 = vmatpush.msra.mxu0 %v1155
    %1222 = vmatpush.msra.mxu0 %v1154
    %1223 = vmatpush.msra.mxu0 %v1153
    %1224 = vmatpush.msra.mxu0 %v1152
    %1225 = vmatmul.f32.gmra.mxu0 %v1158
    %v1226 = vpop.f32.mrf.mxu0
    %v1227 = vadd.f32 %v1204, %v1226
    %1228 = vmatmul.f32.gmra.mxu0 %v1161
    %v1229 = vpop.f32.mrf.mxu0
    %v1230 = vadd.f32 %v1207, %v1229
    %1231 = vdwg.mxu0
    %v1232 = vld [vmem:[#allocation8] sm:$0xff]
    %v1233 = vld [vmem:[#allocation8 + $0x8] sm:$0xff]
    %v1234 = vsub.f32 0.0, %v1227
    %v1235 = vsub.f32 0.0, %v1230
    %v1236 = vmul.f32 %v1234, 1.442695
    %v1237 = vpow.pop %v1236
    %v1238 = vmul.f32 %v1235, 1.442695
    %v1239 = vpow.pop %v1238
    %v1240 = vadd.f32 %v1237, 1.0
    %v1241 = vadd.f32 %v1239, 1.0
    %v1242 = vrcp.pop %v1240
    %v1243 = vrcp.pop %v1241
    %v1244 = vmul.f32 %v1227, %v1242
    %v1245 = vmul.f32 %v1230, %v1243
    %vm1246 = vcmp.ge.f32.partialorder %v1227, -2.2
    %vm1247 = vcmp.ge.f32.partialorder %v1230, -2.2
    %vm1248 = vcmp.lt.f32.partialorder %v1227, -1.8
    %vm1249 = vcmp.lt.f32.partialorder %v1230, -1.8
    %vm1250 = vmand %vm1246, %vm1248
    %vm1251 = vmand %vm1247, %vm1249
    %v1252 = vsel %vm1250, 1, 0
    %v1253 = vsel %vm1251, 1, 0
    %v1254 = vcvt.s32.f32 %v1252
    %v1255 = vcvt.s32.f32 %v1253
    %vm1256 = vcmp.ge.f32.partialorder %v1227, -1.8
    %vm1257 = vcmp.ge.f32.partialorder %v1230, -1.8
    %vm1258 = vcmp.lt.f32.partialorder %v1227, -1.4
    %vm1259 = vcmp.lt.f32.partialorder %v1230, -1.4
    %vm1260 = vmand %vm1256, %vm1258
    %vm1261 = vmand %vm1257, %vm1259
    %v1262 = vsel %vm1260, 1, 0
    %v1263 = vsel %vm1261, 1, 0
    %v1264 = vcvt.s32.f32 %v1262
    %v1265 = vcvt.s32.f32 %v1263
    %vm1266 = vcmp.ge.f32.partialorder %v1227, -1.4
    %vm1267 = vcmp.ge.f32.partialorder %v1230, -1.4
    %vm1268 = vcmp.lt.f32.partialorder %v1227, -1.0
    %vm1269 = vcmp.lt.f32.partialorder %v1230, -1.0
    %vm1270 = vmand %vm1266, %vm1268
    %vm1271 = vmand %vm1267, %vm1269
    %v1272 = vsel %vm1270, 1, 0
    %v1273 = vsel %vm1271, 1, 0
    %v1274 = vcvt.s32.f32 %v1272
    %v1275 = vcvt.s32.f32 %v1273
    %vm1276 = vcmp.ge.f32.partialorder %v1227, -1.0
    %vm1277 = vcmp.ge.f32.partialorder %v1230, -1.0
    %vm1278 = vcmp.lt.f32.partialorder %v1227, -0.6
    %vm1279 = vcmp.lt.f32.partialorder %v1230, -0.6
    %vm1280 = vmand %vm1276, %vm1278
    %vm1281 = vmand %vm1277, %vm1279
    %v1282 = vsel %vm1280, 1, 0
    %v1283 = vsel %vm1281, 1, 0
    %v1284 = vcvt.s32.f32 %v1282
    %v1285 = vcvt.s32.f32 %v1283
    %vm1286 = vcmp.ge.f32.partialorder %v1227, -0.6
    %vm1287 = vcmp.ge.f32.partialorder %v1230, -0.6
    %vm1288 = vcmp.lt.f32.partialorder %v1227, -0.19999999
    %vm1289 = vcmp.lt.f32.partialorder %v1230, -0.19999999
    %vm1290 = vmand %vm1286, %vm1288
    %vm1291 = vmand %vm1287, %vm1289
    %v1292 = vsel %vm1290, 1, 0
    %v1293 = vsel %vm1291, 1, 0
    %v1294 = vcvt.s32.f32 %v1292
    %v1295 = vcvt.s32.f32 %v1293
    %vm1296 = vcmp.ge.f32.partialorder %v1227, -0.19999999
    %vm1297 = vcmp.ge.f32.partialorder %v1230, -0.19999999
    %vm1298 = vcmp.lt.f32.partialorder %v1227, 0.20000005
    %vm1299 = vcmp.lt.f32.partialorder %v1230, 0.20000005
    %vm1300 = vmand %vm1296, %vm1298
    %vm1301 = vmand %vm1297, %vm1299
    %v1302 = vsel %vm1300, 1, 0
    %v1303 = vsel %vm1301, 1, 0
    %v1304 = vcvt.s32.f32 %v1302
    %v1305 = vcvt.s32.f32 %v1303
    %vm1306 = vcmp.ge.f32.partialorder %v1227, 0.20000005
    %vm1307 = vcmp.ge.f32.partialorder %v1230, 0.20000005
    %vm1308 = vcmp.lt.f32.partialorder %v1227, 0.6
    %vm1309 = vcmp.lt.f32.partialorder %v1230, 0.6
    %vm1310 = vmand %vm1306, %vm1308
    %vm1311 = vmand %vm1307, %vm1309
    %v1312 = vsel %vm1310, 1, 0
    %v1313 = vsel %vm1311, 1, 0
    %v1314 = vcvt.s32.f32 %v1312
    %v1315 = vcvt.s32.f32 %v1313
    %vm1316 = vcmp.ge.f32.partialorder %v1227, 0.6
    %vm1317 = vcmp.ge.f32.partialorder %v1230, 0.6
    %vm1318 = vcmp.lt.f32.partialorder %v1227, 1.0
    %vm1319 = vcmp.lt.f32.partialorder %v1230, 1.0
    %vm1320 = vmand %vm1316, %vm1318
    %vm1321 = vmand %vm1317, %vm1319
    %v1322 = vsel %vm1320, 1, 0
    %v1323 = vsel %vm1321, 1, 0
    %v1324 = vcvt.s32.f32 %v1322
    %v1325 = vcvt.s32.f32 %v1323
    %vm1326 = vcmp.ge.f32.partialorder %v1227, 1.0
    %vm1327 = vcmp.ge.f32.partialorder %v1230, 1.0
    %vm1328 = vcmp.lt.f32.partialorder %v1227, 1.4000001
    %vm1329 = vcmp.lt.f32.partialorder %v1230, 1.4000001
    %vm1330 = vmand %vm1326, %vm1328
    %vm1331 = vmand %vm1327, %vm1329
    %v1332 = vsel %vm1330, 1, 0
    %v1333 = vsel %vm1331, 1, 0
    %v1334 = vcvt.s32.f32 %v1332
    %v1335 = vcvt.s32.f32 %v1333
    %vm1336 = vcmp.ge.f32.partialorder %v1227, 1.4000001
    %vm1337 = vcmp.ge.f32.partialorder %v1230, 1.4000001
    %vm1338 = vcmp.lt.f32.partialorder %v1227, 1.8
    %vm1339 = vcmp.lt.f32.partialorder %v1230, 1.8
    %vm1340 = vmand %vm1336, %vm1338
    %vm1341 = vmand %vm1337, %vm1339
    %v1342 = vsel %vm1340, 1, 0
    %v1343 = vsel %vm1341, 1, 0
    %v1344 = vcvt.s32.f32 %v1342
    %v1345 = vcvt.s32.f32 %v1343
    %vm1346 = vcmp.ge.f32.partialorder %v1227, 1.8
    %vm1347 = vcmp.ge.f32.partialorder %v1230, 1.8
    %vm1348 = vcmp.lt.f32.partialorder %v1227, 2.2
    %vm1349 = vcmp.lt.f32.partialorder %v1230, 2.2
    %vm1350 = vmand %vm1346, %vm1348
    %vm1351 = vmand %vm1347, %vm1349
    %v1352 = vsel %vm1350, 1, 0
    %v1353 = vsel %vm1351, 1, 0
    %v1354 = vcvt.s32.f32 %v1352
    %v1355 = vcvt.s32.f32 %v1353
    %v1356 = vsub.f32 %v1227, -2.2
    %v1357 = vsub.f32 %v1230, -2.2
    %v1358 = vmul.f32 %v1356, 2.5
    %v1359 = vmul.f32 %v1357, 2.5
    %v1360 = vsub.f32 2.0, %v1358
    %v1361 = vsub.f32 2.0, %v1359
    %v1362 = vmul.f32 %v1358, %v1254
    %v1363 = vmul.f32 %v1359, %v1255
    %v1364 = vmul.f32 %v1360, %v1264
    %v1365 = vmul.f32 %v1361, %v1265
    %v1366 = vadd.f32 %v1362, %v1364
    %v1367 = vadd.f32 %v1363, %v1365
    %v1368 = vsub.f32 %v1358, 1.0
    %v1369 = vsub.f32 %v1359, 1.0
    %v1370 = vsub.f32 3.0, %v1358
    %v1371 = vsub.f32 3.0, %v1359
    %v1372 = vmul.f32 %v1368, %v1264
    %v1373 = vmul.f32 %v1369, %v1265
    %v1374 = vmul.f32 %v1370, %v1274
    %v1375 = vmul.f32 %v1371, %v1275
    %v1376 = vadd.f32 %v1372, %v1374
    %v1377 = vadd.f32 %v1373, %v1375
    %v1378 = vsub.f32 %v1358, 2.0
    %v1379 = vsub.f32 %v1359, 2.0
    %v1380 = vsub.f32 4.0, %v1358
    %v1381 = vsub.f32 4.0, %v1359
    %v1382 = vmul.f32 %v1378, %v1274
    %v1383 = vmul.f32 %v1379, %v1275
    %v1384 = vmul.f32 %v1380, %v1284
    %v1385 = vmul.f32 %v1381, %v1285
    %v1386 = vadd.f32 %v1382, %v1384
    %v1387 = vadd.f32 %v1383, %v1385
    %v1388 = vsub.f32 %v1358, 3.0
    %v1389 = vsub.f32 %v1359, 3.0
    %v1390 = vsub.f32 5.0, %v1358
    %v1391 = vsub.f32 5.0, %v1359
    %v1392 = vmul.f32 %v1388, %v1284
    %v1393 = vmul.f32 %v1389, %v1285
    %v1394 = vmul.f32 %v1390, %v1294
    %v1395 = vmul.f32 %v1391, %v1295
    %v1396 = vadd.f32 %v1392, %v1394
    %v1397 = vadd.f32 %v1393, %v1395
    %v1398 = vsub.f32 %v1358, 4.0
    %v1399 = vsub.f32 %v1359, 4.0
    %v1400 = vsub.f32 6.0, %v1358
    %v1401 = vsub.f32 6.0, %v1359
    %v1402 = vmul.f32 %v1398, %v1294
    %v1403 = vmul.f32 %v1399, %v1295
    %v1404 = vmul.f32 %v1400, %v1304
    %v1405 = vmul.f32 %v1401, %v1305
    %v1406 = vadd.f32 %v1402, %v1404
    %v1407 = vadd.f32 %v1403, %v1405
    %v1408 = vsub.f32 %v1358, 5.0
    %v1409 = vsub.f32 %v1359, 5.0
    %v1410 = vsub.f32 7.0, %v1358
    %v1411 = vsub.f32 7.0, %v1359
    %v1412 = vmul.f32 %v1408, %v1304
    %v1413 = vmul.f32 %v1409, %v1305
    %v1414 = vmul.f32 %v1410, %v1314
    %v1415 = vmul.f32 %v1411, %v1315
    %v1416 = vadd.f32 %v1412, %v1414
    %v1417 = vadd.f32 %v1413, %v1415
    %v1418 = vsub.f32 %v1358, 6.0
    %v1419 = vsub.f32 %v1359, 6.0
    %v1420 = vsub.f32 8.0, %v1358
    %v1421 = vsub.f32 8.0, %v1359
    %v1422 = vmul.f32 %v1418, %v1314
    %v1423 = vmul.f32 %v1419, %v1315
    %v1424 = vmul.f32 %v1420, %v1324
    %v1425 = vmul.f32 %v1421, %v1325
    %v1426 = vadd.f32 %v1422, %v1424
    %v1427 = vadd.f32 %v1423, %v1425
    %v1428 = vsub.f32 %v1358, 7.0
    %v1429 = vsub.f32 %v1359, 7.0
    %v1430 = vsub.f32 9.0, %v1358
    %v1431 = vsub.f32 9.0, %v1359
    %v1432 = vmul.f32 %v1428, %v1324
    %v1433 = vmul.f32 %v1429, %v1325
    %v1434 = vmul.f32 %v1430, %v1334
    %v1435 = vmul.f32 %v1431, %v1335
    %v1436 = vadd.f32 %v1432, %v1434
    %v1437 = vadd.f32 %v1433, %v1435
    %v1438 = vsub.f32 %v1358, 8.0
    %v1439 = vsub.f32 %v1359, 8.0
    %v1440 = vsub.f32 10.0, %v1358
    %v1441 = vsub.f32 10.0, %v1359
    %v1442 = vmul.f32 %v1438, %v1334
    %v1443 = vmul.f32 %v1439, %v1335
    %v1444 = vmul.f32 %v1440, %v1344
    %v1445 = vmul.f32 %v1441, %v1345
    %v1446 = vadd.f32 %v1442, %v1444
    %v1447 = vadd.f32 %v1443, %v1445
    %v1448 = vsub.f32 %v1358, 9.0
    %v1449 = vsub.f32 %v1359, 9.0
    %v1450 = vsub.f32 11.0, %v1358
    %v1451 = vsub.f32 11.0, %v1359
    %v1452 = vmul.f32 %v1448, %v1344
    %v1453 = vmul.f32 %v1449, %v1345
    %v1454 = vmul.f32 %v1450, %v1354
    %v1455 = vmul.f32 %v1451, %v1355
    %v1456 = vadd.f32 %v1452, %v1454
    %v1457 = vadd.f32 %v1453, %v1455
    %v1458 = vmul.f32 %v1356, 1.25
    %v1459 = vmul.f32 %v1357, 1.25
    %v1460 = vsub.f32 1.5, %v1458
    %v1461 = vsub.f32 1.5, %v1459
    %v1462 = vmul.f32 %v1458, %v1366
    %v1463 = vmul.f32 %v1459, %v1367
    %v1464 = vmul.f32 %v1460, %v1376
    %v1465 = vmul.f32 %v1461, %v1377
    %v1466 = vadd.f32 %v1462, %v1464
    %v1467 = vadd.f32 %v1463, %v1465
    %v1468 = vsub.f32 %v1458, 0.5
    %v1469 = vsub.f32 %v1459, 0.5
    %v1470 = vsub.f32 2.0, %v1458
    %v1471 = vsub.f32 2.0, %v1459
    %v1472 = vmul.f32 %v1468, %v1376
    %v1473 = vmul.f32 %v1469, %v1377
    %v1474 = vmul.f32 %v1470, %v1386
    %v1475 = vmul.f32 %v1471, %v1387
    %v1476 = vadd.f32 %v1472, %v1474
    %v1477 = vadd.f32 %v1473, %v1475
    %v1478 = vsub.f32 %v1458, 1.0
    %v1479 = vsub.f32 %v1459, 1.0
    %v1480 = vsub.f32 2.5, %v1458
    %v1481 = vsub.f32 2.5, %v1459
    %v1482 = vmul.f32 %v1478, %v1386
    %v1483 = vmul.f32 %v1479, %v1387
    %v1484 = vmul.f32 %v1480, %v1396
    %v1485 = vmul.f32 %v1481, %v1397
    %v1486 = vadd.f32 %v1482, %v1484
    %v1487 = vadd.f32 %v1483, %v1485
    %v1488 = vsub.f32 %v1458, 1.5
    %v1489 = vsub.f32 %v1459, 1.5
    %v1490 = vsub.f32 3.0, %v1458
    %v1491 = vsub.f32 3.0, %v1459
    %v1492 = vmul.f32 %v1488, %v1396
    %v1493 = vmul.f32 %v1489, %v1397
    %v1494 = vmul.f32 %v1490, %v1406
    %v1495 = vmul.f32 %v1491, %v1407
    %v1496 = vadd.f32 %v1492, %v1494
    %v1497 = vadd.f32 %v1493, %v1495
    %v1498 = vsub.f32 %v1458, 2.0
    %v1499 = vsub.f32 %v1459, 2.0
    %v1500 = vsub.f32 3.5, %v1458
    %v1501 = vsub.f32 3.5, %v1459
    %v1502 = vmul.f32 %v1498, %v1406
    %v1503 = vmul.f32 %v1499, %v1407
    %v1504 = vmul.f32 %v1500, %v1416
    %v1505 = vmul.f32 %v1501, %v1417
    %v1506 = vadd.f32 %v1502, %v1504
    %v1507 = vadd.f32 %v1503, %v1505
    %v1508 = vsub.f32 %v1458, 2.5
    %v1509 = vsub.f32 %v1459, 2.5
    %v1510 = vsub.f32 4.0, %v1458
    %v1511 = vsub.f32 4.0, %v1459
    %v1512 = vmul.f32 %v1508, %v1416
    %v1513 = vmul.f32 %v1509, %v1417
    %v1514 = vmul.f32 %v1510, %v1426
    %v1515 = vmul.f32 %v1511, %v1427
    %v1516 = vadd.f32 %v1512, %v1514
    %v1517 = vadd.f32 %v1513, %v1515
    %v1518 = vsub.f32 %v1458, 3.0
    %v1519 = vsub.f32 %v1459, 3.0
    %v1520 = vsub.f32 4.5, %v1458
    %v1521 = vsub.f32 4.5, %v1459
    %v1522 = vmul.f32 %v1518, %v1426
    %v1523 = vmul.f32 %v1519, %v1427
    %v1524 = vmul.f32 %v1520, %v1436
    %v1525 = vmul.f32 %v1521, %v1437
    %v1526 = vadd.f32 %v1522, %v1524
    %v1527 = vadd.f32 %v1523, %v1525
    %v1528 = vsub.f32 %v1458, 3.5
    %v1529 = vsub.f32 %v1459, 3.5
    %v1530 = vsub.f32 5.0, %v1458
    %v1531 = vsub.f32 5.0, %v1459
    %v1532 = vmul.f32 %v1528, %v1436
    %v1533 = vmul.f32 %v1529, %v1437
    %v1534 = vmul.f32 %v1530, %v1446
    %v1535 = vmul.f32 %v1531, %v1447
    %v1536 = vadd.f32 %v1532, %v1534
    %v1537 = vadd.f32 %v1533, %v1535
    %v1538 = vsub.f32 %v1458, 4.0
    %v1539 = vsub.f32 %v1459, 4.0
    %v1540 = vsub.f32 5.5, %v1458
    %v1541 = vsub.f32 5.5, %v1459
    %v1542 = vmul.f32 %v1538, %v1446
    %v1543 = vmul.f32 %v1539, %v1447
    %v1544 = vmul.f32 %v1540, %v1456
    %v1545 = vmul.f32 %v1541, %v1457
    %v1546 = vadd.f32 %v1542, %v1544
    %v1547 = vadd.f32 %v1543, %v1545
    %v1548 = vmul.f32 %v1356, 0.8333333
    %v1549 = vmul.f32 %v1357, 0.8333333
    %v1550 = vsub.f32 1.3333334, %v1548
    %v1551 = vsub.f32 1.3333334, %v1549
    %v1552 = vmul.f32 %v1548, %v1466
    %v1553 = vmul.f32 %v1549, %v1467
    %v1554 = vmul.f32 %v1550, %v1476
    %v1555 = vmul.f32 %v1551, %v1477
    %v1556 = vadd.f32 %v1552, %v1554
    %v1557 = vadd.f32 %v1553, %v1555
    %v1558 = vsub.f32 %v1548, 0.33333334
    %v1559 = vsub.f32 %v1549, 0.33333334
    %v1560 = vsub.f32 1.6666666, %v1548
    %v1561 = vsub.f32 1.6666666, %v1549
    %v1562 = vmul.f32 %v1558, %v1476
    %v1563 = vmul.f32 %v1559, %v1477
    %v1564 = vmul.f32 %v1560, %v1486
    %v1565 = vmul.f32 %v1561, %v1487
    %v1566 = vadd.f32 %v1562, %v1564
    %v1567 = vadd.f32 %v1563, %v1565
    %v1568 = vsub.f32 %v1548, 0.6666667
    %v1569 = vsub.f32 %v1549, 0.6666667
    %v1570 = vsub.f32 2.0, %v1548
    %v1571 = vsub.f32 2.0, %v1549
    %v1572 = vmul.f32 %v1568, %v1486
    %v1573 = vmul.f32 %v1569, %v1487
    %v1574 = vmul.f32 %v1570, %v1496
    %v1575 = vmul.f32 %v1571, %v1497
    %v1576 = vadd.f32 %v1572, %v1574
    %v1577 = vadd.f32 %v1573, %v1575
    %v1578 = vsub.f32 %v1548, 1.0
    %v1579 = vsub.f32 %v1549, 1.0
    %v1580 = vsub.f32 2.3333333, %v1548
    %v1581 = vsub.f32 2.3333333, %v1549
    %v1582 = vmul.f32 %v1578, %v1496
    %v1583 = vmul.f32 %v1579, %v1497
    %v1584 = vmul.f32 %v1580, %v1506
    %v1585 = vmul.f32 %v1581, %v1507
    %v1586 = vadd.f32 %v1582, %v1584
    %v1587 = vadd.f32 %v1583, %v1585
    %v1588 = vsub.f32 %v1548, 1.3333334
    %v1589 = vsub.f32 %v1549, 1.3333334
    %v1590 = vsub.f32 2.6666667, %v1548
    %v1591 = vsub.f32 2.6666667, %v1549
    %v1592 = vmul.f32 %v1588, %v1506
    %v1593 = vmul.f32 %v1589, %v1507
    %v1594 = vmul.f32 %v1590, %v1516
    %v1595 = vmul.f32 %v1591, %v1517
    %v1596 = vadd.f32 %v1592, %v1594
    %v1597 = vadd.f32 %v1593, %v1595
    %v1598 = vsub.f32 %v1548, 1.6666666
    %v1599 = vsub.f32 %v1549, 1.6666666
    %v1600 = vsub.f32 3.0, %v1548
    %v1601 = vsub.f32 3.0, %v1549
    %v1602 = vmul.f32 %v1598, %v1516
    %v1603 = vmul.f32 %v1599, %v1517
    %v1604 = vmul.f32 %v1600, %v1526
    %v1605 = vmul.f32 %v1601, %v1527
    %v1606 = vadd.f32 %v1602, %v1604
    %v1607 = vadd.f32 %v1603, %v1605
    %v1608 = vsub.f32 %v1548, 2.0
    %v1609 = vsub.f32 %v1549, 2.0
    %v1610 = vsub.f32 3.3333333, %v1548
    %v1611 = vsub.f32 3.3333333, %v1549
    %v1612 = vmul.f32 %v1608, %v1526
    %v1613 = vmul.f32 %v1609, %v1527
    %v1614 = vmul.f32 %v1610, %v1536
    %v1615 = vmul.f32 %v1611, %v1537
    %v1616 = vadd.f32 %v1612, %v1614
    %v1617 = vadd.f32 %v1613, %v1615
    %v1618 = vsub.f32 %v1548, 2.3333333
    %v1619 = vsub.f32 %v1549, 2.3333333
    %v1620 = vsub.f32 3.6666667, %v1548
    %v1621 = vsub.f32 3.6666667, %v1549
    %v1622 = vmul.f32 %v1618, %v1536
    %v1623 = vmul.f32 %v1619, %v1537
    %v1624 = vmul.f32 %v1620, %v1546
    %v1625 = vmul.f32 %v1621, %v1547
    %v1626 = vadd.f32 %v1622, %v1624
    %v1627 = vadd.f32 %v1623, %v1625
    %vm1628 = vcmask 130048
    %v1630 = vsel %vm1628, %v1233, 0
    %1632 = vmatpush.msra.mxu0 %v1617
    %1633 = vmatpush.msra.mxu0 %v1616
    %1634 = vmatpush.msra.mxu0 %v1607
    %1635 = vmatpush.msra.mxu0 %v1606
    %1636 = vmatpush.msra.mxu0 %v1597
    %1637 = vmatpush.msra.mxu0 %v1596
    %1638 = vmatpush.msra.mxu0 %v1587
    %1639 = vmatpush.msra.mxu0 %v1586
    %1640 = vmatpush.msra.mxu0 %v1577
    %1641 = vmatpush.msra.mxu0 %v1576
    %1642 = vmatpush.msra.mxu0 %v1567
    %1643 = vmatpush.msra.mxu0 %v1566
    %1644 = vmatpush.msra.mxu0 %v1557
    %1645 = vmatpush.msra.mxu0 %v1556
    %1646 = vmatpush.msra.mxu0 %v1245
    %1647 = vmatpush.msra.mxu0 %v1244
    %1648 = vmatmul.f32.gmra.mxu0 %v1232
    %v1649 = vpop.f32.mrf.mxu0
    %v1650 = vadd.f32 0.0, %v1649
    %1651 = vdwg.mxu0
    %1652 = vmatpush.msra.mxu0 0.0
    %1653 = vmatpush.msra.mxu0 0.0
    %1654 = vmatpush.msra.mxu0 0.0
    %1655 = vmatpush.msra.mxu0 0.0
    %1656 = vmatpush.msra.mxu0 0.0
    %1657 = vmatpush.msra.mxu0 0.0
    %1658 = vmatpush.msra.mxu0 0.0
    %1659 = vmatpush.msra.mxu0 0.0
    %1660 = vmatpush.msra.mxu0 0.0
    %1661 = vmatpush.msra.mxu0 0.0
    %1662 = vmatpush.msra.mxu0 0.0
    %1663 = vmatpush.msra.mxu0 0.0
    %1664 = vmatpush.msra.mxu0 0.0
    %1665 = vmatpush.msra.mxu0 0.0
    %1666 = vmatpush.msra.mxu0 %v1627
    %1667 = vmatpush.msra.mxu0 %v1626
    %1668 = vmatmul.f32.gmra.mxu0 %v1630
    %v1669 = vpop.f32.mrf.mxu0
    %v1670 = vadd.f32 %v1650, %v1669
    %1671 = vdwg.mxu0
    %v1672 = vld [vmem:[%s4] sm:$0x1]
    %v1673 = vsub.f32 0.0, %v1670
    %v1674 = vmul.f32 %v1673, 1.442695
    %v1675 = vpow.pop %v1674
    %v1676 = vadd.f32 %v1675, 1.0
    %v1677 = vrcp.pop %v1676
    %v1678 = vmul.f32 %v1670, %v1677
    %vm1679 = vcmp.ge.f32.partialorder %v1670, -2.2
    %vm1680 = vcmp.lt.f32.partialorder %v1670, -1.8
    %vm1681 = vmand %vm1679, %vm1680
    %v1682 = vsel %vm1681, 1, 0
    %v1683 = vcvt.s32.f32 %v1682
    %vm1684 = vcmp.ge.f32.partialorder %v1670, -1.8
    %vm1685 = vcmp.lt.f32.partialorder %v1670, -1.4
    %vm1686 = vmand %vm1684, %vm1685
    %v1687 = vsel %vm1686, 1, 0
    %v1688 = vcvt.s32.f32 %v1687
    %vm1689 = vcmp.ge.f32.partialorder %v1670, -1.4
    %vm1690 = vcmp.lt.f32.partialorder %v1670, -1.0
    %vm1691 = vmand %vm1689, %vm1690
    %v1692 = vsel %vm1691, 1, 0
    %v1693 = vcvt.s32.f32 %v1692
    %vm1694 = vcmp.ge.f32.partialorder %v1670, -1.0
    %vm1695 = vcmp.lt.f32.partialorder %v1670, -0.6
    %vm1696 = vmand %vm1694, %vm1695
    %v1697 = vsel %vm1696, 1, 0
    %v1698 = vcvt.s32.f32 %v1697
    %vm1699 = vcmp.ge.f32.partialorder %v1670, -0.6
    %vm1700 = vcmp.lt.f32.partialorder %v1670, -0.19999999
    %vm1701 = vmand %vm1699, %vm1700
    %v1702 = vsel %vm1701, 1, 0
    %v1703 = vcvt.s32.f32 %v1702
    %vm1704 = vcmp.ge.f32.partialorder %v1670, -0.19999999
    %vm1705 = vcmp.lt.f32.partialorder %v1670, 0.20000005
    %vm1706 = vmand %vm1704, %vm1705
    %v1707 = vsel %vm1706, 1, 0
    %v1708 = vcvt.s32.f32 %v1707
    %vm1709 = vcmp.ge.f32.partialorder %v1670, 0.20000005
    %vm1710 = vcmp.lt.f32.partialorder %v1670, 0.6
    %vm1711 = vmand %vm1709, %vm1710
    %v1712 = vsel %vm1711, 1, 0
    %v1713 = vcvt.s32.f32 %v1712
    %vm1714 = vcmp.ge.f32.partialorder %v1670, 0.6
    %vm1715 = vcmp.lt.f32.partialorder %v1670, 1.0
    %vm1716 = vmand %vm1714, %vm1715
    %v1717 = vsel %vm1716, 1, 0
    %v1718 = vcvt.s32.f32 %v1717
    %vm1719 = vcmp.ge.f32.partialorder %v1670, 1.0
    %vm1720 = vcmp.lt.f32.partialorder %v1670, 1.4000001
    %vm1721 = vmand %vm1719, %vm1720
    %v1722 = vsel %vm1721, 1, 0
    %v1723 = vcvt.s32.f32 %v1722
    %vm1724 = vcmp.ge.f32.partialorder %v1670, 1.4000001
    %vm1725 = vcmp.lt.f32.partialorder %v1670, 1.8
    %vm1726 = vmand %vm1724, %vm1725
    %v1727 = vsel %vm1726, 1, 0
    %v1728 = vcvt.s32.f32 %v1727
    %vm1729 = vcmp.ge.f32.partialorder %v1670, 1.8
    %vm1730 = vcmp.lt.f32.partialorder %v1670, 2.2
    %vm1731 = vmand %vm1729, %vm1730
    %v1732 = vsel %vm1731, 1, 0
    %v1733 = vcvt.s32.f32 %v1732
    %v1734 = vsub.f32 %v1670, -2.2
    %v1735 = vmul.f32 %v1734, 2.5
    %v1736 = vsub.f32 2.0, %v1735
    %v1737 = vmul.f32 %v1735, %v1683
    %v1738 = vmul.f32 %v1736, %v1688
    %v1739 = vadd.f32 %v1737, %v1738
    %v1740 = vsub.f32 %v1735, 1.0
    %v1741 = vsub.f32 3.0, %v1735
    %v1742 = vmul.f32 %v1740, %v1688
    %v1743 = vmul.f32 %v1741, %v1693
    %v1744 = vadd.f32 %v1742, %v1743
    %v1745 = vsub.f32 %v1735, 2.0
    %v1746 = vsub.f32 4.0, %v1735
    %v1747 = vmul.f32 %v1745, %v1693
    %v1748 = vmul.f32 %v1746, %v1698
    %v1749 = vadd.f32 %v1747, %v1748
    %v1750 = vsub.f32 %v1735, 3.0
    %v1751 = vsub.f32 5.0, %v1735
    %v1752 = vmul.f32 %v1750, %v1698
    %v1753 = vmul.f32 %v1751, %v1703
    %v1754 = vadd.f32 %v1752, %v1753
    %v1755 = vsub.f32 %v1735, 4.0
    %v1756 = vsub.f32 6.0, %v1735
    %v1757 = vmul.f32 %v1755, %v1703
    %v1758 = vmul.f32 %v1756, %v1708
    %v1759 = vadd.f32 %v1757, %v1758
    %v1760 = vsub.f32 %v1735, 5.0
    %v1761 = vsub.f32 7.0, %v1735
    %v1762 = vmul.f32 %v1760, %v1708
    %v1763 = vmul.f32 %v1761, %v1713
    %v1764 = vadd.f32 %v1762, %v1763
    %v1765 = vsub.f32 %v1735, 6.0
    %v1766 = vsub.f32 8.0, %v1735
    %v1767 = vmul.f32 %v1765, %v1713
    %v1768 = vmul.f32 %v1766, %v1718
    %v1769 = vadd.f32 %v1767, %v1768
    %v1770 = vsub.f32 %v1735, 7.0
    %v1771 = vsub.f32 9.0, %v1735
    %v1772 = vmul.f32 %v1770, %v1718
    %v1773 = vmul.f32 %v1771, %v1723
    %v1774 = vadd.f32 %v1772, %v1773
    %v1775 = vsub.f32 %v1735, 8.0
    %v1776 = vsub.f32 10.0, %v1735
    %v1777 = vmul.f32 %v1775, %v1723
    %v1778 = vmul.f32 %v1776, %v1728
    %v1779 = vadd.f32 %v1777, %v1778
    %v1780 = vsub.f32 %v1735, 9.0
    %v1781 = vsub.f32 11.0, %v1735
    %v1782 = vmul.f32 %v1780, %v1728
    %v1783 = vmul.f32 %v1781, %v1733
    %v1784 = vadd.f32 %v1782, %v1783
    %v1785 = vmul.f32 %v1734, 1.25
    %v1786 = vsub.f32 1.5, %v1785
    %v1787 = vmul.f32 %v1785, %v1739
    %v1788 = vmul.f32 %v1786, %v1744
    %v1789 = vadd.f32 %v1787, %v1788
    %v1790 = vsub.f32 %v1785, 0.5
    %v1791 = vsub.f32 2.0, %v1785
    %v1792 = vmul.f32 %v1790, %v1744
    %v1793 = vmul.f32 %v1791, %v1749
    %v1794 = vadd.f32 %v1792, %v1793
    %v1795 = vsub.f32 %v1785, 1.0
    %v1796 = vsub.f32 2.5, %v1785
    %v1797 = vmul.f32 %v1795, %v1749
    %v1798 = vmul.f32 %v1796, %v1754
    %v1799 = vadd.f32 %v1797, %v1798
    %v1800 = vsub.f32 %v1785, 1.5
    %v1801 = vsub.f32 3.0, %v1785
    %v1802 = vmul.f32 %v1800, %v1754
    %v1803 = vmul.f32 %v1801, %v1759
    %v1804 = vadd.f32 %v1802, %v1803
    %v1805 = vsub.f32 %v1785, 2.0
    %v1806 = vsub.f32 3.5, %v1785
    %v1807 = vmul.f32 %v1805, %v1759
    %v1808 = vmul.f32 %v1806, %v1764
    %v1809 = vadd.f32 %v1807, %v1808
    %v1810 = vsub.f32 %v1785, 2.5
    %v1811 = vsub.f32 4.0, %v1785
    %v1812 = vmul.f32 %v1810, %v1764
    %v1813 = vmul.f32 %v1811, %v1769
    %v1814 = vadd.f32 %v1812, %v1813
    %v1815 = vsub.f32 %v1785, 3.0
    %v1816 = vsub.f32 4.5, %v1785
    %v1817 = vmul.f32 %v1815, %v1769
    %v1818 = vmul.f32 %v1816, %v1774
    %v1819 = vadd.f32 %v1817, %v1818
    %v1820 = vsub.f32 %v1785, 3.5
    %v1821 = vsub.f32 5.0, %v1785
    %v1822 = vmul.f32 %v1820, %v1774
    %v1823 = vmul.f32 %v1821, %v1779
    %v1824 = vadd.f32 %v1822, %v1823
    %v1825 = vsub.f32 %v1785, 4.0
    %v1826 = vsub.f32 5.5, %v1785
    %v1827 = vmul.f32 %v1825, %v1779
    %v1828 = vmul.f32 %v1826, %v1784
    %v1829 = vadd.f32 %v1827, %v1828
    %v1830 = vmul.f32 %v1734, 0.8333333
    %v1831 = vsub.f32 1.3333334, %v1830
    %v1832 = vmul.f32 %v1830, %v1789
    %v1833 = vmul.f32 %v1831, %v1794
    %v1834 = vadd.f32 %v1832, %v1833
    %v1835 = vsub.f32 %v1830, 0.33333334
    %v1836 = vsub.f32 1.6666666, %v1830
    %v1837 = vmul.f32 %v1835, %v1794
    %v1838 = vmul.f32 %v1836, %v1799
    %v1839 = vadd.f32 %v1837, %v1838
    %v1840 = vsub.f32 %v1830, 0.6666667
    %v1841 = vsub.f32 2.0, %v1830
    %v1842 = vmul.f32 %v1840, %v1799
    %v1843 = vmul.f32 %v1841, %v1804
    %v1844 = vadd.f32 %v1842, %v1843
    %v1845 = vsub.f32 %v1830, 1.0
    %v1846 = vsub.f32 2.3333333, %v1830
    %v1847 = vmul.f32 %v1845, %v1804
    %v1848 = vmul.f32 %v1846, %v1809
    %v1849 = vadd.f32 %v1847, %v1848
    %v1850 = vsub.f32 %v1830, 1.3333334
    %v1851 = vsub.f32 2.6666667, %v1830
    %v1852 = vmul.f32 %v1850, %v1809
    %v1853 = vmul.f32 %v1851, %v1814
    %v1854 = vadd.f32 %v1852, %v1853
    %v1855 = vsub.f32 %v1830, 1.6666666
    %v1856 = vsub.f32 3.0, %v1830
    %v1857 = vmul.f32 %v1855, %v1814
    %v1858 = vmul.f32 %v1856, %v1819
    %v1859 = vadd.f32 %v1857, %v1858
    %v1860 = vsub.f32 %v1830, 2.0
    %v1861 = vsub.f32 3.3333333, %v1830
    %v1862 = vmul.f32 %v1860, %v1819
    %v1863 = vmul.f32 %v1861, %v1824
    %v1864 = vadd.f32 %v1862, %v1863
    %v1865 = vsub.f32 %v1830, 2.3333333
    %v1866 = vsub.f32 3.6666667, %v1830
    %v1867 = vmul.f32 %v1865, %v1824
    %v1868 = vmul.f32 %v1866, %v1829
    %v1869 = vadd.f32 %v1867, %v1868
    %vm1870 = vcmask 588800
    %v1872 = vsel %vm1870, %v1672, 0
    %1874 = vmatpush.msra.mxu0 0.0
    %1875 = vmatpush.msra.mxu0 0.0
    %1876 = vmatpush.msra.mxu0 0.0
    %1877 = vmatpush.msra.mxu0 0.0
    %1878 = vmatpush.msra.mxu0 0.0
    %1879 = vmatpush.msra.mxu0 0.0
    %1880 = vmatpush.msra.mxu0 0.0
    %1881 = vmatpush.msra.mxu0 %v1869
    %1882 = vmatpush.msra.mxu0 %v1864
    %1883 = vmatpush.msra.mxu0 %v1859
    %1884 = vmatpush.msra.mxu0 %v1854
    %1885 = vmatpush.msra.mxu0 %v1849
    %1886 = vmatpush.msra.mxu0 %v1844
    %1887 = vmatpush.msra.mxu0 %v1839
    %1888 = vmatpush.msra.mxu0 %v1834
    %1889 = vmatpush.msra.mxu0 %v1678
    %1890 = vmatmul.f32.gmra.mxu0 %v1872
    %v1891 = vpop.f32.mrf.mxu0
    %v1892 = vadd.f32 0.0, %v1891
    %1893 = vdwg.mxu0
    %vm1894 = vcmask 122880
    %1895 = vst.msk [vmem:[#allocation10] sm:$0x1] %vm1894, %v1892
    // Predicated region
    $region38: #{tpu_custom_call.1} parent=1 // pred_check
      _
    $region39: #{tpu_custom_call.1} parent=1 // pred_check_branch
      %1897 = sbr.rel (0) target = $region41
    $region40: #{tpu_custom_call.1} parent=1 // pred_region
      %1899 = vsyncadd [#allocation4], 0
      %s1901 = sshll.u32 [#allocation10], 4
      %s1902 = int_to_ptr.vmem [resolvable:$true] %s1901
      %s1903 = sshll.u32 %s5, 4
      %s1904 = int_to_ptr.hbm [resolvable:$true] %s1903
      %1906 = dma.vmem_to_hbm [thread:$0]  %s1902, 16, %s1904, [#allocation4]
    $region41: #{tpu_custom_call.1} parent=1 // pred_fallthru
      _
    // Predicated region
    $region42: #{tpu_custom_call.1} parent=1 // pred_check
      _
    $region43: #{tpu_custom_call.1} parent=1 // pred_check_branch
      %1908 = sbr.rel (0) target = $region45
    $region44: #{tpu_custom_call.1} parent=1 // pred_region
      %1910 = dma.done [#allocation4], 16
    $region45: #{tpu_custom_call.1} parent=1 // pred_fallthru
      _
    %1911 = vsyncpa [#allocation3], 1
    %1912 = vsyncpa [#allocation6], 1
    %1913 = vsyncpa [#allocation9], 1
    %1914 = vsyncpa [#allocation4], 1

</llo_original>
